<compile_context>
chip_gen: v6e
topology: v6e:2x2x1
jax: 0.10.0
libtpu: 0.0.40
codegen_flags: <defaults>
</compile_context>

<pallas_src>
import jax
import jax.numpy as jnp
from jax.experimental import pallas as pl
from jax.experimental.pallas import tpu as pltpu

IN_CH = 21
OUT_CH = 32                  # conv out channels
OUT_DIM = 64                 # per-branch linear out dim
SEG_S = 16                   # padded per-segment rows (multiple of 8, >= max seq length)
TAP_W = 64                   # per-segment tap-row width (3*21 = 63 -> 64)
PAIR_W = 2 * TAP_W           # 128: two segments packed along lanes
POOL_W = 2 * OUT_CH          # 64: paired pooled channels per row
NPAIR = 4                    # 7 segments + 1 zero dummy, packed in pairs
HEAD_IN = NPAIR * 2 * OUT_DIM  # 512 (448 real + 64 zero lanes)
MAX_TILE_B = 64              # v5e-friendly; keeps taps block at 2 MB / buffer
VMEM_LIMIT_BYTES = 32 * 1024 * 1024
SEG_NAMES = ("pep", "a1", "a2", "a3", "b1", "b2", "b3")


# ---------------------------------------------------------------------------
# Fused kernel: 4 pair-packed conv/pool/linear branches + relu/linear/relu/
# linear/relu/linear/sigmoid head, all in one invocation. No scratch.
# ---------------------------------------------------------------------------
def _fused_kernel(taps_ref, wtap_ref, wl_ref, bl_ref,
                  w1_ref, b1_ref, w2_ref, b2_ref, w3_ref, b3_ref, out_ref):
    bt = taps_ref.shape[0]

    hs = []
    for p in range(NPAIR):
        # (Bt, 16, 128): rows t hold [x_padA[t..t+2] | x_padB[t..t+2]] (lane-dense).
        tp = taps_ref[:, p * SEG_S:(p + 1) * SEG_S, :]
        # One MXU matmul per pair: cols [0:64] = (convA[t], convB[t]),
        # cols [64:128] = (convA[t+1], convB[t+1]); conv bias folded into bl.
        pair = jnp.dot(tp.reshape(bt * SEG_S, PAIR_W), wtap_ref[p],
                       preferred_element_type=jnp.float32)
        pair = pair.reshape(bt, SEG_S, PAIR_W)
        # MaxPool1d(kernel=2, stride=1) = lane-half max (max(a+b, c+b) = max(a,c)+b).
        pooled = jnp.maximum(pair[..., :POOL_W], pair[..., POOL_W:])   # (Bt, 16, 64)
        flat = pooled.reshape(bt, SEG_S * POOL_W)                      # (Bt, 1024), t-major
        # Block-diagonal branch linear: lanes [0:64] = seg 2p, [64:128] = seg 2p+1.
        hs.append(jnp.dot(flat, wl_ref[p], preferred_element_type=jnp.float32)
                  + bl_ref[p])                                         # (Bt, 128)

    # Lane-tile-aligned concat -> (Bt, 512): [pep a1 a2 a3 b1 b2 b3 zero-pad].
    h = jnp.maximum(jnp.concatenate(hs, axis=-1), 0.0)
    h = jnp.maximum(
        jnp.dot(h, w1_ref[...], preferred_element_type=jnp.float32) + b1_ref[...], 0.0)
    # TODO(synk): nn.Dropout / F.dropout are identity here (inference / eval mode).
    h = jnp.maximum(
        jnp.dot(h, w2_ref[...], preferred_element_type=jnp.float32) + b2_ref[...], 0.0)
    # Lane-dense output: (8, Bt) with the real logit in row 0 (w3 rows 1..7 are zero).
    logit = jax.lax.dot_general(w3_ref[...], h, (((1,), (1,)), ((), ())),
                                preferred_element_type=jnp.float32) + b3_ref[...]
    out_ref[...] = jax.nn.sigmoid(logit)


# ---------------------------------------------------------------------------
# One-time parameter re-layout (done outside the jitted forward).
# ---------------------------------------------------------------------------
def prepare_params(raw):
    seg = {}
    for name in SEG_NAMES:
        p = raw[name]
        L = int(p["wlin"].shape[1] // OUT_CH)
        assert L <= SEG_S, f"segment length {L} exceeds SEG_S={SEG_S}"
        w0 = p["wconv"][:, :, 0].T                                     # (21, 32)
        w1 = p["wconv"][:, :, 1].T                                     # (21, 32)
        # Per-segment tap weight: cols [0:32] -> conv[t], cols [32:64] -> conv[t+1].
        tw = jnp.zeros((TAP_W, 2 * OUT_CH), jnp.float32)
        tw = tw.at[0:IN_CH, 0:OUT_CH].set(w0)
        tw = tw.at[IN_CH:2 * IN_CH, 0:OUT_CH].set(w1)
        tw = tw.at[IN_CH:2 * IN_CH, OUT_CH:].set(w0)
        tw = tw.at[2 * IN_CH:3 * IN_CH, OUT_CH:].set(w1)
        # PyTorch flattens (B, C, L) channel-major (col = c*L + t); kernel is t-major.
        wl3d = p["wlin"].reshape(OUT_DIM, OUT_CH, L).transpose(2, 1, 0)  # (L, 32, 64)
        wl_pad = jnp.zeros((SEG_S, OUT_CH, OUT_DIM), jnp.float32).at[:L].set(wl3d)
        # Conv bias adds the same value at every pooled position -> fold into blin.
        bfold = p["blin"] + p["bconv"] @ wl3d.sum(axis=0)                # (64,)
        seg[name] = (tw, wl_pad, bfold)

    zero_seg = (jnp.zeros((TAP_W, 2 * OUT_CH), jnp.float32),
                jnp.zeros((SEG_S, OUT_CH, OUT_DIM), jnp.float32),
                jnp.zeros((OUT_DIM,), jnp.float32))

    names = list(SEG_NAMES) + [None]            # 7 segments + 1 zero dummy -> 4 pairs
    wtap, wl, bl = [], [], []
    for p in range(NPAIR):
        twA, wlA, bfA = seg[names[2 * p]]
        twB, wlB, bfB = seg[names[2 * p + 1]] if names[2 * p + 1] is not None else zero_seg
        # Block-diagonal (128,128) tap weight:
        #   out cols [0:32]=convA[t], [32:64]=convB[t], [64:96]=convA[t+1], [96:128]=convB[t+1]
        wt = jnp.zeros((PAIR_W, PAIR_W), jnp.float32)
        wt = wt.at[0:TAP_W, 0:OUT_CH].set(twA[:, 0:OUT_CH])
        wt = wt.at[0:TAP_W, 2 * OUT_CH:3 * OUT_CH].set(twA[:, OUT_CH:])
        wt = wt.at[TAP_W:, OUT_CH:2 * OUT_CH].set(twB[:, 0:OUT_CH])
        wt = wt.at[TAP_W:, 3 * OUT_CH:].set(twB[:, OUT_CH:])
        wtap.append(wt)
        # Block-diagonal (1024, 128) branch-linear weight, row index = t*64 + channel.
        blk = jnp.zeros((SEG_S, POOL_W, 2 * OUT_DIM), jnp.float32)
        blk = blk.at[:, 0:OUT_CH, 0:OUT_DIM].set(wlA)
        blk = blk.at[:, OUT_CH:, OUT_DIM:].set(wlB)
        wl.append(blk.reshape(SEG_S * POOL_W, 2 * OUT_DIM))
        bl.append(jnp.concatenate([bfA, bfB]).reshape(1, 2 * OUT_DIM))

    h = raw["head"]
    # Head: pad the 448-wide input of linear1 to 512 (zero rows for the dummy lanes).
    w1p = jnp.zeros((HEAD_IN, 2 * OUT_DIM), jnp.float32).at[:7 * OUT_DIM, :].set(h["w1"].T)
    # Final projection as an (8, 64) row block (row 0 = w3) so logits come out batch-on-lanes.
    w3r = jnp.zeros((8, OUT_DIM), jnp.float32).at[0, :].set(h["w3"].reshape(OUT_DIM))
    return dict(
        wtap=jnp.stack(wtap),            # (4, 128, 128)
        wl=jnp.stack(wl),                # (4, 1024, 128)
        bl=jnp.stack(bl),                # (4, 1, 128)
        w1=w1p, b1=h["b1"].reshape(1, -1),
        w2=h["w2"].T, b2=h["b2"].reshape(1, -1),
        w3=w3r, b3=h["b3"].reshape(1, 1),
    )


# ---------------------------------------------------------------------------
# Wrapper-side lane-dense tap packing (fused XLA pad/concat; no in-kernel scatter).
# ---------------------------------------------------------------------------
def _build_taps(xs):
    B = xs[0].shape[0]
    dt = xs[0].dtype
    pairs = []
    for p in range(NPAIR):
        halves = []
        for q in range(2):
            idx = 2 * p + q
            if idx < len(xs):
                x = xs[idx]                                           # (B, L, 21)
                L = int(x.shape[1])
                assert L <= SEG_S, f"segment length {L} exceeds SEG_S={SEG_S}"
                xp = jnp.pad(x, ((0, 0), (1, SEG_S + 1 - L), (0, 0)))  # (B, SEG_S+2, 21)
                halves.append(jnp.concatenate(
                    [xp[:, 0:SEG_S, :], xp[:, 1:SEG_S + 1, :], xp[:, 2:SEG_S + 2, :],
                     jnp.zeros((B, SEG_S, TAP_W - 3 * IN_CH), dt)], axis=-1))  # (B,16,64)
            else:
                halves.append(jnp.zeros((B, SEG_S, TAP_W), dt))       # dummy 8th segment
        pairs.append(jnp.concatenate(halves, axis=-1))                # (B, 16, 128)
    return jnp.concatenate(pairs, axis=1)                             # (B, 64, 128)


def _const_spec(arr):
    nd = arr.ndim
    return pl.BlockSpec(arr.shape, lambda b, _nd=nd: (0,) * _nd)


def cnnmodel_forward(prepped, pep, a1, a2, a3, b1, b2, b3):
    xs = [pep, a1, a2, a3, b1, b2, b3]
    B = pep.shape[0]
    if B > MAX_TILE_B:
        tile_b = MAX_TILE_B
    elif B > 8:
        # >= 2 grid blocks so dimension_semantics=("parallel",) uses both v7x TensorCores.
        tile_b = (pl.cdiv(B, 2) + 7) // 8 * 8
    else:
        tile_b = B
    n_blk = pl.cdiv(B, tile_b)
    Bp = n_blk * tile_b

    taps = _build_taps(xs)                                            # (B, 64, 128)
    if Bp != B:
        taps = jnp.pad(taps, ((0, Bp - B), (0, 0), (0, 0)))

    weight_keys = ("wtap", "wl", "bl", "w1", "b1", "w2", "b2", "w3", "b3")
    w_specs = [_const_spec(prepped[k]) for k in weight_keys]

    flops = 2 * Bp * (NPAIR * (SEG_S * PAIR_W * PAIR_W + SEG_S * POOL_W * 2 * OUT_DIM)
                      + HEAD_IN * 2 * OUT_DIM + 2 * OUT_DIM * OUT_DIM + OUT_DIM * 8)
    weight_bytes = sum(int(prepped[k].size) * 4 for k in weight_keys)
    bytes_accessed = int(taps.size) * 4 + weight_bytes + n_blk * 8 * tile_b * 4

    out = pl.pallas_call(
        _fused_kernel,
        out_shape=jax.ShapeDtypeStruct((n_blk * 8, tile_b), jnp.float32),
        grid=(n_blk,),
        in_specs=[pl.BlockSpec((tile_b, NPAIR * SEG_S, PAIR_W), lambda b: (b, 0, 0))] + w_specs,
        out_specs=pl.BlockSpec((8, tile_b), lambda b: (b, 0)),
        compiler_params=pltpu.CompilerParams(
            dimension_semantics=("parallel",),
            vmem_limit_bytes=VMEM_LIMIT_BYTES),
        cost_estimate=pl.CostEstimate(flops=flops, transcendentals=8 * Bp,
                                      bytes_accessed=bytes_accessed),
    )(taps, *[prepped[k] for k in weight_keys])

    # Row 0 of each (8, tile_b) block carries the per-sample predictions.
    return out.reshape(n_blk, 8, tile_b)[:, 0, :].reshape(-1)[:B]


# ---------------------------------------------------------------------------
# Pure-JAX reference (mirrors the PyTorch module) and deterministic init.
# ---------------------------------------------------------------------------
def reference_forward(raw, xs):
    feats = []
    for name, x in zip(SEG_NAMES, xs):
        p = raw[name]
        xp = jnp.pad(x, ((0, 0), (1, 1), (0, 0)))
        w0 = p["wconv"][:, :, 0].T
        w1 = p["wconv"][:, :, 1].T
        conv = xp[:, :-1, :] @ w0 + xp[:, 1:, :] @ w1 + p["bconv"]       # (B, L+1, 32)
        pooled = jnp.maximum(conv[:, :-1, :], conv[:, 1:, :])            # (B, L, 32)
        flat = jnp.transpose(pooled, (0, 2, 1)).reshape(x.shape[0], -1)  # channel-major
        feats.append(flat @ p["wlin"].T + p["blin"])
    h = jnp.maximum(jnp.concatenate(feats, axis=-1), 0.0)
    hd = raw["head"]
    h = jnp.maximum(h @ hd["w1"].T + hd["b1"], 0.0)
    h = jnp.maximum(h @ hd["w2"].T + hd["b2"], 0.0)
    return jax.nn.sigmoid(h @ hd["w3"].T + hd["b3"]).reshape(-1)


def _xavier(key, shape, fan_in, fan_out):
    bound = (6.0 / (fan_in + fan_out)) ** 0.5
    return jax.random.uniform(key, shape, jnp.float32, -bound, bound)


def init_params(key, lengths):
    params = {}
    for name in SEG_NAMES:
        L = lengths[name]
        key, kc, kb, kl = jax.random.split(key, 4)
        params[name] = dict(
            wconv=_xavier(kc, (OUT_CH, IN_CH, 2), IN_CH * 2, OUT_CH * 2),
            bconv=0.1 * jax.random.normal(kb, (OUT_CH,), jnp.float32),
            wlin=_xavier(kl, (OUT_DIM, L * OUT_CH), L * OUT_CH, OUT_DIM),
            blin=jnp.zeros((OUT_DIM,), jnp.float32),
        )
    key, k1, k2, k3 = jax.random.split(key, 4)
    params["head"] = dict(
        w1=_xavier(k1, (OUT_DIM * 2, OUT_DIM * 7), OUT_DIM * 7, OUT_DIM * 2),
        b1=jnp.zeros((OUT_DIM * 2,), jnp.float32),
        w2=_xavier(k2, (OUT_DIM, OUT_DIM * 2), OUT_DIM * 2, OUT_DIM),
        b2=jnp.zeros((OUT_DIM,), jnp.float32),
        w3=_xavier(k3, (1, OUT_DIM), OUT_DIM, 1),
        b3=jnp.zeros((1,), jnp.float32),
    )
    return params


if __name__ == "__main__":
    key = jax.random.PRNGKey(0)
    lengths = dict(pep=12, a1=7, a2=8, a3=12, b1=6, b2=7, b3=12)

    key, kp = jax.random.split(key)
    raw = init_params(kp, lengths)
    prepped = prepare_params(raw)          # one-time layout prep (outside jit)

    fwd = jax.jit(lambda *a: cnnmodel_forward(prepped, *a))

    # B=2: single-block path; B=12: multi-block (2 grid steps) + batch-padding path.
    for B in (2, 12):
        xs = []
        for n in SEG_NAMES:
            key, kx = jax.random.split(key)
            xs.append(jax.random.normal(kx, (B, lengths[n], IN_CH), jnp.float32))
        pred = jax.block_until_ready(fwd(*xs))
        ref = jax.block_until_ready(reference_forward(raw, xs))
        assert pred.shape == (B,)
        assert bool(jnp.all(jnp.isfinite(pred)))
        assert bool(jnp.allclose(pred, ref, atol=1e-4, rtol=1e-4)), (B, pred, ref)
    print("KERNEL_OK")
</pallas_src>

<mosaic_0001>
module attributes {stable_mosaic.version = 11 : i64} {
  func.func @_fused_kernel(%arg0: i32, %arg1: memref<2x64x128xf32, #tpu.memory_space<vmem>>, %arg2: memref<4x128x128xf32, #tpu.memory_space<vmem>>, %arg3: memref<4x1024x128xf32, #tpu.memory_space<vmem>>, %arg4: memref<4x1x128xf32, #tpu.memory_space<vmem>>, %arg5: memref<512x128xf32, #tpu.memory_space<vmem>>, %arg6: memref<1x128xf32, #tpu.memory_space<vmem>>, %arg7: memref<128x64xf32, #tpu.memory_space<vmem>>, %arg8: memref<1x64xf32, #tpu.memory_space<vmem>>, %arg9: memref<8x64xf32, #tpu.memory_space<vmem>>, %arg10: memref<1x1xf32, #tpu.memory_space<vmem>>, %arg11: memref<8x2xf32, #tpu.memory_space<vmem>>) attributes {dimension_semantics = [#tpu.dimension_semantics<parallel>], iteration_bounds = array<i64: 1>, scalar_prefetch = 0 : i64, scratch_operands = 0 : i64, tpu.core_type = #tpu.core_type<tc>, window_params = [{transform_indices = @transform_0, window_bounds = array<i64: 2, 64, 128>}, {pipeline_mode = #tpu.pipeline_mode<synchronous>, transform_indices = @transform_1, window_bounds = array<i64: 4, 128, 128>}, {pipeline_mode = #tpu.pipeline_mode<synchronous>, transform_indices = @transform_2, window_bounds = array<i64: 4, 1024, 128>}, {pipeline_mode = #tpu.pipeline_mode<synchronous>, transform_indices = @transform_3, window_bounds = array<i64: 4, 1, 128>}, {pipeline_mode = #tpu.pipeline_mode<synchronous>, transform_indices = @transform_4, window_bounds = array<i64: 512, 128>}, {pipeline_mode = #tpu.pipeline_mode<synchronous>, transform_indices = @transform_5, window_bounds = array<i64: 1, 128>}, {pipeline_mode = #tpu.pipeline_mode<synchronous>, transform_indices = @transform_6, window_bounds = array<i64: 128, 64>}, {pipeline_mode = #tpu.pipeline_mode<synchronous>, transform_indices = @transform_7, window_bounds = array<i64: 1, 64>}, {pipeline_mode = #tpu.pipeline_mode<synchronous>, transform_indices = @transform_8, window_bounds = array<i64: 8, 64>}, {pipeline_mode = #tpu.pipeline_mode<synchronous>, transform_indices = @transform_9, window_bounds = array<i64: 1, 1>}, {transform_indices = @transform_10, window_bounds = array<i64: 8, 2>}]} {
    %c0 = arith.constant 0 : index
    %c0_0 = arith.constant 0 : index
    %c0_1 = arith.constant 0 : index
    %0 = vector.load %arg1[%c0, %c0_0, %c0_1] : memref<2x64x128xf32, #tpu.memory_space<vmem>>, vector<2x16x128xf32>
    %1 = vector.shape_cast %0 : vector<2x16x128xf32> to vector<32x128xf32>
    %c0_2 = arith.constant 0 : index
    %c0_3 = arith.constant 0 : index
    %c0_4 = arith.constant 0 : index
    %2 = vector.load %arg2[%c0_2, %c0_3, %c0_4] : memref<4x128x128xf32, #tpu.memory_space<vmem>>, vector<1x128x128xf32>
    %3 = vector.shape_cast %2 : vector<1x128x128xf32> to vector<128x128xf32>
    %cst = arith.constant dense<0.000000e+00> : vector<32x128xf32>
    %4 = tpu.matmul %1, %3, %cst {dimension_numbers = #tpu.dot_dimension_numbers<[1], [0], [0], [1], [0, 0, 1, 1], [], []>} : vector<32x128xf32>, vector<128x128xf32>, vector<32x128xf32> -> vector<32x128xf32>
    %5 = vector.shape_cast %4 : vector<32x128xf32> to vector<2x16x128xf32>
    %6 = vector.extract_strided_slice %5 {offsets = [0, 0, 0], sizes = [2, 16, 64], strides = [1, 1, 1]} : vector<2x16x128xf32> to vector<2x16x64xf32>
    %7 = vector.extract_strided_slice %5 {offsets = [0, 0, 64], sizes = [2, 16, 64], strides = [1, 1, 1]} : vector<2x16x128xf32> to vector<2x16x64xf32>
    %8 = arith.maximumf %6, %7 : vector<2x16x64xf32>
    %9 = vector.shape_cast %8 : vector<2x16x64xf32> to vector<2x1024xf32>
    %c0_5 = arith.constant 0 : index
    %c0_6 = arith.constant 0 : index
    %c0_7 = arith.constant 0 : index
    %10 = vector.load %arg3[%c0_5, %c0_6, %c0_7] : memref<4x1024x128xf32, #tpu.memory_space<vmem>>, vector<1x1024x128xf32>
    %11 = vector.shape_cast %10 : vector<1x1024x128xf32> to vector<1024x128xf32>
    %cst_8 = arith.constant dense<0.000000e+00> : vector<2x128xf32>
    %12 = tpu.matmul %9, %11, %cst_8 {dimension_numbers = #tpu.dot_dimension_numbers<[1], [0], [0], [1], [0, 0, 1, 1], [], []>} : vector<2x1024xf32>, vector<1024x128xf32>, vector<2x128xf32> -> vector<2x128xf32>
    %c0_9 = arith.constant 0 : index
    %c0_10 = arith.constant 0 : index
    %c0_11 = arith.constant 0 : index
    %13 = vector.load %arg4[%c0_9, %c0_10, %c0_11] : memref<4x1x128xf32, #tpu.memory_space<vmem>>, vector<1x1x128xf32>
    %14 = vector.shape_cast %13 : vector<1x1x128xf32> to vector<1x128xf32>
    %15 = vector.broadcast %14 : vector<1x128xf32> to vector<2x128xf32>
    %16 = arith.addf %12, %15 : vector<2x128xf32>
    %c0_12 = arith.constant 0 : index
    %c16 = arith.constant 16 : index
    %c0_13 = arith.constant 0 : index
    %17 = vector.load %arg1[%c0_12, %c16, %c0_13] : memref<2x64x128xf32, #tpu.memory_space<vmem>>, vector<2x16x128xf32>
    %18 = vector.shape_cast %17 : vector<2x16x128xf32> to vector<32x128xf32>
    %c1 = arith.constant 1 : index
    %c0_14 = arith.constant 0 : index
    %c0_15 = arith.constant 0 : index
    %19 = vector.load %arg2[%c1, %c0_14, %c0_15] : memref<4x128x128xf32, #tpu.memory_space<vmem>>, vector<1x128x128xf32>
    %20 = vector.shape_cast %19 : vector<1x128x128xf32> to vector<128x128xf32>
    %cst_16 = arith.constant dense<0.000000e+00> : vector<32x128xf32>
    %21 = tpu.matmul %18, %20, %cst_16 {dimension_numbers = #tpu.dot_dimension_numbers<[1], [0], [0], [1], [0, 0, 1, 1], [], []>} : vector<32x128xf32>, vector<128x128xf32>, vector<32x128xf32> -> vector<32x128xf32>
    %22 = vector.shape_cast %21 : vector<32x128xf32> to vector<2x16x128xf32>
    %23 = vector.extract_strided_slice %22 {offsets = [0, 0, 0], sizes = [2, 16, 64], strides = [1, 1, 1]} : vector<2x16x128xf32> to vector<2x16x64xf32>
    %24 = vector.extract_strided_slice %22 {offsets = [0, 0, 64], sizes = [2, 16, 64], strides = [1, 1, 1]} : vector<2x16x128xf32> to vector<2x16x64xf32>
    %25 = arith.maximumf %23, %24 : vector<2x16x64xf32>
    %26 = vector.shape_cast %25 : vector<2x16x64xf32> to vector<2x1024xf32>
    %c1_17 = arith.constant 1 : index
    %c0_18 = arith.constant 0 : index
    %c0_19 = arith.constant 0 : index
    %27 = vector.load %arg3[%c1_17, %c0_18, %c0_19] : memref<4x1024x128xf32, #tpu.memory_space<vmem>>, vector<1x1024x128xf32>
    %28 = vector.shape_cast %27 : vector<1x1024x128xf32> to vector<1024x128xf32>
    %cst_20 = arith.constant dense<0.000000e+00> : vector<2x128xf32>
    %29 = tpu.matmul %26, %28, %cst_20 {dimension_numbers = #tpu.dot_dimension_numbers<[1], [0], [0], [1], [0, 0, 1, 1], [], []>} : vector<2x1024xf32>, vector<1024x128xf32>, vector<2x128xf32> -> vector<2x128xf32>
    %c1_21 = arith.constant 1 : index
    %c0_22 = arith.constant 0 : index
    %c0_23 = arith.constant 0 : index
    %30 = vector.load %arg4[%c1_21, %c0_22, %c0_23] : memref<4x1x128xf32, #tpu.memory_space<vmem>>, vector<1x1x128xf32>
    %31 = vector.shape_cast %30 : vector<1x1x128xf32> to vector<1x128xf32>
    %32 = vector.broadcast %31 : vector<1x128xf32> to vector<2x128xf32>
    %33 = arith.addf %29, %32 : vector<2x128xf32>
    %c0_24 = arith.constant 0 : index
    %c32 = arith.constant 32 : index
    %c0_25 = arith.constant 0 : index
    %34 = vector.load %arg1[%c0_24, %c32, %c0_25] : memref<2x64x128xf32, #tpu.memory_space<vmem>>, vector<2x16x128xf32>
    %35 = vector.shape_cast %34 : vector<2x16x128xf32> to vector<32x128xf32>
    %c2 = arith.constant 2 : index
    %c0_26 = arith.constant 0 : index
    %c0_27 = arith.constant 0 : index
    %36 = vector.load %arg2[%c2, %c0_26, %c0_27] : memref<4x128x128xf32, #tpu.memory_space<vmem>>, vector<1x128x128xf32>
    %37 = vector.shape_cast %36 : vector<1x128x128xf32> to vector<128x128xf32>
    %cst_28 = arith.constant dense<0.000000e+00> : vector<32x128xf32>
    %38 = tpu.matmul %35, %37, %cst_28 {dimension_numbers = #tpu.dot_dimension_numbers<[1], [0], [0], [1], [0, 0, 1, 1], [], []>} : vector<32x128xf32>, vector<128x128xf32>, vector<32x128xf32> -> vector<32x128xf32>
    %39 = vector.shape_cast %38 : vector<32x128xf32> to vector<2x16x128xf32>
    %40 = vector.extract_strided_slice %39 {offsets = [0, 0, 0], sizes = [2, 16, 64], strides = [1, 1, 1]} : vector<2x16x128xf32> to vector<2x16x64xf32>
    %41 = vector.extract_strided_slice %39 {offsets = [0, 0, 64], sizes = [2, 16, 64], strides = [1, 1, 1]} : vector<2x16x128xf32> to vector<2x16x64xf32>
    %42 = arith.maximumf %40, %41 : vector<2x16x64xf32>
    %43 = vector.shape_cast %42 : vector<2x16x64xf32> to vector<2x1024xf32>
    %c2_29 = arith.constant 2 : index
    %c0_30 = arith.constant 0 : index
    %c0_31 = arith.constant 0 : index
    %44 = vector.load %arg3[%c2_29, %c0_30, %c0_31] : memref<4x1024x128xf32, #tpu.memory_space<vmem>>, vector<1x1024x128xf32>
    %45 = vector.shape_cast %44 : vector<1x1024x128xf32> to vector<1024x128xf32>
    %cst_32 = arith.constant dense<0.000000e+00> : vector<2x128xf32>
    %46 = tpu.matmul %43, %45, %cst_32 {dimension_numbers = #tpu.dot_dimension_numbers<[1], [0], [0], [1], [0, 0, 1, 1], [], []>} : vector<2x1024xf32>, vector<1024x128xf32>, vector<2x128xf32> -> vector<2x128xf32>
    %c2_33 = arith.constant 2 : index
    %c0_34 = arith.constant 0 : index
    %c0_35 = arith.constant 0 : index
    %47 = vector.load %arg4[%c2_33, %c0_34, %c0_35] : memref<4x1x128xf32, #tpu.memory_space<vmem>>, vector<1x1x128xf32>
    %48 = vector.shape_cast %47 : vector<1x1x128xf32> to vector<1x128xf32>
    %49 = vector.broadcast %48 : vector<1x128xf32> to vector<2x128xf32>
    %50 = arith.addf %46, %49 : vector<2x128xf32>
    %c0_36 = arith.constant 0 : index
    %c48 = arith.constant 48 : index
    %c0_37 = arith.constant 0 : index
    %51 = vector.load %arg1[%c0_36, %c48, %c0_37] : memref<2x64x128xf32, #tpu.memory_space<vmem>>, vector<2x16x128xf32>
    %52 = vector.shape_cast %51 : vector<2x16x128xf32> to vector<32x128xf32>
    %c3 = arith.constant 3 : index
    %c0_38 = arith.constant 0 : index
    %c0_39 = arith.constant 0 : index
    %53 = vector.load %arg2[%c3, %c0_38, %c0_39] : memref<4x128x128xf32, #tpu.memory_space<vmem>>, vector<1x128x128xf32>
    %54 = vector.shape_cast %53 : vector<1x128x128xf32> to vector<128x128xf32>
    %cst_40 = arith.constant dense<0.000000e+00> : vector<32x128xf32>
    %55 = tpu.matmul %52, %54, %cst_40 {dimension_numbers = #tpu.dot_dimension_numbers<[1], [0], [0], [1], [0, 0, 1, 1], [], []>} : vector<32x128xf32>, vector<128x128xf32>, vector<32x128xf32> -> vector<32x128xf32>
    %56 = vector.shape_cast %55 : vector<32x128xf32> to vector<2x16x128xf32>
    %57 = vector.extract_strided_slice %56 {offsets = [0, 0, 0], sizes = [2, 16, 64], strides = [1, 1, 1]} : vector<2x16x128xf32> to vector<2x16x64xf32>
    %58 = vector.extract_strided_slice %56 {offsets = [0, 0, 64], sizes = [2, 16, 64], strides = [1, 1, 1]} : vector<2x16x128xf32> to vector<2x16x64xf32>
    %59 = arith.maximumf %57, %58 : vector<2x16x64xf32>
    %60 = vector.shape_cast %59 : vector<2x16x64xf32> to vector<2x1024xf32>
    %c3_41 = arith.constant 3 : index
    %c0_42 = arith.constant 0 : index
    %c0_43 = arith.constant 0 : index
    %61 = vector.load %arg3[%c3_41, %c0_42, %c0_43] : memref<4x1024x128xf32, #tpu.memory_space<vmem>>, vector<1x1024x128xf32>
    %62 = vector.shape_cast %61 : vector<1x1024x128xf32> to vector<1024x128xf32>
    %cst_44 = arith.constant dense<0.000000e+00> : vector<2x128xf32>
    %63 = tpu.matmul %60, %62, %cst_44 {dimension_numbers = #tpu.dot_dimension_numbers<[1], [0], [0], [1], [0, 0, 1, 1], [], []>} : vector<2x1024xf32>, vector<1024x128xf32>, vector<2x128xf32> -> vector<2x128xf32>
    %c3_45 = arith.constant 3 : index
    %c0_46 = arith.constant 0 : index
    %c0_47 = arith.constant 0 : index
    %64 = vector.load %arg4[%c3_45, %c0_46, %c0_47] : memref<4x1x128xf32, #tpu.memory_space<vmem>>, vector<1x1x128xf32>
    %65 = vector.shape_cast %64 : vector<1x1x128xf32> to vector<1x128xf32>
    %66 = vector.broadcast %65 : vector<1x128xf32> to vector<2x128xf32>
    %67 = arith.addf %63, %66 : vector<2x128xf32>
    %68 = tpu.concatenate %16, %33, %50, %67 in 1 : vector<2x128xf32>, vector<2x128xf32>, vector<2x128xf32>, vector<2x128xf32> -> vector<2x512xf32>
    %cst_48 = arith.constant 0.000000e+00 : f32
    %69 = vector.broadcast %cst_48 : f32 to vector<2x512xf32>
    %70 = arith.maximumf %68, %69 : vector<2x512xf32>
    %c0_49 = arith.constant 0 : index
    %c0_50 = arith.constant 0 : index
    %71 = vector.load %arg5[%c0_49, %c0_50] : memref<512x128xf32, #tpu.memory_space<vmem>>, vector<512x128xf32>
    %cst_51 = arith.constant dense<0.000000e+00> : vector<2x128xf32>
    %72 = tpu.matmul %70, %71, %cst_51 {dimension_numbers = #tpu.dot_dimension_numbers<[1], [0], [0], [1], [0, 0, 1, 1], [], []>} : vector<2x512xf32>, vector<512x128xf32>, vector<2x128xf32> -> vector<2x128xf32>
    %c0_52 = arith.constant 0 : index
    %c0_53 = arith.constant 0 : index
    %73 = vector.load %arg6[%c0_52, %c0_53] : memref<1x128xf32, #tpu.memory_space<vmem>>, vector<1x128xf32>
    %74 = vector.broadcast %73 : vector<1x128xf32> to vector<2x128xf32>
    %75 = arith.addf %72, %74 : vector<2x128xf32>
    %cst_54 = arith.constant 0.000000e+00 : f32
    %76 = vector.broadcast %cst_54 : f32 to vector<2x128xf32>
    %77 = arith.maximumf %75, %76 : vector<2x128xf32>
    %c0_55 = arith.constant 0 : index
    %c0_56 = arith.constant 0 : index
    %78 = vector.load %arg7[%c0_55, %c0_56] : memref<128x64xf32, #tpu.memory_space<vmem>>, vector<128x64xf32>
    %cst_57 = arith.constant dense<0.000000e+00> : vector<2x64xf32>
    %79 = tpu.matmul %77, %78, %cst_57 {dimension_numbers = #tpu.dot_dimension_numbers<[1], [0], [0], [1], [0, 0, 1, 1], [], []>} : vector<2x128xf32>, vector<128x64xf32>, vector<2x64xf32> -> vector<2x64xf32>
    %c0_58 = arith.constant 0 : index
    %c0_59 = arith.constant 0 : index
    %80 = vector.load %arg8[%c0_58, %c0_59] : memref<1x64xf32, #tpu.memory_space<vmem>>, vector<1x64xf32>
    %81 = vector.broadcast %80 : vector<1x64xf32> to vector<2x64xf32>
    %82 = arith.addf %79, %81 : vector<2x64xf32>
    %cst_60 = arith.constant 0.000000e+00 : f32
    %83 = vector.broadcast %cst_60 : f32 to vector<2x64xf32>
    %84 = arith.maximumf %82, %83 : vector<2x64xf32>
    %c0_61 = arith.constant 0 : index
    %c0_62 = arith.constant 0 : index
    %85 = vector.load %arg9[%c0_61, %c0_62] : memref<8x64xf32, #tpu.memory_space<vmem>>, vector<8x64xf32>
    %cst_63 = arith.constant dense<0.000000e+00> : vector<8x2xf32>
    %86 = tpu.matmul %85, %84, %cst_63 {dimension_numbers = #tpu.dot_dimension_numbers<[1], [1], [0], [0], [0, 0, 1, 0], [], []>} : vector<8x64xf32>, vector<2x64xf32>, vector<8x2xf32> -> vector<8x2xf32>
    %c0_64 = arith.constant 0 : index
    %c0_65 = arith.constant 0 : index
    %87 = vector.load %arg10[%c0_64, %c0_65] : memref<1x1xf32, #tpu.memory_space<vmem>>, vector<1x1xf32>
    %88 = vector.broadcast %87 : vector<1x1xf32> to vector<8x2xf32>
    %89 = arith.addf %86, %88 : vector<8x2xf32>
    %90 = arith.negf %89 : vector<8x2xf32>
    %91 = math.exp %90 : vector<8x2xf32>
    %cst_66 = arith.constant 1.000000e+00 : f32
    %92 = vector.broadcast %cst_66 : f32 to vector<8x2xf32>
    %93 = arith.addf %92, %91 : vector<8x2xf32>
    %94 = arith.divf %92, %93 : vector<8x2xf32>
    %c0_67 = arith.constant 0 : index
    %c0_68 = arith.constant 0 : index
    %95 = vector.load %arg11[%c0_67, %c0_68] : memref<8x2xf32, #tpu.memory_space<vmem>>, vector<8x2xf32>
    tpu.vector_store %arg11[%c0_67, %c0_68], %94 {strides = array<i32>} : memref<8x2xf32, #tpu.memory_space<vmem>>, vector<8x2xf32>,
    return
  }
  func.func @transform_0(%arg0: i32) -> (i32, i32, i32) {
    %c0_i32 = arith.constant 0 : i32
    %c0_i32_0 = arith.constant 0 : i32
    %c0_i32_1 = arith.constant 0 : i32
    return %arg0, %c0_i32, %c0_i32_0 : i32, i32, i32
  }
  func.func @transform_1(%arg0: i32) -> (i32, i32, i32) {
    %c0_i32 = arith.constant 0 : i32
    %c0_i32_0 = arith.constant 0 : i32
    %c0_i32_1 = arith.constant 0 : i32
    %c0_i32_2 = arith.constant 0 : i32
    return %c0_i32, %c0_i32_0, %c0_i32_1 : i32, i32, i32
  }
  func.func @transform_2(%arg0: i32) -> (i32, i32, i32) {
    %c0_i32 = arith.constant 0 : i32
    %c0_i32_0 = arith.constant 0 : i32
    %c0_i32_1 = arith.constant 0 : i32
    %c0_i32_2 = arith.constant 0 : i32
    return %c0_i32, %c0_i32_0, %c0_i32_1 : i32, i32, i32
  }
  func.func @transform_3(%arg0: i32) -> (i32, i32, i32) {
    %c0_i32 = arith.constant 0 : i32
    %c0_i32_0 = arith.constant 0 : i32
    %c0_i32_1 = arith.constant 0 : i32
    %c0_i32_2 = arith.constant 0 : i32
    return %c0_i32, %c0_i32_0, %c0_i32_1 : i32, i32, i32
  }
  func.func @transform_4(%arg0: i32) -> (i32, i32) {
    %c0_i32 = arith.constant 0 : i32
    %c0_i32_0 = arith.constant 0 : i32
    %c0_i32_1 = arith.constant 0 : i32
    return %c0_i32, %c0_i32_0 : i32, i32
  }
  func.func @transform_5(%arg0: i32) -> (i32, i32) {
    %c0_i32 = arith.constant 0 : i32
    %c0_i32_0 = arith.constant 0 : i32
    %c0_i32_1 = arith.constant 0 : i32
    return %c0_i32, %c0_i32_0 : i32, i32
  }
  func.func @transform_6(%arg0: i32) -> (i32, i32) {
    %c0_i32 = arith.constant 0 : i32
    %c0_i32_0 = arith.constant 0 : i32
    %c0_i32_1 = arith.constant 0 : i32
    return %c0_i32, %c0_i32_0 : i32, i32
  }
  func.func @transform_7(%arg0: i32) -> (i32, i32) {
    %c0_i32 = arith.constant 0 : i32
    %c0_i32_0 = arith.constant 0 : i32
    %c0_i32_1 = arith.constant 0 : i32
    return %c0_i32, %c0_i32_0 : i32, i32
  }
  func.func @transform_8(%arg0: i32) -> (i32, i32) {
    %c0_i32 = arith.constant 0 : i32
    %c0_i32_0 = arith.constant 0 : i32
    %c0_i32_1 = arith.constant 0 : i32
    return %c0_i32, %c0_i32_0 : i32, i32
  }
  func.func @transform_9(%arg0: i32) -> (i32, i32) {
    %c0_i32 = arith.constant 0 : i32
    %c0_i32_0 = arith.constant 0 : i32
    %c0_i32_1 = arith.constant 0 : i32
    return %c0_i32, %c0_i32_0 : i32, i32
  }
  func.func @transform_10(%arg0: i32) -> (i32, i32) {
    %c0_i32 = arith.constant 0 : i32
    %c0_i32_0 = arith.constant 0 : i32
    return %arg0, %c0_i32 : i32, i32
  }
}

</mosaic_0001>

<llo_original>
// kernel: _lambda_.1
$region0: #{_lambda_.1}
  #allocation0 [shape = 'u32[]', space=smem, size = 0x4, offset = 0x4, fixed_abs, tag = 'smem constant byte address 0x4 - core index']
  #allocation1 [shape = 'u32[144,128]{1,0:T(1,128)}', space=vmem, size = 0x12000, scoped, tag = 'internal scratch']
  #allocation2 [shape = 'f32[1,1]{1,0:T(1,128)S(1)}', space=vmem, size = 0x200, scoped, tag = 'scoped memory for _lambda_.1']
  %s0 = inlined_call_operand.vmem [shape: f32[2,64,128], index: 0, kind: input, shape index: {}]
  %s1 = inlined_call_operand.hbm [shape: f32[4,128,128], index: 1, kind: input, shape index: {}]
  %s2 = inlined_call_operand.hbm [shape: f32[4,1024,128], index: 2, kind: input, shape index: {}]
  %s3 = inlined_call_operand.hbm [shape: f32[4,1,128], index: 3, kind: input, shape index: {}]
  %s4 = inlined_call_operand.hbm [shape: f32[512,128], index: 4, kind: input, shape index: {}]
  %s5 = inlined_call_operand.vmem [shape: f32[1,128], index: 5, kind: input, shape index: {}]
  %s6 = inlined_call_operand.hbm [shape: f32[128,64], index: 6, kind: input, shape index: {}]
  %s7 = inlined_call_operand.vmem [shape: f32[1,64], index: 7, kind: input, shape index: {}]
  %s8 = inlined_call_operand.hbm [shape: f32[8,64], index: 8, kind: input, shape index: {}]
  %s9 = inlined_call_operand.<no memory space> [shape: f32[1,1], index: 9, kind: input, shape index: {}]
  %s10 = inlined_call_operand.vmem [shape: f32[8,2], index: 10, kind: output, shape index: {}]
  %s11 = sld [smem:[#allocation0]]
  $region74: #{_lambda_.1} parent=0
    _
  %s13 = ssub.s32 1, %s11
  %s14 = scalar_select 0, %s13, %s11
  %v15 = vstv %s9
  %16 = vst [vmem:[#allocation2] sm:$0x1] %v15
  $region1: #{_lambda_.1} parent=0
    #allocation3 [shape = 'u8[262144]{0}', space=vmem, size = 0x40000, scoped, tag = 'input window, operand 1, single buffered']
    #allocation4 [shape = 's32[1]{0}', space=sflag, size = 0x4, scoped, tag = 'scoped memory for _lambda_.1']
    #allocation5 [shape = 'u8[2097152]{0}', space=vmem, size = 0x200000, scoped, tag = 'input window, operand 2, single buffered']
    #allocation6 [shape = 's32[1]{0}', space=sflag, size = 0x4, scoped, tag = 'scoped memory for _lambda_.1']
    #allocation7 [shape = 'u8[2048]{0}', space=vmem, size = 0x800, scoped, tag = 'input window, operand 3, single buffered']
    #allocation8 [shape = 'u8[262144]{0}', space=vmem, size = 0x40000, scoped, tag = 'input window, operand 4, single buffered']
    #allocation9 [shape = 's32[1]{0}', space=sflag, size = 0x4, scoped, tag = 'scoped memory for _lambda_.1']
    #allocation10 [shape = 'u8[65536]{0}', space=vmem, size = 0x10000, scoped, tag = 'input window, operand 6, single buffered']
    #allocation11 [shape = 'u8[4096]{0}', space=vmem, size = 0x1000, scoped, tag = 'input window, operand 8, single buffered']
    #allocation12 [shape = 's32[1]{0}', space=sflag, size = 0x4, scoped, tag = 'scoped memory for _lambda_.1']
    %17 = vsyncpa [#allocation4], 0
    %18 = vsyncpa [#allocation6], 0
    %19 = vsyncpa [#allocation9], 0
    %20 = vsyncpa [#allocation12], 0
    // Predicated region
    $region2: #{_lambda_.1} parent=1 // pred_check
      _
    $region3: #{_lambda_.1} parent=1 // pred_check_branch
      %22 = sbr.rel (0) target = $region5
    $region4: #{_lambda_.1} parent=1 // pred_region
      _
    $region5: #{_lambda_.1} parent=1 // pred_fallthru
      _
    // Predicated region
    $region6: #{_lambda_.1} parent=1 // pred_check
      _
    $region7: #{_lambda_.1} parent=1 // pred_check_branch
      %24 = sbr.rel (0) target = $region9
    $region8: #{_lambda_.1} parent=1 // pred_region
      %s26 = ssub.s32 8192, 8192
      %27 = vsyncadd [#allocation4], %s26
      %s28 = sshll.u32 [#allocation3], 4
      %s29 = int_to_ptr.vmem [resolvable:$true] %s28
      %34 = dma.hbm_to_vmem [thread:$0]  %s1, 8192, %s29, [#allocation4], 128, 128, 8
    $region9: #{_lambda_.1} parent=1 // pred_fallthru
      _
    // Predicated region
    $region10: #{_lambda_.1} parent=1 // pred_check
      _
    $region11: #{_lambda_.1} parent=1 // pred_check_branch
      %36 = sbr.rel (0) target = $region13
    $region12: #{_lambda_.1} parent=1 // pred_region
      %s38 = ssub.s32 65536, 65536
      %39 = vsyncadd [#allocation6], %s38
      %s40 = sshll.u32 [#allocation5], 4
      %s41 = int_to_ptr.vmem [resolvable:$true] %s40
      %46 = dma.hbm_to_vmem [thread:$0]  %s2, 65536, %s41, [#allocation6], 128, 128, 8
    $region13: #{_lambda_.1} parent=1 // pred_fallthru
      _
    // Predicated region
    $region14: #{_lambda_.1} parent=1 // pred_check
      _
    $region15: #{_lambda_.1} parent=1 // pred_check_branch
      %48 = sbr.rel (0) target = $region17
    $region16: #{_lambda_.1} parent=1 // pred_region
      %s50 = ssub.s32 64, 64
      %51 = vsyncadd [#allocation6], %s50
      %s52 = sshll.u32 [#allocation7], 4
      %s53 = int_to_ptr.vmem [resolvable:$true] %s52
      %58 = dma.hbm_to_vmem [thread:$0]  %s3, 64, %s53, [#allocation6], 16, 16, 1
    $region17: #{_lambda_.1} parent=1 // pred_fallthru
      _
    // Predicated region
    $region18: #{_lambda_.1} parent=1 // pred_check
      _
    $region19: #{_lambda_.1} parent=1 // pred_check_branch
      %60 = sbr.rel (0) target = $region21
    $region20: #{_lambda_.1} parent=1 // pred_region
      %s62 = ssub.s32 8192, 8192
      %63 = vsyncadd [#allocation9], %s62
      %s64 = sshll.u32 [#allocation8], 4
      %s65 = int_to_ptr.vmem [resolvable:$true] %s64
      %70 = dma.hbm_to_vmem [thread:$0]  %s4, 8192, %s65, [#allocation9], 128, 128, 8
    $region21: #{_lambda_.1} parent=1 // pred_fallthru
      _
    // Predicated region
    $region22: #{_lambda_.1} parent=1 // pred_check
      _
    $region23: #{_lambda_.1} parent=1 // pred_check_branch
      %72 = sbr.rel (0) target = $region25
    $region24: #{_lambda_.1} parent=1 // pred_region
      _
    $region25: #{_lambda_.1} parent=1 // pred_fallthru
      _
    // Predicated region
    $region26: #{_lambda_.1} parent=1 // pred_check
      _
    $region27: #{_lambda_.1} parent=1 // pred_check_branch
      %74 = sbr.rel (0) target = $region29
    $region28: #{_lambda_.1} parent=1 // pred_region
      %s76 = ssub.s32 2048, 2048
      %77 = vsyncadd [#allocation9], %s76
      %s78 = sshll.u32 [#allocation10], 4
      %s79 = int_to_ptr.vmem [resolvable:$true] %s78
      %84 = dma.hbm_to_vmem [thread:$0]  %s6, 2048, %s79, [#allocation9], 128, 128, 8
    $region29: #{_lambda_.1} parent=1 // pred_fallthru
      _
    // Predicated region
    $region30: #{_lambda_.1} parent=1 // pred_check
      _
    $region31: #{_lambda_.1} parent=1 // pred_check_branch
      %86 = sbr.rel (0) target = $region33
    $region32: #{_lambda_.1} parent=1 // pred_region
      _
    $region33: #{_lambda_.1} parent=1 // pred_fallthru
      _
    // Predicated region
    $region34: #{_lambda_.1} parent=1 // pred_check
      _
    $region35: #{_lambda_.1} parent=1 // pred_check_branch
      %88 = sbr.rel (0) target = $region37
    $region36: #{_lambda_.1} parent=1 // pred_region
      %s90 = ssub.s32 128, 128
      %91 = vsyncadd [#allocation12], %s90
      %s93 = sshll.u32 [#allocation11], 4
      %s94 = int_to_ptr.vmem [resolvable:$true] %s93
      %96 = dma.hbm_to_vmem [thread:$0]  %s8, 128, %s94, [#allocation12]
    $region37: #{_lambda_.1} parent=1 // pred_fallthru
      _
    // Predicated region
    $region38: #{_lambda_.1} parent=1 // pred_check
      _
    $region39: #{_lambda_.1} parent=1 // pred_check_branch
      %98 = sbr.rel (0) target = $region41
    $region40: #{_lambda_.1} parent=1 // pred_region
      _
    $region41: #{_lambda_.1} parent=1 // pred_fallthru
      _
    // Predicated region
    $region42: #{_lambda_.1} parent=1 // pred_check
      _
    $region43: #{_lambda_.1} parent=1 // pred_check_branch
      %100 = sbr.rel (0) target = $region45
    $region44: #{_lambda_.1} parent=1 // pred_region
      %101 = dma.done [#allocation4], 8192
    $region45: #{_lambda_.1} parent=1 // pred_fallthru
      _
    // Predicated region
    $region46: #{_lambda_.1} parent=1 // pred_check
      _
    $region47: #{_lambda_.1} parent=1 // pred_check_branch
      %103 = sbr.rel (0) target = $region49
    $region48: #{_lambda_.1} parent=1 // pred_region
      %104 = dma.done [#allocation6], 65536
    $region49: #{_lambda_.1} parent=1 // pred_fallthru
      _
    // Predicated region
    $region50: #{_lambda_.1} parent=1 // pred_check
      _
    $region51: #{_lambda_.1} parent=1 // pred_check_branch
      %106 = sbr.rel (0) target = $region53
    $region52: #{_lambda_.1} parent=1 // pred_region
      %107 = dma.done [#allocation6], 64
    $region53: #{_lambda_.1} parent=1 // pred_fallthru
      _
    // Predicated region
    $region54: #{_lambda_.1} parent=1 // pred_check
      _
    $region55: #{_lambda_.1} parent=1 // pred_check_branch
      %109 = sbr.rel (0) target = $region57
    $region56: #{_lambda_.1} parent=1 // pred_region
      %110 = dma.done [#allocation9], 8192
    $region57: #{_lambda_.1} parent=1 // pred_fallthru
      _
    // Predicated region
    $region58: #{_lambda_.1} parent=1 // pred_check
      _
    $region59: #{_lambda_.1} parent=1 // pred_check_branch
      %112 = sbr.rel (0) target = $region61
    $region60: #{_lambda_.1} parent=1 // pred_region
      %113 = dma.done [#allocation9], 2048
    $region61: #{_lambda_.1} parent=1 // pred_fallthru
      _
    // Predicated region
    $region62: #{_lambda_.1} parent=1 // pred_check
      _
    $region63: #{_lambda_.1} parent=1 // pred_check_branch
      %115 = sbr.rel (0) target = $region65
    $region64: #{_lambda_.1} parent=1 // pred_region
      %116 = dma.done [#allocation12], 128
    $region65: #{_lambda_.1} parent=1 // pred_fallthru
      _
    %v117 = vld [vmem:[%s0] sm:$0xff]
    %v118 = vld [vmem:[%s0 + $0x8] sm:$0xff]
    %v119 = vld [vmem:[%s0 + $0x40] sm:$0xff]
    %v120 = vld [vmem:[%s0 + $0x48] sm:$0xff]
    %v121 = vld [vmem:[#allocation3] sm:$0xff]
    %v122 = vld [vmem:[#allocation3 + $0x8] sm:$0xff]
    %v123 = vld [vmem:[#allocation3 + $0x10] sm:$0xff]
    %v124 = vld [vmem:[#allocation3 + $0x18] sm:$0xff]
    %v125 = vld [vmem:[#allocation3 + $0x20] sm:$0xff]
    %v126 = vld [vmem:[#allocation3 + $0x28] sm:$0xff]
    %v127 = vld [vmem:[#allocation3 + $0x30] sm:$0xff]
    %v128 = vld [vmem:[#allocation3 + $0x38] sm:$0xff]
    %v129 = vld [vmem:[#allocation3 + $0x40] sm:$0xff]
    %v130 = vld [vmem:[#allocation3 + $0x48] sm:$0xff]
    %v131 = vld [vmem:[#allocation3 + $0x50] sm:$0xff]
    %v132 = vld [vmem:[#allocation3 + $0x58] sm:$0xff]
    %v133 = vld [vmem:[#allocation3 + $0x60] sm:$0xff]
    %v134 = vld [vmem:[#allocation3 + $0x68] sm:$0xff]
    %v135 = vld [vmem:[#allocation3 + $0x70] sm:$0xff]
    %v136 = vld [vmem:[#allocation3 + $0x78] sm:$0xff]
    %137 = vmatprep.subr.mxu0 0.0
    %138 = vmatpush1.msra.mxu0 %v136
    %139 = vmatprep.subr.mxu0 0.0
    %140 = vmatpush1.msra.mxu0 %v135
    %141 = vmatprep.subr.mxu0 0.0
    %142 = vmatpush1.msra.mxu0 %v134
    %143 = vmatprep.subr.mxu0 0.0
    %144 = vmatpush1.msra.mxu0 %v133
    %145 = vmatprep.subr.mxu0 0.0
    %146 = vmatpush1.msra.mxu0 %v132
    %147 = vmatprep.subr.mxu0 0.0
    %148 = vmatpush1.msra.mxu0 %v131
    %149 = vmatprep.subr.mxu0 0.0
    %150 = vmatpush1.msra.mxu0 %v130
    %151 = vmatprep.subr.mxu0 0.0
    %152 = vmatpush1.msra.mxu0 %v129
    %153 = vmatprep.subr.mxu0 0.0
    %154 = vmatpush1.msra.mxu0 %v128
    %155 = vmatprep.subr.mxu0 0.0
    %156 = vmatpush1.msra.mxu0 %v127
    %157 = vmatprep.subr.mxu0 0.0
    %158 = vmatpush1.msra.mxu0 %v126
    %159 = vmatprep.subr.mxu0 0.0
    %160 = vmatpush1.msra.mxu0 %v125
    %161 = vmatprep.subr.mxu0 0.0
    %162 = vmatpush1.msra.mxu0 %v124
    %163 = vmatprep.subr.mxu0 0.0
    %164 = vmatpush1.msra.mxu0 %v123
    %165 = vmatprep.subr.mxu0 0.0
    %166 = vmatpush1.msra.mxu0 %v122
    %167 = vmatprep.subr.mxu0 0.0
    %168 = vmatpush1.msra.mxu0 %v121
    %169 = vmatprep.subr.mxu0 0.0
    %170 = vmatpush2.msra.mxu0 0.0
    %171 = vmatprep.subr.mxu0 0.0
    %172 = vmatpush2.msra.mxu0 0.0
    %173 = vmatprep.subr.mxu0 0.0
    %174 = vmatpush2.msra.mxu0 0.0
    %175 = vmatprep.subr.mxu0 0.0
    %176 = vmatpush2.msra.mxu0 0.0
    %177 = vmatprep.subr.mxu0 0.0
    %178 = vmatpush2.msra.mxu0 0.0
    %179 = vmatprep.subr.mxu0 0.0
    %180 = vmatpush2.msra.mxu0 0.0
    %181 = vmatprep.subr.mxu0 0.0
    %182 = vmatpush2.msra.mxu0 0.0
    %183 = vmatprep.subr.mxu0 0.0
    %184 = vmatpush2.msra.mxu0 0.0
    %185 = vmatprep.subr.mxu0 0.0
    %186 = vmatpush2.msra.mxu0 0.0
    %187 = vmatprep.subr.mxu0 0.0
    %188 = vmatpush2.msra.mxu0 0.0
    %189 = vmatprep.subr.mxu0 0.0
    %190 = vmatpush2.msra.mxu0 0.0
    %191 = vmatprep.subr.mxu0 0.0
    %192 = vmatpush2.msra.mxu0 0.0
    %193 = vmatprep.subr.mxu0 0.0
    %194 = vmatpush2.msra.mxu0 0.0
    %195 = vmatprep.subr.mxu0 0.0
    %196 = vmatpush2.msra.mxu0 0.0
    %197 = vmatprep.subr.mxu0 0.0
    %198 = vmatpush2.msra.mxu0 0.0
    %199 = vmatprep.subr.mxu0 0.0
    %200 = vmatpush2.msra.mxu0 0.0
    %201 = vmatprep.mubr.f32.mxu0 0.0
    %202 = vmatmul.mubr.f32.gmra.mxu0 %v117
    %v203 = vpop.f32.mrf.mxu0
    %v204 = vadd.f32 0.0, %v203
    %v205 = vpop.f32.mrf.mxu0
    %206 = vmatprep.mubr.f32.mxu0 0.0
    %207 = vmatmul.mubr.f32.gmra.mxu0 %v118
    %v208 = vpop.f32.mrf.mxu0
    %v209 = vadd.f32 0.0, %v208
    %v210 = vpop.f32.mrf.mxu0
    %211 = vmatprep.mubr.f32.mxu0 0.0
    %212 = vmatmul.mubr.f32.gmra.mxu0 %v119
    %v213 = vpop.f32.mrf.mxu0
    %v214 = vadd.f32 0.0, %v213
    %v215 = vpop.f32.mrf.mxu0
    %216 = vmatprep.mubr.f32.mxu0 0.0
    %217 = vmatmul.mubr.f32.gmra.mxu0 %v120
    %v218 = vpop.f32.mrf.mxu0
    %v219 = vadd.f32 0.0, %v218
    %v220 = vpop.f32.mrf.mxu0
    %221 = vdwg.mxu0
    %226 = vrot.lane.b32.xlu0 %v204, 64
    %v227 = vpop.permute.xlu0 %226
    %228 = vrot.lane.b32.xlu0 %v209, 64
    %v229 = vpop.permute.xlu0 %228
    %230 = vrot.lane.b32.xlu0 %v214, 64
    %v231 = vpop.permute.xlu0 %230
    %232 = vrot.lane.b32.xlu0 %v219, 64
    %v233 = vpop.permute.xlu0 %232
    %v238 = vmax.f32 %v204, %v227
    %v239 = vmax.f32 %v209, %v229
    %v240 = vmax.f32 %v214, %v231
    %v241 = vmax.f32 %v219, %v233
    %v242 = vcombine.high %v238, 0.0
    %v244 = vunpack.c.l.s4 1983009808
    %v245 = vunpack.c.0.s8 %v244
    %v246 = vlaneseq
    %v247 = vshrl.u32 %v246, 7
    %v248 = vsub.s32 %v245, %v247
    %v249 = vrot.slane %v238, %v248
    %v251 = vunpack.c.l.s4 1983009808
    %v252 = vunpack.c.0.s8 %v251
    %v253 = vlaneseq
    %v254 = vshrl.u32 %v253, 7
    %v255 = vsub.s32 %v252, %v254
    %v256 = vrot.slane %v242, %v255
    %v257 = vcombine.high %v240, 0.0
    %v259 = vunpack.c.l.s4 1983009808
    %v260 = vunpack.c.0.s8 %v259
    %v261 = vlaneseq
    %v262 = vshrl.u32 %v261, 7
    %v263 = vsub.s32 %v260, %v262
    %v264 = vrot.slane %v240, %v263
    %v266 = vunpack.c.l.s4 1983009808
    %v267 = vunpack.c.0.s8 %v266
    %v268 = vlaneseq
    %v269 = vshrl.u32 %v268, 7
    %v270 = vsub.s32 %v267, %v269
    %v271 = vrot.slane %v257, %v270
    %v272 = vcombine.low %v249, %v264
    %v273 = vcombine.high %v249, %v264
    %v275 = vunpack.c.l.s4 1934713408
    %v276 = vunpack.c.0.s8 %v275
    %v277 = vlaneseq
    %v278 = vshrl.u32 %v277, 7
    %v279 = vsub.s32 %v276, %v278
    %v280 = vrot.slane %v272, %v279
    %v282 = vunpack.c.l.s4 1934713408
    %v283 = vunpack.c.0.s8 %v282
    %v284 = vlaneseq
    %v285 = vshrl.u32 %v284, 7
    %v286 = vsub.s32 %v283, %v285
    %v287 = vrot.slane %v273, %v286
    %v288 = vcombine.low %v256, %v271
    %v289 = vcombine.high %v256, %v271
    %v291 = vunpack.c.l.s4 1934713408
    %v292 = vunpack.c.0.s8 %v291
    %v293 = vlaneseq
    %v294 = vshrl.u32 %v293, 7
    %v295 = vsub.s32 %v292, %v294
    %v296 = vrot.slane %v288, %v295
    %v298 = vunpack.c.l.s4 1934713408
    %v299 = vunpack.c.0.s8 %v298
    %v300 = vlaneseq
    %v301 = vshrl.u32 %v300, 7
    %v302 = vsub.s32 %v299, %v301
    %v303 = vrot.slane %v289, %v302
    %v304 = vcombine.high %v280, 0.0
    %v305 = vcombine.high %v287, 0.0
    %v306 = vcombine.high %v296, 0.0
    %v307 = vcombine.high %v303, 0.0
    %v308 = vcombine.high %v239, 0.0
    %v310 = vunpack.c.l.s4 1983009808
    %v311 = vunpack.c.0.s8 %v310
    %v312 = vlaneseq
    %v313 = vshrl.u32 %v312, 7
    %v314 = vsub.s32 %v311, %v313
    %v315 = vrot.slane %v239, %v314
    %v317 = vunpack.c.l.s4 1983009808
    %v318 = vunpack.c.0.s8 %v317
    %v319 = vlaneseq
    %v320 = vshrl.u32 %v319, 7
    %v321 = vsub.s32 %v318, %v320
    %v322 = vrot.slane %v308, %v321
    %v323 = vcombine.high %v241, 0.0
    %v325 = vunpack.c.l.s4 1983009808
    %v326 = vunpack.c.0.s8 %v325
    %v327 = vlaneseq
    %v328 = vshrl.u32 %v327, 7
    %v329 = vsub.s32 %v326, %v328
    %v330 = vrot.slane %v241, %v329
    %v332 = vunpack.c.l.s4 1983009808
    %v333 = vunpack.c.0.s8 %v332
    %v334 = vlaneseq
    %v335 = vshrl.u32 %v334, 7
    %v336 = vsub.s32 %v333, %v335
    %v337 = vrot.slane %v323, %v336
    %v338 = vcombine.low %v315, %v330
    %v339 = vcombine.high %v315, %v330
    %v341 = vunpack.c.l.s4 1934713408
    %v342 = vunpack.c.0.s8 %v341
    %v343 = vlaneseq
    %v344 = vshrl.u32 %v343, 7
    %v345 = vsub.s32 %v342, %v344
    %v346 = vrot.slane %v338, %v345
    %v348 = vunpack.c.l.s4 1934713408
    %v349 = vunpack.c.0.s8 %v348
    %v350 = vlaneseq
    %v351 = vshrl.u32 %v350, 7
    %v352 = vsub.s32 %v349, %v351
    %v353 = vrot.slane %v339, %v352
    %v354 = vcombine.low %v322, %v337
    %v355 = vcombine.high %v322, %v337
    %v357 = vunpack.c.l.s4 1934713408
    %v358 = vunpack.c.0.s8 %v357
    %v359 = vlaneseq
    %v360 = vshrl.u32 %v359, 7
    %v361 = vsub.s32 %v358, %v360
    %v362 = vrot.slane %v354, %v361
    %v364 = vunpack.c.l.s4 1934713408
    %v365 = vunpack.c.0.s8 %v364
    %v366 = vlaneseq
    %v367 = vshrl.u32 %v366, 7
    %v368 = vsub.s32 %v365, %v367
    %v369 = vrot.slane %v355, %v368
    %v370 = vcombine.high %v346, 0.0
    %v371 = vcombine.high %v353, 0.0
    %v372 = vcombine.high %v362, 0.0
    %v373 = vcombine.high %v369, 0.0
    %375 = vrot.lane.b32.xlu0 %v304, 64
    %v376 = vpop.permute.xlu0 %375
    %379 = vrot.lane.b32.xlu0 %v305, 64
    %v380 = vpop.permute.xlu0 %379
    %383 = vrot.lane.b32.xlu0 %v306, 64
    %v384 = vpop.permute.xlu0 %383
    %387 = vrot.lane.b32.xlu0 %v307, 64
    %v388 = vpop.permute.xlu0 %387
    %391 = vrot.lane.b32.xlu0 %v370, 64
    %v392 = vpop.permute.xlu0 %391
    %395 = vrot.lane.b32.xlu0 %v371, 64
    %v396 = vpop.permute.xlu0 %395
    %399 = vrot.lane.b32.xlu0 %v372, 64
    %v400 = vpop.permute.xlu0 %399
    %403 = vrot.lane.b32.xlu0 %v373, 64
    %v404 = vpop.permute.xlu0 %403
    %vm406 = vcmask 523264
    %v407 = vsel %vm406, %v280, %v376
    %v408 = vsel %vm406, %v287, %v380
    %v409 = vsel %vm406, %v296, %v384
    %v410 = vsel %vm406, %v303, %v388
    %v411 = vsel %vm406, %v346, %v392
    %v412 = vsel %vm406, %v353, %v396
    %v413 = vsel %vm406, %v362, %v400
    %v414 = vsel %vm406, %v369, %v404
    %v415 = vld [vmem:[#allocation5] sm:$0xff]
    %v416 = vld [vmem:[#allocation5 + $0x8] sm:$0xff]
    %v417 = vld [vmem:[#allocation5 + $0x10] sm:$0xff]
    %v418 = vld [vmem:[#allocation5 + $0x18] sm:$0xff]
    %v419 = vld [vmem:[#allocation5 + $0x20] sm:$0xff]
    %v420 = vld [vmem:[#allocation5 + $0x28] sm:$0xff]
    %v421 = vld [vmem:[#allocation5 + $0x30] sm:$0xff]
    %v422 = vld [vmem:[#allocation5 + $0x38] sm:$0xff]
    %v423 = vld [vmem:[#allocation5 + $0x40] sm:$0xff]
    %v424 = vld [vmem:[#allocation5 + $0x48] sm:$0xff]
    %v425 = vld [vmem:[#allocation5 + $0x50] sm:$0xff]
    %v426 = vld [vmem:[#allocation5 + $0x58] sm:$0xff]
    %v427 = vld [vmem:[#allocation5 + $0x60] sm:$0xff]
    %v428 = vld [vmem:[#allocation5 + $0x68] sm:$0xff]
    %v429 = vld [vmem:[#allocation5 + $0x70] sm:$0xff]
    %v430 = vld [vmem:[#allocation5 + $0x78] sm:$0xff]
    %v431 = vld [vmem:[#allocation5 + $0x80] sm:$0xff]
    %v432 = vld [vmem:[#allocation5 + $0x88] sm:$0xff]
    %v433 = vld [vmem:[#allocation5 + $0x90] sm:$0xff]
    %v434 = vld [vmem:[#allocation5 + $0x98] sm:$0xff]
    %v435 = vld [vmem:[#allocation5 + $0xa0] sm:$0xff]
    %v436 = vld [vmem:[#allocation5 + $0xa8] sm:$0xff]
    %v437 = vld [vmem:[#allocation5 + $0xb0] sm:$0xff]
    %v438 = vld [vmem:[#allocation5 + $0xb8] sm:$0xff]
    %v439 = vld [vmem:[#allocation5 + $0xc0] sm:$0xff]
    %v440 = vld [vmem:[#allocation5 + $0xc8] sm:$0xff]
    %v441 = vld [vmem:[#allocation5 + $0xd0] sm:$0xff]
    %v442 = vld [vmem:[#allocation5 + $0xd8] sm:$0xff]
    %v443 = vld [vmem:[#allocation5 + $0xe0] sm:$0xff]
    %v444 = vld [vmem:[#allocation5 + $0xe8] sm:$0xff]
    %v445 = vld [vmem:[#allocation5 + $0xf0] sm:$0xff]
    %v446 = vld [vmem:[#allocation5 + $0xf8] sm:$0xff]
    %v447 = vld [vmem:[#allocation5 + $0x100] sm:$0xff]
    %v448 = vld [vmem:[#allocation5 + $0x108] sm:$0xff]
    %v449 = vld [vmem:[#allocation5 + $0x110] sm:$0xff]
    %v450 = vld [vmem:[#allocation5 + $0x118] sm:$0xff]
    %v451 = vld [vmem:[#allocation5 + $0x120] sm:$0xff]
    %v452 = vld [vmem:[#allocation5 + $0x128] sm:$0xff]
    %v453 = vld [vmem:[#allocation5 + $0x130] sm:$0xff]
    %v454 = vld [vmem:[#allocation5 + $0x138] sm:$0xff]
    %v455 = vld [vmem:[#allocation5 + $0x140] sm:$0xff]
    %v456 = vld [vmem:[#allocation5 + $0x148] sm:$0xff]
    %v457 = vld [vmem:[#allocation5 + $0x150] sm:$0xff]
    %v458 = vld [vmem:[#allocation5 + $0x158] sm:$0xff]
    %v459 = vld [vmem:[#allocation5 + $0x160] sm:$0xff]
    %v460 = vld [vmem:[#allocation5 + $0x168] sm:$0xff]
    %v461 = vld [vmem:[#allocation5 + $0x170] sm:$0xff]
    %v462 = vld [vmem:[#allocation5 + $0x178] sm:$0xff]
    %v463 = vld [vmem:[#allocation5 + $0x180] sm:$0xff]
    %v464 = vld [vmem:[#allocation5 + $0x188] sm:$0xff]
    %v465 = vld [vmem:[#allocation5 + $0x190] sm:$0xff]
    %v466 = vld [vmem:[#allocation5 + $0x198] sm:$0xff]
    %v467 = vld [vmem:[#allocation5 + $0x1a0] sm:$0xff]
    %v468 = vld [vmem:[#allocation5 + $0x1a8] sm:$0xff]
    %v469 = vld [vmem:[#allocation5 + $0x1b0] sm:$0xff]
    %v470 = vld [vmem:[#allocation5 + $0x1b8] sm:$0xff]
    %v471 = vld [vmem:[#allocation5 + $0x1c0] sm:$0xff]
    %v472 = vld [vmem:[#allocation5 + $0x1c8] sm:$0xff]
    %v473 = vld [vmem:[#allocation5 + $0x1d0] sm:$0xff]
    %v474 = vld [vmem:[#allocation5 + $0x1d8] sm:$0xff]
    %v475 = vld [vmem:[#allocation5 + $0x1e0] sm:$0xff]
    %v476 = vld [vmem:[#allocation5 + $0x1e8] sm:$0xff]
    %v477 = vld [vmem:[#allocation5 + $0x1f0] sm:$0xff]
    %v478 = vld [vmem:[#allocation5 + $0x1f8] sm:$0xff]
    %v479 = vld [vmem:[#allocation5 + $0x200] sm:$0xff]
    %v480 = vld [vmem:[#allocation5 + $0x208] sm:$0xff]
    %v481 = vld [vmem:[#allocation5 + $0x210] sm:$0xff]
    %v482 = vld [vmem:[#allocation5 + $0x218] sm:$0xff]
    %v483 = vld [vmem:[#allocation5 + $0x220] sm:$0xff]
    %v484 = vld [vmem:[#allocation5 + $0x228] sm:$0xff]
    %v485 = vld [vmem:[#allocation5 + $0x230] sm:$0xff]
    %v486 = vld [vmem:[#allocation5 + $0x238] sm:$0xff]
    %v487 = vld [vmem:[#allocation5 + $0x240] sm:$0xff]
    %v488 = vld [vmem:[#allocation5 + $0x248] sm:$0xff]
    %v489 = vld [vmem:[#allocation5 + $0x250] sm:$0xff]
    %v490 = vld [vmem:[#allocation5 + $0x258] sm:$0xff]
    %v491 = vld [vmem:[#allocation5 + $0x260] sm:$0xff]
    %v492 = vld [vmem:[#allocation5 + $0x268] sm:$0xff]
    %v493 = vld [vmem:[#allocation5 + $0x270] sm:$0xff]
    %v494 = vld [vmem:[#allocation5 + $0x278] sm:$0xff]
    %v495 = vld [vmem:[#allocation5 + $0x280] sm:$0xff]
    %v496 = vld [vmem:[#allocation5 + $0x288] sm:$0xff]
    %v497 = vld [vmem:[#allocation5 + $0x290] sm:$0xff]
    %v498 = vld [vmem:[#allocation5 + $0x298] sm:$0xff]
    %v499 = vld [vmem:[#allocation5 + $0x2a0] sm:$0xff]
    %v500 = vld [vmem:[#allocation5 + $0x2a8] sm:$0xff]
    %v501 = vld [vmem:[#allocation5 + $0x2b0] sm:$0xff]
    %v502 = vld [vmem:[#allocation5 + $0x2b8] sm:$0xff]
    %v503 = vld [vmem:[#allocation5 + $0x2c0] sm:$0xff]
    %v504 = vld [vmem:[#allocation5 + $0x2c8] sm:$0xff]
    %v505 = vld [vmem:[#allocation5 + $0x2d0] sm:$0xff]
    %v506 = vld [vmem:[#allocation5 + $0x2d8] sm:$0xff]
    %v507 = vld [vmem:[#allocation5 + $0x2e0] sm:$0xff]
    %v508 = vld [vmem:[#allocation5 + $0x2e8] sm:$0xff]
    %v509 = vld [vmem:[#allocation5 + $0x2f0] sm:$0xff]
    %v510 = vld [vmem:[#allocation5 + $0x2f8] sm:$0xff]
    %v511 = vld [vmem:[#allocation5 + $0x300] sm:$0xff]
    %v512 = vld [vmem:[#allocation5 + $0x308] sm:$0xff]
    %v513 = vld [vmem:[#allocation5 + $0x310] sm:$0xff]
    %v514 = vld [vmem:[#allocation5 + $0x318] sm:$0xff]
    %v515 = vld [vmem:[#allocation5 + $0x320] sm:$0xff]
    %v516 = vld [vmem:[#allocation5 + $0x328] sm:$0xff]
    %v517 = vld [vmem:[#allocation5 + $0x330] sm:$0xff]
    %v518 = vld [vmem:[#allocation5 + $0x338] sm:$0xff]
    %v519 = vld [vmem:[#allocation5 + $0x340] sm:$0xff]
    %v520 = vld [vmem:[#allocation5 + $0x348] sm:$0xff]
    %v521 = vld [vmem:[#allocation5 + $0x350] sm:$0xff]
    %v522 = vld [vmem:[#allocation5 + $0x358] sm:$0xff]
    %v523 = vld [vmem:[#allocation5 + $0x360] sm:$0xff]
    %v524 = vld [vmem:[#allocation5 + $0x368] sm:$0xff]
    %v525 = vld [vmem:[#allocation5 + $0x370] sm:$0xff]
    %v526 = vld [vmem:[#allocation5 + $0x378] sm:$0xff]
    %v527 = vld [vmem:[#allocation5 + $0x380] sm:$0xff]
    %v528 = vld [vmem:[#allocation5 + $0x388] sm:$0xff]
    %v529 = vld [vmem:[#allocation5 + $0x390] sm:$0xff]
    %v530 = vld [vmem:[#allocation5 + $0x398] sm:$0xff]
    %v531 = vld [vmem:[#allocation5 + $0x3a0] sm:$0xff]
    %v532 = vld [vmem:[#allocation5 + $0x3a8] sm:$0xff]
    %v533 = vld [vmem:[#allocation5 + $0x3b0] sm:$0xff]
    %v534 = vld [vmem:[#allocation5 + $0x3b8] sm:$0xff]
    %v535 = vld [vmem:[#allocation5 + $0x3c0] sm:$0xff]
    %v536 = vld [vmem:[#allocation5 + $0x3c8] sm:$0xff]
    %v537 = vld [vmem:[#allocation5 + $0x3d0] sm:$0xff]
    %v538 = vld [vmem:[#allocation5 + $0x3d8] sm:$0xff]
    %v539 = vld [vmem:[#allocation5 + $0x3e0] sm:$0xff]
    %v540 = vld [vmem:[#allocation5 + $0x3e8] sm:$0xff]
    %v541 = vld [vmem:[#allocation5 + $0x3f0] sm:$0xff]
    %v542 = vld [vmem:[#allocation5 + $0x3f8] sm:$0xff]
    %v543 = vld [vmem:[#allocation7] sm:$0x1]
    %v545 = vlaneseq
    %v546 = vshrl.u32 %v545, 7
    %v547 = vsub.s32 0, %v546
    %v548 = vrot.slane %v543, %v547
    %550 = vmatprep.subr.mxu0 0.0
    %551 = vmatpush1.msra.mxu0 %v430
    %552 = vmatprep.subr.mxu0 0.0
    %553 = vmatpush1.msra.mxu0 %v429
    %554 = vmatprep.subr.mxu0 0.0
    %555 = vmatpush1.msra.mxu0 %v428
    %556 = vmatprep.subr.mxu0 0.0
    %557 = vmatpush1.msra.mxu0 %v427
    %558 = vmatprep.subr.mxu0 0.0
    %559 = vmatpush1.msra.mxu0 %v426
    %560 = vmatprep.subr.mxu0 0.0
    %561 = vmatpush1.msra.mxu0 %v425
    %562 = vmatprep.subr.mxu0 0.0
    %563 = vmatpush1.msra.mxu0 %v424
    %564 = vmatprep.subr.mxu0 0.0
    %565 = vmatpush1.msra.mxu0 %v423
    %566 = vmatprep.subr.mxu0 0.0
    %567 = vmatpush1.msra.mxu0 %v422
    %568 = vmatprep.subr.mxu0 0.0
    %569 = vmatpush1.msra.mxu0 %v421
    %570 = vmatprep.subr.mxu0 0.0
    %571 = vmatpush1.msra.mxu0 %v420
    %572 = vmatprep.subr.mxu0 0.0
    %573 = vmatpush1.msra.mxu0 %v419
    %574 = vmatprep.subr.mxu0 0.0
    %575 = vmatpush1.msra.mxu0 %v418
    %576 = vmatprep.subr.mxu0 0.0
    %577 = vmatpush1.msra.mxu0 %v417
    %578 = vmatprep.subr.mxu0 0.0
    %579 = vmatpush1.msra.mxu0 %v416
    %580 = vmatprep.subr.mxu0 0.0
    %581 = vmatpush1.msra.mxu0 %v415
    %582 = vmatprep.subr.mxu0 0.0
    %583 = vmatpush2.msra.mxu0 %v446
    %584 = vmatprep.subr.mxu0 0.0
    %585 = vmatpush2.msra.mxu0 %v445
    %586 = vmatprep.subr.mxu0 0.0
    %587 = vmatpush2.msra.mxu0 %v444
    %588 = vmatprep.subr.mxu0 0.0
    %589 = vmatpush2.msra.mxu0 %v443
    %590 = vmatprep.subr.mxu0 0.0
    %591 = vmatpush2.msra.mxu0 %v442
    %592 = vmatprep.subr.mxu0 0.0
    %593 = vmatpush2.msra.mxu0 %v441
    %594 = vmatprep.subr.mxu0 0.0
    %595 = vmatpush2.msra.mxu0 %v440
    %596 = vmatprep.subr.mxu0 0.0
    %597 = vmatpush2.msra.mxu0 %v439
    %598 = vmatprep.subr.mxu0 0.0
    %599 = vmatpush2.msra.mxu0 %v438
    %600 = vmatprep.subr.mxu0 0.0
    %601 = vmatpush2.msra.mxu0 %v437
    %602 = vmatprep.subr.mxu0 0.0
    %603 = vmatpush2.msra.mxu0 %v436
    %604 = vmatprep.subr.mxu0 0.0
    %605 = vmatpush2.msra.mxu0 %v435
    %606 = vmatprep.subr.mxu0 0.0
    %607 = vmatpush2.msra.mxu0 %v434
    %608 = vmatprep.subr.mxu0 0.0
    %609 = vmatpush2.msra.mxu0 %v433
    %610 = vmatprep.subr.mxu0 0.0
    %611 = vmatpush2.msra.mxu0 %v432
    %612 = vmatprep.subr.mxu0 0.0
    %613 = vmatpush2.msra.mxu0 %v431
    %614 = vmatprep.mubr.f32.mxu0 %v408
    %615 = vmatmul.mubr.f32.gmra.mxu0 %v407
    %v616 = vpop.f32.mrf.mxu0
    %v617 = vadd.f32 %v548, %v616
    %v618 = vpop.f32.mrf.mxu0
    %619 = vdwg.mxu0
    %620 = vmatprep.subr.mxu0 0.0
    %621 = vmatpush1.msra.mxu0 %v462
    %622 = vmatprep.subr.mxu0 0.0
    %623 = vmatpush1.msra.mxu0 %v461
    %624 = vmatprep.subr.mxu0 0.0
    %625 = vmatpush1.msra.mxu0 %v460
    %626 = vmatprep.subr.mxu0 0.0
    %627 = vmatpush1.msra.mxu0 %v459
    %628 = vmatprep.subr.mxu0 0.0
    %629 = vmatpush1.msra.mxu0 %v458
    %630 = vmatprep.subr.mxu0 0.0
    %631 = vmatpush1.msra.mxu0 %v457
    %632 = vmatprep.subr.mxu0 0.0
    %633 = vmatpush1.msra.mxu0 %v456
    %634 = vmatprep.subr.mxu0 0.0
    %635 = vmatpush1.msra.mxu0 %v455
    %636 = vmatprep.subr.mxu0 0.0
    %637 = vmatpush1.msra.mxu0 %v454
    %638 = vmatprep.subr.mxu0 0.0
    %639 = vmatpush1.msra.mxu0 %v453
    %640 = vmatprep.subr.mxu0 0.0
    %641 = vmatpush1.msra.mxu0 %v452
    %642 = vmatprep.subr.mxu0 0.0
    %643 = vmatpush1.msra.mxu0 %v451
    %644 = vmatprep.subr.mxu0 0.0
    %645 = vmatpush1.msra.mxu0 %v450
    %646 = vmatprep.subr.mxu0 0.0
    %647 = vmatpush1.msra.mxu0 %v449
    %648 = vmatprep.subr.mxu0 0.0
    %649 = vmatpush1.msra.mxu0 %v448
    %650 = vmatprep.subr.mxu0 0.0
    %651 = vmatpush1.msra.mxu0 %v447
    %652 = vmatprep.subr.mxu0 0.0
    %653 = vmatpush2.msra.mxu0 %v478
    %654 = vmatprep.subr.mxu0 0.0
    %655 = vmatpush2.msra.mxu0 %v477
    %656 = vmatprep.subr.mxu0 0.0
    %657 = vmatpush2.msra.mxu0 %v476
    %658 = vmatprep.subr.mxu0 0.0
    %659 = vmatpush2.msra.mxu0 %v475
    %660 = vmatprep.subr.mxu0 0.0
    %661 = vmatpush2.msra.mxu0 %v474
    %662 = vmatprep.subr.mxu0 0.0
    %663 = vmatpush2.msra.mxu0 %v473
    %664 = vmatprep.subr.mxu0 0.0
    %665 = vmatpush2.msra.mxu0 %v472
    %666 = vmatprep.subr.mxu0 0.0
    %667 = vmatpush2.msra.mxu0 %v471
    %668 = vmatprep.subr.mxu0 0.0
    %669 = vmatpush2.msra.mxu0 %v470
    %670 = vmatprep.subr.mxu0 0.0
    %671 = vmatpush2.msra.mxu0 %v469
    %672 = vmatprep.subr.mxu0 0.0
    %673 = vmatpush2.msra.mxu0 %v468
    %674 = vmatprep.subr.mxu0 0.0
    %675 = vmatpush2.msra.mxu0 %v467
    %676 = vmatprep.subr.mxu0 0.0
    %677 = vmatpush2.msra.mxu0 %v466
    %678 = vmatprep.subr.mxu0 0.0
    %679 = vmatpush2.msra.mxu0 %v465
    %680 = vmatprep.subr.mxu0 0.0
    %681 = vmatpush2.msra.mxu0 %v464
    %682 = vmatprep.subr.mxu0 0.0
    %683 = vmatpush2.msra.mxu0 %v463
    %684 = vmatprep.mubr.f32.mxu0 %v410
    %685 = vmatmul.mubr.f32.gmra.mxu0 %v409
    %v686 = vpop.f32.mrf.mxu0
    %v687 = vadd.f32 %v617, %v686
    %v688 = vpop.f32.mrf.mxu0
    %689 = vdwg.mxu0
    %690 = vmatprep.subr.mxu0 0.0
    %691 = vmatpush1.msra.mxu0 %v494
    %692 = vmatprep.subr.mxu0 0.0
    %693 = vmatpush1.msra.mxu0 %v493
    %694 = vmatprep.subr.mxu0 0.0
    %695 = vmatpush1.msra.mxu0 %v492
    %696 = vmatprep.subr.mxu0 0.0
    %697 = vmatpush1.msra.mxu0 %v491
    %698 = vmatprep.subr.mxu0 0.0
    %699 = vmatpush1.msra.mxu0 %v490
    %700 = vmatprep.subr.mxu0 0.0
    %701 = vmatpush1.msra.mxu0 %v489
    %702 = vmatprep.subr.mxu0 0.0
    %703 = vmatpush1.msra.mxu0 %v488
    %704 = vmatprep.subr.mxu0 0.0
    %705 = vmatpush1.msra.mxu0 %v487
    %706 = vmatprep.subr.mxu0 0.0
    %707 = vmatpush1.msra.mxu0 %v486
    %708 = vmatprep.subr.mxu0 0.0
    %709 = vmatpush1.msra.mxu0 %v485
    %710 = vmatprep.subr.mxu0 0.0
    %711 = vmatpush1.msra.mxu0 %v484
    %712 = vmatprep.subr.mxu0 0.0
    %713 = vmatpush1.msra.mxu0 %v483
    %714 = vmatprep.subr.mxu0 0.0
    %715 = vmatpush1.msra.mxu0 %v482
    %716 = vmatprep.subr.mxu0 0.0
    %717 = vmatpush1.msra.mxu0 %v481
    %718 = vmatprep.subr.mxu0 0.0
    %719 = vmatpush1.msra.mxu0 %v480
    %720 = vmatprep.subr.mxu0 0.0
    %721 = vmatpush1.msra.mxu0 %v479
    %722 = vmatprep.subr.mxu0 0.0
    %723 = vmatpush2.msra.mxu0 %v510
    %724 = vmatprep.subr.mxu0 0.0
    %725 = vmatpush2.msra.mxu0 %v509
    %726 = vmatprep.subr.mxu0 0.0
    %727 = vmatpush2.msra.mxu0 %v508
    %728 = vmatprep.subr.mxu0 0.0
    %729 = vmatpush2.msra.mxu0 %v507
    %730 = vmatprep.subr.mxu0 0.0
    %731 = vmatpush2.msra.mxu0 %v506
    %732 = vmatprep.subr.mxu0 0.0
    %733 = vmatpush2.msra.mxu0 %v505
    %734 = vmatprep.subr.mxu0 0.0
    %735 = vmatpush2.msra.mxu0 %v504
    %736 = vmatprep.subr.mxu0 0.0
    %737 = vmatpush2.msra.mxu0 %v503
    %738 = vmatprep.subr.mxu0 0.0
    %739 = vmatpush2.msra.mxu0 %v502
    %740 = vmatprep.subr.mxu0 0.0
    %741 = vmatpush2.msra.mxu0 %v501
    %742 = vmatprep.subr.mxu0 0.0
    %743 = vmatpush2.msra.mxu0 %v500
    %744 = vmatprep.subr.mxu0 0.0
    %745 = vmatpush2.msra.mxu0 %v499
    %746 = vmatprep.subr.mxu0 0.0
    %747 = vmatpush2.msra.mxu0 %v498
    %748 = vmatprep.subr.mxu0 0.0
    %749 = vmatpush2.msra.mxu0 %v497
    %750 = vmatprep.subr.mxu0 0.0
    %751 = vmatpush2.msra.mxu0 %v496
    %752 = vmatprep.subr.mxu0 0.0
    %753 = vmatpush2.msra.mxu0 %v495
    %754 = vmatprep.mubr.f32.mxu0 %v412
    %755 = vmatmul.mubr.f32.gmra.mxu0 %v411
    %v756 = vpop.f32.mrf.mxu0
    %v757 = vadd.f32 %v687, %v756
    %v758 = vpop.f32.mrf.mxu0
    %759 = vdwg.mxu0
    %760 = vmatprep.subr.mxu0 0.0
    %761 = vmatpush1.msra.mxu0 %v526
    %762 = vmatprep.subr.mxu0 0.0
    %763 = vmatpush1.msra.mxu0 %v525
    %764 = vmatprep.subr.mxu0 0.0
    %765 = vmatpush1.msra.mxu0 %v524
    %766 = vmatprep.subr.mxu0 0.0
    %767 = vmatpush1.msra.mxu0 %v523
    %768 = vmatprep.subr.mxu0 0.0
    %769 = vmatpush1.msra.mxu0 %v522
    %770 = vmatprep.subr.mxu0 0.0
    %771 = vmatpush1.msra.mxu0 %v521
    %772 = vmatprep.subr.mxu0 0.0
    %773 = vmatpush1.msra.mxu0 %v520
    %774 = vmatprep.subr.mxu0 0.0
    %775 = vmatpush1.msra.mxu0 %v519
    %776 = vmatprep.subr.mxu0 0.0
    %777 = vmatpush1.msra.mxu0 %v518
    %778 = vmatprep.subr.mxu0 0.0
    %779 = vmatpush1.msra.mxu0 %v517
    %780 = vmatprep.subr.mxu0 0.0
    %781 = vmatpush1.msra.mxu0 %v516
    %782 = vmatprep.subr.mxu0 0.0
    %783 = vmatpush1.msra.mxu0 %v515
    %784 = vmatprep.subr.mxu0 0.0
    %785 = vmatpush1.msra.mxu0 %v514
    %786 = vmatprep.subr.mxu0 0.0
    %787 = vmatpush1.msra.mxu0 %v513
    %788 = vmatprep.subr.mxu0 0.0
    %789 = vmatpush1.msra.mxu0 %v512
    %790 = vmatprep.subr.mxu0 0.0
    %791 = vmatpush1.msra.mxu0 %v511
    %792 = vmatprep.subr.mxu0 0.0
    %793 = vmatpush2.msra.mxu0 %v542
    %794 = vmatprep.subr.mxu0 0.0
    %795 = vmatpush2.msra.mxu0 %v541
    %796 = vmatprep.subr.mxu0 0.0
    %797 = vmatpush2.msra.mxu0 %v540
    %798 = vmatprep.subr.mxu0 0.0
    %799 = vmatpush2.msra.mxu0 %v539
    %800 = vmatprep.subr.mxu0 0.0
    %801 = vmatpush2.msra.mxu0 %v538
    %802 = vmatprep.subr.mxu0 0.0
    %803 = vmatpush2.msra.mxu0 %v537
    %804 = vmatprep.subr.mxu0 0.0
    %805 = vmatpush2.msra.mxu0 %v536
    %806 = vmatprep.subr.mxu0 0.0
    %807 = vmatpush2.msra.mxu0 %v535
    %808 = vmatprep.subr.mxu0 0.0
    %809 = vmatpush2.msra.mxu0 %v534
    %810 = vmatprep.subr.mxu0 0.0
    %811 = vmatpush2.msra.mxu0 %v533
    %812 = vmatprep.subr.mxu0 0.0
    %813 = vmatpush2.msra.mxu0 %v532
    %814 = vmatprep.subr.mxu0 0.0
    %815 = vmatpush2.msra.mxu0 %v531
    %816 = vmatprep.subr.mxu0 0.0
    %817 = vmatpush2.msra.mxu0 %v530
    %818 = vmatprep.subr.mxu0 0.0
    %819 = vmatpush2.msra.mxu0 %v529
    %820 = vmatprep.subr.mxu0 0.0
    %821 = vmatpush2.msra.mxu0 %v528
    %822 = vmatprep.subr.mxu0 0.0
    %823 = vmatpush2.msra.mxu0 %v527
    %824 = vmatprep.mubr.f32.mxu0 %v414
    %825 = vmatmul.mubr.f32.gmra.mxu0 %v413
    %v826 = vpop.f32.mrf.mxu0
    %v827 = vadd.f32 %v757, %v826
    %v828 = vpop.f32.mrf.mxu0
    %829 = vdwg.mxu0
    %v830 = vld [vmem:[%s0 + $0x10] sm:$0xff]
    %v831 = vld [vmem:[%s0 + $0x18] sm:$0xff]
    %v832 = vld [vmem:[%s0 + $0x50] sm:$0xff]
    %v833 = vld [vmem:[%s0 + $0x58] sm:$0xff]
    %s834 = scalar_lea.vmem [#allocation3], 128
    %v835 = vld [vmem:[%s834] sm:$0xff]
    %v836 = vld [vmem:[%s834 + $0x8] sm:$0xff]
    %v837 = vld [vmem:[%s834 + $0x10] sm:$0xff]
    %v838 = vld [vmem:[%s834 + $0x18] sm:$0xff]
    %v839 = vld [vmem:[%s834 + $0x20] sm:$0xff]
    %v840 = vld [vmem:[%s834 + $0x28] sm:$0xff]
    %v841 = vld [vmem:[%s834 + $0x30] sm:$0xff]
    %v842 = vld [vmem:[%s834 + $0x38] sm:$0xff]
    %v843 = vld [vmem:[%s834 + $0x40] sm:$0xff]
    %v844 = vld [vmem:[%s834 + $0x48] sm:$0xff]
    %v845 = vld [vmem:[%s834 + $0x50] sm:$0xff]
    %v846 = vld [vmem:[%s834 + $0x58] sm:$0xff]
    %v847 = vld [vmem:[%s834 + $0x60] sm:$0xff]
    %v848 = vld [vmem:[%s834 + $0x68] sm:$0xff]
    %v849 = vld [vmem:[%s834 + $0x70] sm:$0xff]
    %v850 = vld [vmem:[%s834 + $0x78] sm:$0xff]
    %851 = vmatprep.subr.mxu0 0.0
    %852 = vmatpush1.msra.mxu0 %v850
    %853 = vmatprep.subr.mxu0 0.0
    %854 = vmatpush1.msra.mxu0 %v849
    %855 = vmatprep.subr.mxu0 0.0
    %856 = vmatpush1.msra.mxu0 %v848
    %857 = vmatprep.subr.mxu0 0.0
    %858 = vmatpush1.msra.mxu0 %v847
    %859 = vmatprep.subr.mxu0 0.0
    %860 = vmatpush1.msra.mxu0 %v846
    %861 = vmatprep.subr.mxu0 0.0
    %862 = vmatpush1.msra.mxu0 %v845
    %863 = vmatprep.subr.mxu0 0.0
    %864 = vmatpush1.msra.mxu0 %v844
    %865 = vmatprep.subr.mxu0 0.0
    %866 = vmatpush1.msra.mxu0 %v843
    %867 = vmatprep.subr.mxu0 0.0
    %868 = vmatpush1.msra.mxu0 %v842
    %869 = vmatprep.subr.mxu0 0.0
    %870 = vmatpush1.msra.mxu0 %v841
    %871 = vmatprep.subr.mxu0 0.0
    %872 = vmatpush1.msra.mxu0 %v840
    %873 = vmatprep.subr.mxu0 0.0
    %874 = vmatpush1.msra.mxu0 %v839
    %875 = vmatprep.subr.mxu0 0.0
    %876 = vmatpush1.msra.mxu0 %v838
    %877 = vmatprep.subr.mxu0 0.0
    %878 = vmatpush1.msra.mxu0 %v837
    %879 = vmatprep.subr.mxu0 0.0
    %880 = vmatpush1.msra.mxu0 %v836
    %881 = vmatprep.subr.mxu0 0.0
    %882 = vmatpush1.msra.mxu0 %v835
    %883 = vmatprep.subr.mxu0 0.0
    %884 = vmatpush2.msra.mxu0 0.0
    %885 = vmatprep.subr.mxu0 0.0
    %886 = vmatpush2.msra.mxu0 0.0
    %887 = vmatprep.subr.mxu0 0.0
    %888 = vmatpush2.msra.mxu0 0.0
    %889 = vmatprep.subr.mxu0 0.0
    %890 = vmatpush2.msra.mxu0 0.0
    %891 = vmatprep.subr.mxu0 0.0
    %892 = vmatpush2.msra.mxu0 0.0
    %893 = vmatprep.subr.mxu0 0.0
    %894 = vmatpush2.msra.mxu0 0.0
    %895 = vmatprep.subr.mxu0 0.0
    %896 = vmatpush2.msra.mxu0 0.0
    %897 = vmatprep.subr.mxu0 0.0
    %898 = vmatpush2.msra.mxu0 0.0
    %899 = vmatprep.subr.mxu0 0.0
    %900 = vmatpush2.msra.mxu0 0.0
    %901 = vmatprep.subr.mxu0 0.0
    %902 = vmatpush2.msra.mxu0 0.0
    %903 = vmatprep.subr.mxu0 0.0
    %904 = vmatpush2.msra.mxu0 0.0
    %905 = vmatprep.subr.mxu0 0.0
    %906 = vmatpush2.msra.mxu0 0.0
    %907 = vmatprep.subr.mxu0 0.0
    %908 = vmatpush2.msra.mxu0 0.0
    %909 = vmatprep.subr.mxu0 0.0
    %910 = vmatpush2.msra.mxu0 0.0
    %911 = vmatprep.subr.mxu0 0.0
    %912 = vmatpush2.msra.mxu0 0.0
    %913 = vmatprep.subr.mxu0 0.0
    %914 = vmatpush2.msra.mxu0 0.0
    %915 = vmatprep.mubr.f32.mxu0 0.0
    %916 = vmatmul.mubr.f32.gmra.mxu0 %v830
    %v917 = vpop.f32.mrf.mxu0
    %v918 = vadd.f32 0.0, %v917
    %v919 = vpop.f32.mrf.mxu0
    %920 = vmatprep.mubr.f32.mxu0 0.0
    %921 = vmatmul.mubr.f32.gmra.mxu0 %v831
    %v922 = vpop.f32.mrf.mxu0
    %v923 = vadd.f32 0.0, %v922
    %v924 = vpop.f32.mrf.mxu0
    %925 = vmatprep.mubr.f32.mxu0 0.0
    %926 = vmatmul.mubr.f32.gmra.mxu0 %v832
    %v927 = vpop.f32.mrf.mxu0
    %v928 = vadd.f32 0.0, %v927
    %v929 = vpop.f32.mrf.mxu0
    %930 = vmatprep.mubr.f32.mxu0 0.0
    %931 = vmatmul.mubr.f32.gmra.mxu0 %v833
    %v932 = vpop.f32.mrf.mxu0
    %v933 = vadd.f32 0.0, %v932
    %v934 = vpop.f32.mrf.mxu0
    %935 = vdwg.mxu0
    %940 = vrot.lane.b32.xlu0 %v918, 64
    %v941 = vpop.permute.xlu0 %940
    %942 = vrot.lane.b32.xlu0 %v923, 64
    %v943 = vpop.permute.xlu0 %942
    %944 = vrot.lane.b32.xlu0 %v928, 64
    %v945 = vpop.permute.xlu0 %944
    %946 = vrot.lane.b32.xlu0 %v933, 64
    %v947 = vpop.permute.xlu0 %946
    %v952 = vmax.f32 %v918, %v941
    %v953 = vmax.f32 %v923, %v943
    %v954 = vmax.f32 %v928, %v945
    %v955 = vmax.f32 %v933, %v947
    %v956 = vcombine.high %v952, 0.0
    %v958 = vunpack.c.l.s4 1983009808
    %v959 = vunpack.c.0.s8 %v958
    %v960 = vlaneseq
    %v961 = vshrl.u32 %v960, 7
    %v962 = vsub.s32 %v959, %v961
    %v963 = vrot.slane %v952, %v962
    %v965 = vunpack.c.l.s4 1983009808
    %v966 = vunpack.c.0.s8 %v965
    %v967 = vlaneseq
    %v968 = vshrl.u32 %v967, 7
    %v969 = vsub.s32 %v966, %v968
    %v970 = vrot.slane %v956, %v969
    %v971 = vcombine.high %v954, 0.0
    %v973 = vunpack.c.l.s4 1983009808
    %v974 = vunpack.c.0.s8 %v973
    %v975 = vlaneseq
    %v976 = vshrl.u32 %v975, 7
    %v977 = vsub.s32 %v974, %v976
    %v978 = vrot.slane %v954, %v977
    %v980 = vunpack.c.l.s4 1983009808
    %v981 = vunpack.c.0.s8 %v980
    %v982 = vlaneseq
    %v983 = vshrl.u32 %v982, 7
    %v984 = vsub.s32 %v981, %v983
    %v985 = vrot.slane %v971, %v984
    %v986 = vcombine.low %v963, %v978
    %v987 = vcombine.high %v963, %v978
    %v989 = vunpack.c.l.s4 1934713408
    %v990 = vunpack.c.0.s8 %v989
    %v991 = vlaneseq
    %v992 = vshrl.u32 %v991, 7
    %v993 = vsub.s32 %v990, %v992
    %v994 = vrot.slane %v986, %v993
    %v996 = vunpack.c.l.s4 1934713408
    %v997 = vunpack.c.0.s8 %v996
    %v998 = vlaneseq
    %v999 = vshrl.u32 %v998, 7
    %v1000 = vsub.s32 %v997, %v999
    %v1001 = vrot.slane %v987, %v1000
    %v1002 = vcombine.low %v970, %v985
    %v1003 = vcombine.high %v970, %v985
    %v1005 = vunpack.c.l.s4 1934713408
    %v1006 = vunpack.c.0.s8 %v1005
    %v1007 = vlaneseq
    %v1008 = vshrl.u32 %v1007, 7
    %v1009 = vsub.s32 %v1006, %v1008
    %v1010 = vrot.slane %v1002, %v1009
    %v1012 = vunpack.c.l.s4 1934713408
    %v1013 = vunpack.c.0.s8 %v1012
    %v1014 = vlaneseq
    %v1015 = vshrl.u32 %v1014, 7
    %v1016 = vsub.s32 %v1013, %v1015
    %v1017 = vrot.slane %v1003, %v1016
    %v1018 = vcombine.high %v994, 0.0
    %v1019 = vcombine.high %v1001, 0.0
    %v1020 = vcombine.high %v1010, 0.0
    %v1021 = vcombine.high %v1017, 0.0
    %v1022 = vcombine.high %v953, 0.0
    %v1024 = vunpack.c.l.s4 1983009808
    %v1025 = vunpack.c.0.s8 %v1024
    %v1026 = vlaneseq
    %v1027 = vshrl.u32 %v1026, 7
    %v1028 = vsub.s32 %v1025, %v1027
    %v1029 = vrot.slane %v953, %v1028
    %v1031 = vunpack.c.l.s4 1983009808
    %v1032 = vunpack.c.0.s8 %v1031
    %v1033 = vlaneseq
    %v1034 = vshrl.u32 %v1033, 7
    %v1035 = vsub.s32 %v1032, %v1034
    %v1036 = vrot.slane %v1022, %v1035
    %v1037 = vcombine.high %v955, 0.0
    %v1039 = vunpack.c.l.s4 1983009808
    %v1040 = vunpack.c.0.s8 %v1039
    %v1041 = vlaneseq
    %v1042 = vshrl.u32 %v1041, 7
    %v1043 = vsub.s32 %v1040, %v1042
    %v1044 = vrot.slane %v955, %v1043
    %v1046 = vunpack.c.l.s4 1983009808
    %v1047 = vunpack.c.0.s8 %v1046
    %v1048 = vlaneseq
    %v1049 = vshrl.u32 %v1048, 7
    %v1050 = vsub.s32 %v1047, %v1049
    %v1051 = vrot.slane %v1037, %v1050
    %v1052 = vcombine.low %v1029, %v1044
    %v1053 = vcombine.high %v1029, %v1044
    %v1055 = vunpack.c.l.s4 1934713408
    %v1056 = vunpack.c.0.s8 %v1055
    %v1057 = vlaneseq
    %v1058 = vshrl.u32 %v1057, 7
    %v1059 = vsub.s32 %v1056, %v1058
    %v1060 = vrot.slane %v1052, %v1059
    %v1062 = vunpack.c.l.s4 1934713408
    %v1063 = vunpack.c.0.s8 %v1062
    %v1064 = vlaneseq
    %v1065 = vshrl.u32 %v1064, 7
    %v1066 = vsub.s32 %v1063, %v1065
    %v1067 = vrot.slane %v1053, %v1066
    %v1068 = vcombine.low %v1036, %v1051
    %v1069 = vcombine.high %v1036, %v1051
    %v1071 = vunpack.c.l.s4 1934713408
    %v1072 = vunpack.c.0.s8 %v1071
    %v1073 = vlaneseq
    %v1074 = vshrl.u32 %v1073, 7
    %v1075 = vsub.s32 %v1072, %v1074
    %v1076 = vrot.slane %v1068, %v1075
    %v1078 = vunpack.c.l.s4 1934713408
    %v1079 = vunpack.c.0.s8 %v1078
    %v1080 = vlaneseq
    %v1081 = vshrl.u32 %v1080, 7
    %v1082 = vsub.s32 %v1079, %v1081
    %v1083 = vrot.slane %v1069, %v1082
    %v1084 = vcombine.high %v1060, 0.0
    %v1085 = vcombine.high %v1067, 0.0
    %v1086 = vcombine.high %v1076, 0.0
    %v1087 = vcombine.high %v1083, 0.0
    %1089 = vrot.lane.b32.xlu0 %v1018, 64
    %v1090 = vpop.permute.xlu0 %1089
    %1093 = vrot.lane.b32.xlu0 %v1019, 64
    %v1094 = vpop.permute.xlu0 %1093
    %1097 = vrot.lane.b32.xlu0 %v1020, 64
    %v1098 = vpop.permute.xlu0 %1097
    %1101 = vrot.lane.b32.xlu0 %v1021, 64
    %v1102 = vpop.permute.xlu0 %1101
    %1105 = vrot.lane.b32.xlu0 %v1084, 64
    %v1106 = vpop.permute.xlu0 %1105
    %1109 = vrot.lane.b32.xlu0 %v1085, 64
    %v1110 = vpop.permute.xlu0 %1109
    %1113 = vrot.lane.b32.xlu0 %v1086, 64
    %v1114 = vpop.permute.xlu0 %1113
    %1117 = vrot.lane.b32.xlu0 %v1087, 64
    %v1118 = vpop.permute.xlu0 %1117
    %v1120 = vsel %vm406, %v994, %v1090
    %v1121 = vsel %vm406, %v1001, %v1094
    %v1122 = vsel %vm406, %v1010, %v1098
    %v1123 = vsel %vm406, %v1017, %v1102
    %v1124 = vsel %vm406, %v1060, %v1106
    %v1125 = vsel %vm406, %v1067, %v1110
    %v1126 = vsel %vm406, %v1076, %v1114
    %v1127 = vsel %vm406, %v1083, %v1118
    %s1128 = scalar_lea.vmem [#allocation5], 1024
    %v1129 = vld [vmem:[%s1128] sm:$0xff]
    %v1130 = vld [vmem:[%s1128 + $0x8] sm:$0xff]
    %v1131 = vld [vmem:[%s1128 + $0x10] sm:$0xff]
    %v1132 = vld [vmem:[%s1128 + $0x18] sm:$0xff]
    %v1133 = vld [vmem:[%s1128 + $0x20] sm:$0xff]
    %v1134 = vld [vmem:[%s1128 + $0x28] sm:$0xff]
    %v1135 = vld [vmem:[%s1128 + $0x30] sm:$0xff]
    %v1136 = vld [vmem:[%s1128 + $0x38] sm:$0xff]
    %v1137 = vld [vmem:[%s1128 + $0x40] sm:$0xff]
    %v1138 = vld [vmem:[%s1128 + $0x48] sm:$0xff]
    %v1139 = vld [vmem:[%s1128 + $0x50] sm:$0xff]
    %v1140 = vld [vmem:[%s1128 + $0x58] sm:$0xff]
    %v1141 = vld [vmem:[%s1128 + $0x60] sm:$0xff]
    %v1142 = vld [vmem:[%s1128 + $0x68] sm:$0xff]
    %v1143 = vld [vmem:[%s1128 + $0x70] sm:$0xff]
    %v1144 = vld [vmem:[%s1128 + $0x78] sm:$0xff]
    %v1145 = vld [vmem:[%s1128 + $0x80] sm:$0xff]
    %v1146 = vld [vmem:[%s1128 + $0x88] sm:$0xff]
    %v1147 = vld [vmem:[%s1128 + $0x90] sm:$0xff]
    %v1148 = vld [vmem:[%s1128 + $0x98] sm:$0xff]
    %v1149 = vld [vmem:[%s1128 + $0xa0] sm:$0xff]
    %v1150 = vld [vmem:[%s1128 + $0xa8] sm:$0xff]
    %v1151 = vld [vmem:[%s1128 + $0xb0] sm:$0xff]
    %v1152 = vld [vmem:[%s1128 + $0xb8] sm:$0xff]
    %v1153 = vld [vmem:[%s1128 + $0xc0] sm:$0xff]
    %v1154 = vld [vmem:[%s1128 + $0xc8] sm:$0xff]
    %v1155 = vld [vmem:[%s1128 + $0xd0] sm:$0xff]
    %v1156 = vld [vmem:[%s1128 + $0xd8] sm:$0xff]
    %v1157 = vld [vmem:[%s1128 + $0xe0] sm:$0xff]
    %v1158 = vld [vmem:[%s1128 + $0xe8] sm:$0xff]
    %v1159 = vld [vmem:[%s1128 + $0xf0] sm:$0xff]
    %v1160 = vld [vmem:[%s1128 + $0xf8] sm:$0xff]
    %v1161 = vld [vmem:[%s1128 + $0x100] sm:$0xff]
    %v1162 = vld [vmem:[%s1128 + $0x108] sm:$0xff]
    %v1163 = vld [vmem:[%s1128 + $0x110] sm:$0xff]
    %v1164 = vld [vmem:[%s1128 + $0x118] sm:$0xff]
    %v1165 = vld [vmem:[%s1128 + $0x120] sm:$0xff]
    %v1166 = vld [vmem:[%s1128 + $0x128] sm:$0xff]
    %v1167 = vld [vmem:[%s1128 + $0x130] sm:$0xff]
    %v1168 = vld [vmem:[%s1128 + $0x138] sm:$0xff]
    %v1169 = vld [vmem:[%s1128 + $0x140] sm:$0xff]
    %v1170 = vld [vmem:[%s1128 + $0x148] sm:$0xff]
    %v1171 = vld [vmem:[%s1128 + $0x150] sm:$0xff]
    %v1172 = vld [vmem:[%s1128 + $0x158] sm:$0xff]
    %v1173 = vld [vmem:[%s1128 + $0x160] sm:$0xff]
    %v1174 = vld [vmem:[%s1128 + $0x168] sm:$0xff]
    %v1175 = vld [vmem:[%s1128 + $0x170] sm:$0xff]
    %v1176 = vld [vmem:[%s1128 + $0x178] sm:$0xff]
    %v1177 = vld [vmem:[%s1128 + $0x180] sm:$0xff]
    %v1178 = vld [vmem:[%s1128 + $0x188] sm:$0xff]
    %v1179 = vld [vmem:[%s1128 + $0x190] sm:$0xff]
    %v1180 = vld [vmem:[%s1128 + $0x198] sm:$0xff]
    %v1181 = vld [vmem:[%s1128 + $0x1a0] sm:$0xff]
    %v1182 = vld [vmem:[%s1128 + $0x1a8] sm:$0xff]
    %v1183 = vld [vmem:[%s1128 + $0x1b0] sm:$0xff]
    %v1184 = vld [vmem:[%s1128 + $0x1b8] sm:$0xff]
    %v1185 = vld [vmem:[%s1128 + $0x1c0] sm:$0xff]
    %v1186 = vld [vmem:[%s1128 + $0x1c8] sm:$0xff]
    %v1187 = vld [vmem:[%s1128 + $0x1d0] sm:$0xff]
    %v1188 = vld [vmem:[%s1128 + $0x1d8] sm:$0xff]
    %v1189 = vld [vmem:[%s1128 + $0x1e0] sm:$0xff]
    %v1190 = vld [vmem:[%s1128 + $0x1e8] sm:$0xff]
    %v1191 = vld [vmem:[%s1128 + $0x1f0] sm:$0xff]
    %v1192 = vld [vmem:[%s1128 + $0x1f8] sm:$0xff]
    %v1193 = vld [vmem:[%s1128 + $0x200] sm:$0xff]
    %v1194 = vld [vmem:[%s1128 + $0x208] sm:$0xff]
    %v1195 = vld [vmem:[%s1128 + $0x210] sm:$0xff]
    %v1196 = vld [vmem:[%s1128 + $0x218] sm:$0xff]
    %v1197 = vld [vmem:[%s1128 + $0x220] sm:$0xff]
    %v1198 = vld [vmem:[%s1128 + $0x228] sm:$0xff]
    %v1199 = vld [vmem:[%s1128 + $0x230] sm:$0xff]
    %v1200 = vld [vmem:[%s1128 + $0x238] sm:$0xff]
    %v1201 = vld [vmem:[%s1128 + $0x240] sm:$0xff]
    %v1202 = vld [vmem:[%s1128 + $0x248] sm:$0xff]
    %v1203 = vld [vmem:[%s1128 + $0x250] sm:$0xff]
    %v1204 = vld [vmem:[%s1128 + $0x258] sm:$0xff]
    %v1205 = vld [vmem:[%s1128 + $0x260] sm:$0xff]
    %v1206 = vld [vmem:[%s1128 + $0x268] sm:$0xff]
    %v1207 = vld [vmem:[%s1128 + $0x270] sm:$0xff]
    %v1208 = vld [vmem:[%s1128 + $0x278] sm:$0xff]
    %v1209 = vld [vmem:[%s1128 + $0x280] sm:$0xff]
    %v1210 = vld [vmem:[%s1128 + $0x288] sm:$0xff]
    %v1211 = vld [vmem:[%s1128 + $0x290] sm:$0xff]
    %v1212 = vld [vmem:[%s1128 + $0x298] sm:$0xff]
    %v1213 = vld [vmem:[%s1128 + $0x2a0] sm:$0xff]
    %v1214 = vld [vmem:[%s1128 + $0x2a8] sm:$0xff]
    %v1215 = vld [vmem:[%s1128 + $0x2b0] sm:$0xff]
    %v1216 = vld [vmem:[%s1128 + $0x2b8] sm:$0xff]
    %v1217 = vld [vmem:[%s1128 + $0x2c0] sm:$0xff]
    %v1218 = vld [vmem:[%s1128 + $0x2c8] sm:$0xff]
    %v1219 = vld [vmem:[%s1128 + $0x2d0] sm:$0xff]
    %v1220 = vld [vmem:[%s1128 + $0x2d8] sm:$0xff]
    %v1221 = vld [vmem:[%s1128 + $0x2e0] sm:$0xff]
    %v1222 = vld [vmem:[%s1128 + $0x2e8] sm:$0xff]
    %v1223 = vld [vmem:[%s1128 + $0x2f0] sm:$0xff]
    %v1224 = vld [vmem:[%s1128 + $0x2f8] sm:$0xff]
    %v1225 = vld [vmem:[%s1128 + $0x300] sm:$0xff]
    %v1226 = vld [vmem:[%s1128 + $0x308] sm:$0xff]
    %v1227 = vld [vmem:[%s1128 + $0x310] sm:$0xff]
    %v1228 = vld [vmem:[%s1128 + $0x318] sm:$0xff]
    %v1229 = vld [vmem:[%s1128 + $0x320] sm:$0xff]
    %v1230 = vld [vmem:[%s1128 + $0x328] sm:$0xff]
    %v1231 = vld [vmem:[%s1128 + $0x330] sm:$0xff]
    %v1232 = vld [vmem:[%s1128 + $0x338] sm:$0xff]
    %v1233 = vld [vmem:[%s1128 + $0x340] sm:$0xff]
    %v1234 = vld [vmem:[%s1128 + $0x348] sm:$0xff]
    %v1235 = vld [vmem:[%s1128 + $0x350] sm:$0xff]
    %v1236 = vld [vmem:[%s1128 + $0x358] sm:$0xff]
    %v1237 = vld [vmem:[%s1128 + $0x360] sm:$0xff]
    %v1238 = vld [vmem:[%s1128 + $0x368] sm:$0xff]
    %v1239 = vld [vmem:[%s1128 + $0x370] sm:$0xff]
    %v1240 = vld [vmem:[%s1128 + $0x378] sm:$0xff]
    %v1241 = vld [vmem:[%s1128 + $0x380] sm:$0xff]
    %v1242 = vld [vmem:[%s1128 + $0x388] sm:$0xff]
    %v1243 = vld [vmem:[%s1128 + $0x390] sm:$0xff]
    %v1244 = vld [vmem:[%s1128 + $0x398] sm:$0xff]
    %v1245 = vld [vmem:[%s1128 + $0x3a0] sm:$0xff]
    %v1246 = vld [vmem:[%s1128 + $0x3a8] sm:$0xff]
    %v1247 = vld [vmem:[%s1128 + $0x3b0] sm:$0xff]
    %v1248 = vld [vmem:[%s1128 + $0x3b8] sm:$0xff]
    %v1249 = vld [vmem:[%s1128 + $0x3c0] sm:$0xff]
    %v1250 = vld [vmem:[%s1128 + $0x3c8] sm:$0xff]
    %v1251 = vld [vmem:[%s1128 + $0x3d0] sm:$0xff]
    %v1252 = vld [vmem:[%s1128 + $0x3d8] sm:$0xff]
    %v1253 = vld [vmem:[%s1128 + $0x3e0] sm:$0xff]
    %v1254 = vld [vmem:[%s1128 + $0x3e8] sm:$0xff]
    %v1255 = vld [vmem:[%s1128 + $0x3f0] sm:$0xff]
    %v1256 = vld [vmem:[%s1128 + $0x3f8] sm:$0xff]
    %s1257 = scalar_lea.vmem [#allocation7], 1
    %v1258 = vld [vmem:[%s1257] sm:$0x1]
    %v1260 = vlaneseq
    %v1261 = vshrl.u32 %v1260, 7
    %v1262 = vsub.s32 0, %v1261
    %v1263 = vrot.slane %v1258, %v1262
    %1265 = vmatprep.subr.mxu0 0.0
    %1266 = vmatpush1.msra.mxu0 %v1144
    %1267 = vmatprep.subr.mxu0 0.0
    %1268 = vmatpush1.msra.mxu0 %v1143
    %1269 = vmatprep.subr.mxu0 0.0
    %1270 = vmatpush1.msra.mxu0 %v1142
    %1271 = vmatprep.subr.mxu0 0.0
    %1272 = vmatpush1.msra.mxu0 %v1141
    %1273 = vmatprep.subr.mxu0 0.0
    %1274 = vmatpush1.msra.mxu0 %v1140
    %1275 = vmatprep.subr.mxu0 0.0
    %1276 = vmatpush1.msra.mxu0 %v1139
    %1277 = vmatprep.subr.mxu0 0.0
    %1278 = vmatpush1.msra.mxu0 %v1138
    %1279 = vmatprep.subr.mxu0 0.0
    %1280 = vmatpush1.msra.mxu0 %v1137
    %1281 = vmatprep.subr.mxu0 0.0
    %1282 = vmatpush1.msra.mxu0 %v1136
    %1283 = vmatprep.subr.mxu0 0.0
    %1284 = vmatpush1.msra.mxu0 %v1135
    %1285 = vmatprep.subr.mxu0 0.0
    %1286 = vmatpush1.msra.mxu0 %v1134
    %1287 = vmatprep.subr.mxu0 0.0
    %1288 = vmatpush1.msra.mxu0 %v1133
    %1289 = vmatprep.subr.mxu0 0.0
    %1290 = vmatpush1.msra.mxu0 %v1132
    %1291 = vmatprep.subr.mxu0 0.0
    %1292 = vmatpush1.msra.mxu0 %v1131
    %1293 = vmatprep.subr.mxu0 0.0
    %1294 = vmatpush1.msra.mxu0 %v1130
    %1295 = vmatprep.subr.mxu0 0.0
    %1296 = vmatpush1.msra.mxu0 %v1129
    %1297 = vmatprep.subr.mxu0 0.0
    %1298 = vmatpush2.msra.mxu0 %v1160
    %1299 = vmatprep.subr.mxu0 0.0
    %1300 = vmatpush2.msra.mxu0 %v1159
    %1301 = vmatprep.subr.mxu0 0.0
    %1302 = vmatpush2.msra.mxu0 %v1158
    %1303 = vmatprep.subr.mxu0 0.0
    %1304 = vmatpush2.msra.mxu0 %v1157
    %1305 = vmatprep.subr.mxu0 0.0
    %1306 = vmatpush2.msra.mxu0 %v1156
    %1307 = vmatprep.subr.mxu0 0.0
    %1308 = vmatpush2.msra.mxu0 %v1155
    %1309 = vmatprep.subr.mxu0 0.0
    %1310 = vmatpush2.msra.mxu0 %v1154
    %1311 = vmatprep.subr.mxu0 0.0
    %1312 = vmatpush2.msra.mxu0 %v1153
    %1313 = vmatprep.subr.mxu0 0.0
    %1314 = vmatpush2.msra.mxu0 %v1152
    %1315 = vmatprep.subr.mxu0 0.0
    %1316 = vmatpush2.msra.mxu0 %v1151
    %1317 = vmatprep.subr.mxu0 0.0
    %1318 = vmatpush2.msra.mxu0 %v1150
    %1319 = vmatprep.subr.mxu0 0.0
    %1320 = vmatpush2.msra.mxu0 %v1149
    %1321 = vmatprep.subr.mxu0 0.0
    %1322 = vmatpush2.msra.mxu0 %v1148
    %1323 = vmatprep.subr.mxu0 0.0
    %1324 = vmatpush2.msra.mxu0 %v1147
    %1325 = vmatprep.subr.mxu0 0.0
    %1326 = vmatpush2.msra.mxu0 %v1146
    %1327 = vmatprep.subr.mxu0 0.0
    %1328 = vmatpush2.msra.mxu0 %v1145
    %1329 = vmatprep.mubr.f32.mxu0 %v1121
    %1330 = vmatmul.mubr.f32.gmra.mxu0 %v1120
    %v1331 = vpop.f32.mrf.mxu0
    %v1332 = vadd.f32 %v1263, %v1331
    %v1333 = vpop.f32.mrf.mxu0
    %1334 = vdwg.mxu0
    %1335 = vmatprep.subr.mxu0 0.0
    %1336 = vmatpush1.msra.mxu0 %v1176
    %1337 = vmatprep.subr.mxu0 0.0
    %1338 = vmatpush1.msra.mxu0 %v1175
    %1339 = vmatprep.subr.mxu0 0.0
    %1340 = vmatpush1.msra.mxu0 %v1174
    %1341 = vmatprep.subr.mxu0 0.0
    %1342 = vmatpush1.msra.mxu0 %v1173
    %1343 = vmatprep.subr.mxu0 0.0
    %1344 = vmatpush1.msra.mxu0 %v1172
    %1345 = vmatprep.subr.mxu0 0.0
    %1346 = vmatpush1.msra.mxu0 %v1171
    %1347 = vmatprep.subr.mxu0 0.0
    %1348 = vmatpush1.msra.mxu0 %v1170
    %1349 = vmatprep.subr.mxu0 0.0
    %1350 = vmatpush1.msra.mxu0 %v1169
    %1351 = vmatprep.subr.mxu0 0.0
    %1352 = vmatpush1.msra.mxu0 %v1168
    %1353 = vmatprep.subr.mxu0 0.0
    %1354 = vmatpush1.msra.mxu0 %v1167
    %1355 = vmatprep.subr.mxu0 0.0
    %1356 = vmatpush1.msra.mxu0 %v1166
    %1357 = vmatprep.subr.mxu0 0.0
    %1358 = vmatpush1.msra.mxu0 %v1165
    %1359 = vmatprep.subr.mxu0 0.0
    %1360 = vmatpush1.msra.mxu0 %v1164
    %1361 = vmatprep.subr.mxu0 0.0
    %1362 = vmatpush1.msra.mxu0 %v1163
    %1363 = vmatprep.subr.mxu0 0.0
    %1364 = vmatpush1.msra.mxu0 %v1162
    %1365 = vmatprep.subr.mxu0 0.0
    %1366 = vmatpush1.msra.mxu0 %v1161
    %1367 = vmatprep.subr.mxu0 0.0
    %1368 = vmatpush2.msra.mxu0 %v1192
    %1369 = vmatprep.subr.mxu0 0.0
    %1370 = vmatpush2.msra.mxu0 %v1191
    %1371 = vmatprep.subr.mxu0 0.0
    %1372 = vmatpush2.msra.mxu0 %v1190
    %1373 = vmatprep.subr.mxu0 0.0
    %1374 = vmatpush2.msra.mxu0 %v1189
    %1375 = vmatprep.subr.mxu0 0.0
    %1376 = vmatpush2.msra.mxu0 %v1188
    %1377 = vmatprep.subr.mxu0 0.0
    %1378 = vmatpush2.msra.mxu0 %v1187
    %1379 = vmatprep.subr.mxu0 0.0
    %1380 = vmatpush2.msra.mxu0 %v1186
    %1381 = vmatprep.subr.mxu0 0.0
    %1382 = vmatpush2.msra.mxu0 %v1185
    %1383 = vmatprep.subr.mxu0 0.0
    %1384 = vmatpush2.msra.mxu0 %v1184
    %1385 = vmatprep.subr.mxu0 0.0
    %1386 = vmatpush2.msra.mxu0 %v1183
    %1387 = vmatprep.subr.mxu0 0.0
    %1388 = vmatpush2.msra.mxu0 %v1182
    %1389 = vmatprep.subr.mxu0 0.0
    %1390 = vmatpush2.msra.mxu0 %v1181
    %1391 = vmatprep.subr.mxu0 0.0
    %1392 = vmatpush2.msra.mxu0 %v1180
    %1393 = vmatprep.subr.mxu0 0.0
    %1394 = vmatpush2.msra.mxu0 %v1179
    %1395 = vmatprep.subr.mxu0 0.0
    %1396 = vmatpush2.msra.mxu0 %v1178
    %1397 = vmatprep.subr.mxu0 0.0
    %1398 = vmatpush2.msra.mxu0 %v1177
    %1399 = vmatprep.mubr.f32.mxu0 %v1123
    %1400 = vmatmul.mubr.f32.gmra.mxu0 %v1122
    %v1401 = vpop.f32.mrf.mxu0
    %v1402 = vadd.f32 %v1332, %v1401
    %v1403 = vpop.f32.mrf.mxu0
    %1404 = vdwg.mxu0
    %1405 = vmatprep.subr.mxu0 0.0
    %1406 = vmatpush1.msra.mxu0 %v1208
    %1407 = vmatprep.subr.mxu0 0.0
    %1408 = vmatpush1.msra.mxu0 %v1207
    %1409 = vmatprep.subr.mxu0 0.0
    %1410 = vmatpush1.msra.mxu0 %v1206
    %1411 = vmatprep.subr.mxu0 0.0
    %1412 = vmatpush1.msra.mxu0 %v1205
    %1413 = vmatprep.subr.mxu0 0.0
    %1414 = vmatpush1.msra.mxu0 %v1204
    %1415 = vmatprep.subr.mxu0 0.0
    %1416 = vmatpush1.msra.mxu0 %v1203
    %1417 = vmatprep.subr.mxu0 0.0
    %1418 = vmatpush1.msra.mxu0 %v1202
    %1419 = vmatprep.subr.mxu0 0.0
    %1420 = vmatpush1.msra.mxu0 %v1201
    %1421 = vmatprep.subr.mxu0 0.0
    %1422 = vmatpush1.msra.mxu0 %v1200
    %1423 = vmatprep.subr.mxu0 0.0
    %1424 = vmatpush1.msra.mxu0 %v1199
    %1425 = vmatprep.subr.mxu0 0.0
    %1426 = vmatpush1.msra.mxu0 %v1198
    %1427 = vmatprep.subr.mxu0 0.0
    %1428 = vmatpush1.msra.mxu0 %v1197
    %1429 = vmatprep.subr.mxu0 0.0
    %1430 = vmatpush1.msra.mxu0 %v1196
    %1431 = vmatprep.subr.mxu0 0.0
    %1432 = vmatpush1.msra.mxu0 %v1195
    %1433 = vmatprep.subr.mxu0 0.0
    %1434 = vmatpush1.msra.mxu0 %v1194
    %1435 = vmatprep.subr.mxu0 0.0
    %1436 = vmatpush1.msra.mxu0 %v1193
    %1437 = vmatprep.subr.mxu0 0.0
    %1438 = vmatpush2.msra.mxu0 %v1224
    %1439 = vmatprep.subr.mxu0 0.0
    %1440 = vmatpush2.msra.mxu0 %v1223
    %1441 = vmatprep.subr.mxu0 0.0
    %1442 = vmatpush2.msra.mxu0 %v1222
    %1443 = vmatprep.subr.mxu0 0.0
    %1444 = vmatpush2.msra.mxu0 %v1221
    %1445 = vmatprep.subr.mxu0 0.0
    %1446 = vmatpush2.msra.mxu0 %v1220
    %1447 = vmatprep.subr.mxu0 0.0
    %1448 = vmatpush2.msra.mxu0 %v1219
    %1449 = vmatprep.subr.mxu0 0.0
    %1450 = vmatpush2.msra.mxu0 %v1218
    %1451 = vmatprep.subr.mxu0 0.0
    %1452 = vmatpush2.msra.mxu0 %v1217
    %1453 = vmatprep.subr.mxu0 0.0
    %1454 = vmatpush2.msra.mxu0 %v1216
    %1455 = vmatprep.subr.mxu0 0.0
    %1456 = vmatpush2.msra.mxu0 %v1215
    %1457 = vmatprep.subr.mxu0 0.0
    %1458 = vmatpush2.msra.mxu0 %v1214
    %1459 = vmatprep.subr.mxu0 0.0
    %1460 = vmatpush2.msra.mxu0 %v1213
    %1461 = vmatprep.subr.mxu0 0.0
    %1462 = vmatpush2.msra.mxu0 %v1212
    %1463 = vmatprep.subr.mxu0 0.0
    %1464 = vmatpush2.msra.mxu0 %v1211
    %1465 = vmatprep.subr.mxu0 0.0
    %1466 = vmatpush2.msra.mxu0 %v1210
    %1467 = vmatprep.subr.mxu0 0.0
    %1468 = vmatpush2.msra.mxu0 %v1209
    %1469 = vmatprep.mubr.f32.mxu0 %v1125
    %1470 = vmatmul.mubr.f32.gmra.mxu0 %v1124
    %v1471 = vpop.f32.mrf.mxu0
    %v1472 = vadd.f32 %v1402, %v1471
    %v1473 = vpop.f32.mrf.mxu0
    %1474 = vdwg.mxu0
    %1475 = vmatprep.subr.mxu0 0.0
    %1476 = vmatpush1.msra.mxu0 %v1240
    %1477 = vmatprep.subr.mxu0 0.0
    %1478 = vmatpush1.msra.mxu0 %v1239
    %1479 = vmatprep.subr.mxu0 0.0
    %1480 = vmatpush1.msra.mxu0 %v1238
    %1481 = vmatprep.subr.mxu0 0.0
    %1482 = vmatpush1.msra.mxu0 %v1237
    %1483 = vmatprep.subr.mxu0 0.0
    %1484 = vmatpush1.msra.mxu0 %v1236
    %1485 = vmatprep.subr.mxu0 0.0
    %1486 = vmatpush1.msra.mxu0 %v1235
    %1487 = vmatprep.subr.mxu0 0.0
    %1488 = vmatpush1.msra.mxu0 %v1234
    %1489 = vmatprep.subr.mxu0 0.0
    %1490 = vmatpush1.msra.mxu0 %v1233
    %1491 = vmatprep.subr.mxu0 0.0
    %1492 = vmatpush1.msra.mxu0 %v1232
    %1493 = vmatprep.subr.mxu0 0.0
    %1494 = vmatpush1.msra.mxu0 %v1231
    %1495 = vmatprep.subr.mxu0 0.0
    %1496 = vmatpush1.msra.mxu0 %v1230
    %1497 = vmatprep.subr.mxu0 0.0
    %1498 = vmatpush1.msra.mxu0 %v1229
    %1499 = vmatprep.subr.mxu0 0.0
    %1500 = vmatpush1.msra.mxu0 %v1228
    %1501 = vmatprep.subr.mxu0 0.0
    %1502 = vmatpush1.msra.mxu0 %v1227
    %1503 = vmatprep.subr.mxu0 0.0
    %1504 = vmatpush1.msra.mxu0 %v1226
    %1505 = vmatprep.subr.mxu0 0.0
    %1506 = vmatpush1.msra.mxu0 %v1225
    %1507 = vmatprep.subr.mxu0 0.0
    %1508 = vmatpush2.msra.mxu0 %v1256
    %1509 = vmatprep.subr.mxu0 0.0
    %1510 = vmatpush2.msra.mxu0 %v1255
    %1511 = vmatprep.subr.mxu0 0.0
    %1512 = vmatpush2.msra.mxu0 %v1254
    %1513 = vmatprep.subr.mxu0 0.0
    %1514 = vmatpush2.msra.mxu0 %v1253
    %1515 = vmatprep.subr.mxu0 0.0
    %1516 = vmatpush2.msra.mxu0 %v1252
    %1517 = vmatprep.subr.mxu0 0.0
    %1518 = vmatpush2.msra.mxu0 %v1251
    %1519 = vmatprep.subr.mxu0 0.0
    %1520 = vmatpush2.msra.mxu0 %v1250
    %1521 = vmatprep.subr.mxu0 0.0
    %1522 = vmatpush2.msra.mxu0 %v1249
    %1523 = vmatprep.subr.mxu0 0.0
    %1524 = vmatpush2.msra.mxu0 %v1248
    %1525 = vmatprep.subr.mxu0 0.0
    %1526 = vmatpush2.msra.mxu0 %v1247
    %1527 = vmatprep.subr.mxu0 0.0
    %1528 = vmatpush2.msra.mxu0 %v1246
    %1529 = vmatprep.subr.mxu0 0.0
    %1530 = vmatpush2.msra.mxu0 %v1245
    %1531 = vmatprep.subr.mxu0 0.0
    %1532 = vmatpush2.msra.mxu0 %v1244
    %1533 = vmatprep.subr.mxu0 0.0
    %1534 = vmatpush2.msra.mxu0 %v1243
    %1535 = vmatprep.subr.mxu0 0.0
    %1536 = vmatpush2.msra.mxu0 %v1242
    %1537 = vmatprep.subr.mxu0 0.0
    %1538 = vmatpush2.msra.mxu0 %v1241
    %1539 = vmatprep.mubr.f32.mxu0 %v1127
    %1540 = vmatmul.mubr.f32.gmra.mxu0 %v1126
    %v1541 = vpop.f32.mrf.mxu0
    %v1542 = vadd.f32 %v1472, %v1541
    %v1543 = vpop.f32.mrf.mxu0
    %1544 = vdwg.mxu0
    %v1545 = vld [vmem:[%s0 + $0x20] sm:$0xff]
    %v1546 = vld [vmem:[%s0 + $0x28] sm:$0xff]
    %v1547 = vld [vmem:[%s0 + $0x60] sm:$0xff]
    %v1548 = vld [vmem:[%s0 + $0x68] sm:$0xff]
    %s1549 = scalar_lea.vmem [#allocation3], 256
    %v1550 = vld [vmem:[%s1549] sm:$0xff]
    %v1551 = vld [vmem:[%s1549 + $0x8] sm:$0xff]
    %v1552 = vld [vmem:[%s1549 + $0x10] sm:$0xff]
    %v1553 = vld [vmem:[%s1549 + $0x18] sm:$0xff]
    %v1554 = vld [vmem:[%s1549 + $0x20] sm:$0xff]
    %v1555 = vld [vmem:[%s1549 + $0x28] sm:$0xff]
    %v1556 = vld [vmem:[%s1549 + $0x30] sm:$0xff]
    %v1557 = vld [vmem:[%s1549 + $0x38] sm:$0xff]
    %v1558 = vld [vmem:[%s1549 + $0x40] sm:$0xff]
    %v1559 = vld [vmem:[%s1549 + $0x48] sm:$0xff]
    %v1560 = vld [vmem:[%s1549 + $0x50] sm:$0xff]
    %v1561 = vld [vmem:[%s1549 + $0x58] sm:$0xff]
    %v1562 = vld [vmem:[%s1549 + $0x60] sm:$0xff]
    %v1563 = vld [vmem:[%s1549 + $0x68] sm:$0xff]
    %v1564 = vld [vmem:[%s1549 + $0x70] sm:$0xff]
    %v1565 = vld [vmem:[%s1549 + $0x78] sm:$0xff]
    %1566 = vmatprep.subr.mxu0 0.0
    %1567 = vmatpush1.msra.mxu0 %v1565
    %1568 = vmatprep.subr.mxu0 0.0
    %1569 = vmatpush1.msra.mxu0 %v1564
    %1570 = vmatprep.subr.mxu0 0.0
    %1571 = vmatpush1.msra.mxu0 %v1563
    %1572 = vmatprep.subr.mxu0 0.0
    %1573 = vmatpush1.msra.mxu0 %v1562
    %1574 = vmatprep.subr.mxu0 0.0
    %1575 = vmatpush1.msra.mxu0 %v1561
    %1576 = vmatprep.subr.mxu0 0.0
    %1577 = vmatpush1.msra.mxu0 %v1560
    %1578 = vmatprep.subr.mxu0 0.0
    %1579 = vmatpush1.msra.mxu0 %v1559
    %1580 = vmatprep.subr.mxu0 0.0
    %1581 = vmatpush1.msra.mxu0 %v1558
    %1582 = vmatprep.subr.mxu0 0.0
    %1583 = vmatpush1.msra.mxu0 %v1557
    %1584 = vmatprep.subr.mxu0 0.0
    %1585 = vmatpush1.msra.mxu0 %v1556
    %1586 = vmatprep.subr.mxu0 0.0
    %1587 = vmatpush1.msra.mxu0 %v1555
    %1588 = vmatprep.subr.mxu0 0.0
    %1589 = vmatpush1.msra.mxu0 %v1554
    %1590 = vmatprep.subr.mxu0 0.0
    %1591 = vmatpush1.msra.mxu0 %v1553
    %1592 = vmatprep.subr.mxu0 0.0
    %1593 = vmatpush1.msra.mxu0 %v1552
    %1594 = vmatprep.subr.mxu0 0.0
    %1595 = vmatpush1.msra.mxu0 %v1551
    %1596 = vmatprep.subr.mxu0 0.0
    %1597 = vmatpush1.msra.mxu0 %v1550
    %1598 = vmatprep.subr.mxu0 0.0
    %1599 = vmatpush2.msra.mxu0 0.0
    %1600 = vmatprep.subr.mxu0 0.0
    %1601 = vmatpush2.msra.mxu0 0.0
    %1602 = vmatprep.subr.mxu0 0.0
    %1603 = vmatpush2.msra.mxu0 0.0
    %1604 = vmatprep.subr.mxu0 0.0
    %1605 = vmatpush2.msra.mxu0 0.0
    %1606 = vmatprep.subr.mxu0 0.0
    %1607 = vmatpush2.msra.mxu0 0.0
    %1608 = vmatprep.subr.mxu0 0.0
    %1609 = vmatpush2.msra.mxu0 0.0
    %1610 = vmatprep.subr.mxu0 0.0
    %1611 = vmatpush2.msra.mxu0 0.0
    %1612 = vmatprep.subr.mxu0 0.0
    %1613 = vmatpush2.msra.mxu0 0.0
    %1614 = vmatprep.subr.mxu0 0.0
    %1615 = vmatpush2.msra.mxu0 0.0
    %1616 = vmatprep.subr.mxu0 0.0
    %1617 = vmatpush2.msra.mxu0 0.0
    %1618 = vmatprep.subr.mxu0 0.0
    %1619 = vmatpush2.msra.mxu0 0.0
    %1620 = vmatprep.subr.mxu0 0.0
    %1621 = vmatpush2.msra.mxu0 0.0
    %1622 = vmatprep.subr.mxu0 0.0
    %1623 = vmatpush2.msra.mxu0 0.0
    %1624 = vmatprep.subr.mxu0 0.0
    %1625 = vmatpush2.msra.mxu0 0.0
    %1626 = vmatprep.subr.mxu0 0.0
    %1627 = vmatpush2.msra.mxu0 0.0
    %1628 = vmatprep.subr.mxu0 0.0
    %1629 = vmatpush2.msra.mxu0 0.0
    %1630 = vmatprep.mubr.f32.mxu0 0.0
    %1631 = vmatmul.mubr.f32.gmra.mxu0 %v1545
    %v1632 = vpop.f32.mrf.mxu0
    %v1633 = vadd.f32 0.0, %v1632
    %v1634 = vpop.f32.mrf.mxu0
    %1635 = vmatprep.mubr.f32.mxu0 0.0
    %1636 = vmatmul.mubr.f32.gmra.mxu0 %v1546
    %v1637 = vpop.f32.mrf.mxu0
    %v1638 = vadd.f32 0.0, %v1637
    %v1639 = vpop.f32.mrf.mxu0
    %1640 = vmatprep.mubr.f32.mxu0 0.0
    %1641 = vmatmul.mubr.f32.gmra.mxu0 %v1547
    %v1642 = vpop.f32.mrf.mxu0
    %v1643 = vadd.f32 0.0, %v1642
    %v1644 = vpop.f32.mrf.mxu0
    %1645 = vmatprep.mubr.f32.mxu0 0.0
    %1646 = vmatmul.mubr.f32.gmra.mxu0 %v1548
    %v1647 = vpop.f32.mrf.mxu0
    %v1648 = vadd.f32 0.0, %v1647
    %v1649 = vpop.f32.mrf.mxu0
    %1650 = vdwg.mxu0
    %1655 = vrot.lane.b32.xlu0 %v1633, 64
    %v1656 = vpop.permute.xlu0 %1655
    %1657 = vrot.lane.b32.xlu0 %v1638, 64
    %v1658 = vpop.permute.xlu0 %1657
    %1659 = vrot.lane.b32.xlu0 %v1643, 64
    %v1660 = vpop.permute.xlu0 %1659
    %1661 = vrot.lane.b32.xlu0 %v1648, 64
    %v1662 = vpop.permute.xlu0 %1661
    %v1667 = vmax.f32 %v1633, %v1656
    %v1668 = vmax.f32 %v1638, %v1658
    %v1669 = vmax.f32 %v1643, %v1660
    %v1670 = vmax.f32 %v1648, %v1662
    %v1671 = vcombine.high %v1667, 0.0
    %v1673 = vunpack.c.l.s4 1983009808
    %v1674 = vunpack.c.0.s8 %v1673
    %v1675 = vlaneseq
    %v1676 = vshrl.u32 %v1675, 7
    %v1677 = vsub.s32 %v1674, %v1676
    %v1678 = vrot.slane %v1667, %v1677
    %v1680 = vunpack.c.l.s4 1983009808
    %v1681 = vunpack.c.0.s8 %v1680
    %v1682 = vlaneseq
    %v1683 = vshrl.u32 %v1682, 7
    %v1684 = vsub.s32 %v1681, %v1683
    %v1685 = vrot.slane %v1671, %v1684
    %v1686 = vcombine.high %v1669, 0.0
    %v1688 = vunpack.c.l.s4 1983009808
    %v1689 = vunpack.c.0.s8 %v1688
    %v1690 = vlaneseq
    %v1691 = vshrl.u32 %v1690, 7
    %v1692 = vsub.s32 %v1689, %v1691
    %v1693 = vrot.slane %v1669, %v1692
    %v1695 = vunpack.c.l.s4 1983009808
    %v1696 = vunpack.c.0.s8 %v1695
    %v1697 = vlaneseq
    %v1698 = vshrl.u32 %v1697, 7
    %v1699 = vsub.s32 %v1696, %v1698
    %v1700 = vrot.slane %v1686, %v1699
    %v1701 = vcombine.low %v1678, %v1693
    %v1702 = vcombine.high %v1678, %v1693
    %v1704 = vunpack.c.l.s4 1934713408
    %v1705 = vunpack.c.0.s8 %v1704
    %v1706 = vlaneseq
    %v1707 = vshrl.u32 %v1706, 7
    %v1708 = vsub.s32 %v1705, %v1707
    %v1709 = vrot.slane %v1701, %v1708
    %v1711 = vunpack.c.l.s4 1934713408
    %v1712 = vunpack.c.0.s8 %v1711
    %v1713 = vlaneseq
    %v1714 = vshrl.u32 %v1713, 7
    %v1715 = vsub.s32 %v1712, %v1714
    %v1716 = vrot.slane %v1702, %v1715
    %v1717 = vcombine.low %v1685, %v1700
    %v1718 = vcombine.high %v1685, %v1700
    %v1720 = vunpack.c.l.s4 1934713408
    %v1721 = vunpack.c.0.s8 %v1720
    %v1722 = vlaneseq
    %v1723 = vshrl.u32 %v1722, 7
    %v1724 = vsub.s32 %v1721, %v1723
    %v1725 = vrot.slane %v1717, %v1724
    %v1727 = vunpack.c.l.s4 1934713408
    %v1728 = vunpack.c.0.s8 %v1727
    %v1729 = vlaneseq
    %v1730 = vshrl.u32 %v1729, 7
    %v1731 = vsub.s32 %v1728, %v1730
    %v1732 = vrot.slane %v1718, %v1731
    %v1733 = vcombine.high %v1709, 0.0
    %v1734 = vcombine.high %v1716, 0.0
    %v1735 = vcombine.high %v1725, 0.0
    %v1736 = vcombine.high %v1732, 0.0
    %v1737 = vcombine.high %v1668, 0.0
    %v1739 = vunpack.c.l.s4 1983009808
    %v1740 = vunpack.c.0.s8 %v1739
    %v1741 = vlaneseq
    %v1742 = vshrl.u32 %v1741, 7
    %v1743 = vsub.s32 %v1740, %v1742
    %v1744 = vrot.slane %v1668, %v1743
    %v1746 = vunpack.c.l.s4 1983009808
    %v1747 = vunpack.c.0.s8 %v1746
    %v1748 = vlaneseq
    %v1749 = vshrl.u32 %v1748, 7
    %v1750 = vsub.s32 %v1747, %v1749
    %v1751 = vrot.slane %v1737, %v1750
    %v1752 = vcombine.high %v1670, 0.0
    %v1754 = vunpack.c.l.s4 1983009808
    %v1755 = vunpack.c.0.s8 %v1754
    %v1756 = vlaneseq
    %v1757 = vshrl.u32 %v1756, 7
    %v1758 = vsub.s32 %v1755, %v1757
    %v1759 = vrot.slane %v1670, %v1758
    %v1761 = vunpack.c.l.s4 1983009808
    %v1762 = vunpack.c.0.s8 %v1761
    %v1763 = vlaneseq
    %v1764 = vshrl.u32 %v1763, 7
    %v1765 = vsub.s32 %v1762, %v1764
    %v1766 = vrot.slane %v1752, %v1765
    %v1767 = vcombine.low %v1744, %v1759
    %v1768 = vcombine.high %v1744, %v1759
    %v1770 = vunpack.c.l.s4 1934713408
    %v1771 = vunpack.c.0.s8 %v1770
    %v1772 = vlaneseq
    %v1773 = vshrl.u32 %v1772, 7
    %v1774 = vsub.s32 %v1771, %v1773
    %v1775 = vrot.slane %v1767, %v1774
    %v1777 = vunpack.c.l.s4 1934713408
    %v1778 = vunpack.c.0.s8 %v1777
    %v1779 = vlaneseq
    %v1780 = vshrl.u32 %v1779, 7
    %v1781 = vsub.s32 %v1778, %v1780
    %v1782 = vrot.slane %v1768, %v1781
    %v1783 = vcombine.low %v1751, %v1766
    %v1784 = vcombine.high %v1751, %v1766
    %v1786 = vunpack.c.l.s4 1934713408
    %v1787 = vunpack.c.0.s8 %v1786
    %v1788 = vlaneseq
    %v1789 = vshrl.u32 %v1788, 7
    %v1790 = vsub.s32 %v1787, %v1789
    %v1791 = vrot.slane %v1783, %v1790
    %v1793 = vunpack.c.l.s4 1934713408
    %v1794 = vunpack.c.0.s8 %v1793
    %v1795 = vlaneseq
    %v1796 = vshrl.u32 %v1795, 7
    %v1797 = vsub.s32 %v1794, %v1796
    %v1798 = vrot.slane %v1784, %v1797
    %v1799 = vcombine.high %v1775, 0.0
    %v1800 = vcombine.high %v1782, 0.0
    %v1801 = vcombine.high %v1791, 0.0
    %v1802 = vcombine.high %v1798, 0.0
    %1804 = vrot.lane.b32.xlu0 %v1733, 64
    %v1805 = vpop.permute.xlu0 %1804
    %1808 = vrot.lane.b32.xlu0 %v1734, 64
    %v1809 = vpop.permute.xlu0 %1808
    %1812 = vrot.lane.b32.xlu0 %v1735, 64
    %v1813 = vpop.permute.xlu0 %1812
    %1816 = vrot.lane.b32.xlu0 %v1736, 64
    %v1817 = vpop.permute.xlu0 %1816
    %1820 = vrot.lane.b32.xlu0 %v1799, 64
    %v1821 = vpop.permute.xlu0 %1820
    %1824 = vrot.lane.b32.xlu0 %v1800, 64
    %v1825 = vpop.permute.xlu0 %1824
    %1828 = vrot.lane.b32.xlu0 %v1801, 64
    %v1829 = vpop.permute.xlu0 %1828
    %1832 = vrot.lane.b32.xlu0 %v1802, 64
    %v1833 = vpop.permute.xlu0 %1832
    %v1835 = vsel %vm406, %v1709, %v1805
    %v1836 = vsel %vm406, %v1716, %v1809
    %v1837 = vsel %vm406, %v1725, %v1813
    %v1838 = vsel %vm406, %v1732, %v1817
    %v1839 = vsel %vm406, %v1775, %v1821
    %v1840 = vsel %vm406, %v1782, %v1825
    %v1841 = vsel %vm406, %v1791, %v1829
    %v1842 = vsel %vm406, %v1798, %v1833
    %s1843 = scalar_lea.vmem [#allocation5], 2048
    %v1844 = vld [vmem:[%s1843] sm:$0xff]
    %v1845 = vld [vmem:[%s1843 + $0x8] sm:$0xff]
    %v1846 = vld [vmem:[%s1843 + $0x10] sm:$0xff]
    %v1847 = vld [vmem:[%s1843 + $0x18] sm:$0xff]
    %v1848 = vld [vmem:[%s1843 + $0x20] sm:$0xff]
    %v1849 = vld [vmem:[%s1843 + $0x28] sm:$0xff]
    %v1850 = vld [vmem:[%s1843 + $0x30] sm:$0xff]
    %v1851 = vld [vmem:[%s1843 + $0x38] sm:$0xff]
    %v1852 = vld [vmem:[%s1843 + $0x40] sm:$0xff]
    %v1853 = vld [vmem:[%s1843 + $0x48] sm:$0xff]
    %v1854 = vld [vmem:[%s1843 + $0x50] sm:$0xff]
    %v1855 = vld [vmem:[%s1843 + $0x58] sm:$0xff]
    %v1856 = vld [vmem:[%s1843 + $0x60] sm:$0xff]
    %v1857 = vld [vmem:[%s1843 + $0x68] sm:$0xff]
    %v1858 = vld [vmem:[%s1843 + $0x70] sm:$0xff]
    %v1859 = vld [vmem:[%s1843 + $0x78] sm:$0xff]
    %v1860 = vld [vmem:[%s1843 + $0x80] sm:$0xff]
    %v1861 = vld [vmem:[%s1843 + $0x88] sm:$0xff]
    %v1862 = vld [vmem:[%s1843 + $0x90] sm:$0xff]
    %v1863 = vld [vmem:[%s1843 + $0x98] sm:$0xff]
    %v1864 = vld [vmem:[%s1843 + $0xa0] sm:$0xff]
    %v1865 = vld [vmem:[%s1843 + $0xa8] sm:$0xff]
    %v1866 = vld [vmem:[%s1843 + $0xb0] sm:$0xff]
    %v1867 = vld [vmem:[%s1843 + $0xb8] sm:$0xff]
    %v1868 = vld [vmem:[%s1843 + $0xc0] sm:$0xff]
    %v1869 = vld [vmem:[%s1843 + $0xc8] sm:$0xff]
    %v1870 = vld [vmem:[%s1843 + $0xd0] sm:$0xff]
    %v1871 = vld [vmem:[%s1843 + $0xd8] sm:$0xff]
    %v1872 = vld [vmem:[%s1843 + $0xe0] sm:$0xff]
    %v1873 = vld [vmem:[%s1843 + $0xe8] sm:$0xff]
    %v1874 = vld [vmem:[%s1843 + $0xf0] sm:$0xff]
    %v1875 = vld [vmem:[%s1843 + $0xf8] sm:$0xff]
    %v1876 = vld [vmem:[%s1843 + $0x100] sm:$0xff]
    %v1877 = vld [vmem:[%s1843 + $0x108] sm:$0xff]
    %v1878 = vld [vmem:[%s1843 + $0x110] sm:$0xff]
    %v1879 = vld [vmem:[%s1843 + $0x118] sm:$0xff]
    %v1880 = vld [vmem:[%s1843 + $0x120] sm:$0xff]
    %v1881 = vld [vmem:[%s1843 + $0x128] sm:$0xff]
    %v1882 = vld [vmem:[%s1843 + $0x130] sm:$0xff]
    %v1883 = vld [vmem:[%s1843 + $0x138] sm:$0xff]
    %v1884 = vld [vmem:[%s1843 + $0x140] sm:$0xff]
    %v1885 = vld [vmem:[%s1843 + $0x148] sm:$0xff]
    %v1886 = vld [vmem:[%s1843 + $0x150] sm:$0xff]
    %v1887 = vld [vmem:[%s1843 + $0x158] sm:$0xff]
    %v1888 = vld [vmem:[%s1843 + $0x160] sm:$0xff]
    %v1889 = vld [vmem:[%s1843 + $0x168] sm:$0xff]
    %v1890 = vld [vmem:[%s1843 + $0x170] sm:$0xff]
    %v1891 = vld [vmem:[%s1843 + $0x178] sm:$0xff]
    %v1892 = vld [vmem:[%s1843 + $0x180] sm:$0xff]
    %v1893 = vld [vmem:[%s1843 + $0x188] sm:$0xff]
    %v1894 = vld [vmem:[%s1843 + $0x190] sm:$0xff]
    %v1895 = vld [vmem:[%s1843 + $0x198] sm:$0xff]
    %v1896 = vld [vmem:[%s1843 + $0x1a0] sm:$0xff]
    %v1897 = vld [vmem:[%s1843 + $0x1a8] sm:$0xff]
    %v1898 = vld [vmem:[%s1843 + $0x1b0] sm:$0xff]
    %v1899 = vld [vmem:[%s1843 + $0x1b8] sm:$0xff]
    %v1900 = vld [vmem:[%s1843 + $0x1c0] sm:$0xff]
    %v1901 = vld [vmem:[%s1843 + $0x1c8] sm:$0xff]
    %v1902 = vld [vmem:[%s1843 + $0x1d0] sm:$0xff]
    %v1903 = vld [vmem:[%s1843 + $0x1d8] sm:$0xff]
    %v1904 = vld [vmem:[%s1843 + $0x1e0] sm:$0xff]
    %v1905 = vld [vmem:[%s1843 + $0x1e8] sm:$0xff]
    %v1906 = vld [vmem:[%s1843 + $0x1f0] sm:$0xff]
    %v1907 = vld [vmem:[%s1843 + $0x1f8] sm:$0xff]
    %v1908 = vld [vmem:[%s1843 + $0x200] sm:$0xff]
    %v1909 = vld [vmem:[%s1843 + $0x208] sm:$0xff]
    %v1910 = vld [vmem:[%s1843 + $0x210] sm:$0xff]
    %v1911 = vld [vmem:[%s1843 + $0x218] sm:$0xff]
    %v1912 = vld [vmem:[%s1843 + $0x220] sm:$0xff]
    %v1913 = vld [vmem:[%s1843 + $0x228] sm:$0xff]
    %v1914 = vld [vmem:[%s1843 + $0x230] sm:$0xff]
    %v1915 = vld [vmem:[%s1843 + $0x238] sm:$0xff]
    %v1916 = vld [vmem:[%s1843 + $0x240] sm:$0xff]
    %v1917 = vld [vmem:[%s1843 + $0x248] sm:$0xff]
    %v1918 = vld [vmem:[%s1843 + $0x250] sm:$0xff]
    %v1919 = vld [vmem:[%s1843 + $0x258] sm:$0xff]
    %v1920 = vld [vmem:[%s1843 + $0x260] sm:$0xff]
    %v1921 = vld [vmem:[%s1843 + $0x268] sm:$0xff]
    %v1922 = vld [vmem:[%s1843 + $0x270] sm:$0xff]
    %v1923 = vld [vmem:[%s1843 + $0x278] sm:$0xff]
    %v1924 = vld [vmem:[%s1843 + $0x280] sm:$0xff]
    %v1925 = vld [vmem:[%s1843 + $0x288] sm:$0xff]
    %v1926 = vld [vmem:[%s1843 + $0x290] sm:$0xff]
    %v1927 = vld [vmem:[%s1843 + $0x298] sm:$0xff]
    %v1928 = vld [vmem:[%s1843 + $0x2a0] sm:$0xff]
    %v1929 = vld [vmem:[%s1843 + $0x2a8] sm:$0xff]
    %v1930 = vld [vmem:[%s1843 + $0x2b0] sm:$0xff]
    %v1931 = vld [vmem:[%s1843 + $0x2b8] sm:$0xff]
    %v1932 = vld [vmem:[%s1843 + $0x2c0] sm:$0xff]
    %v1933 = vld [vmem:[%s1843 + $0x2c8] sm:$0xff]
    %v1934 = vld [vmem:[%s1843 + $0x2d0] sm:$0xff]
    %v1935 = vld [vmem:[%s1843 + $0x2d8] sm:$0xff]
    %v1936 = vld [vmem:[%s1843 + $0x2e0] sm:$0xff]
    %v1937 = vld [vmem:[%s1843 + $0x2e8] sm:$0xff]
    %v1938 = vld [vmem:[%s1843 + $0x2f0] sm:$0xff]
    %v1939 = vld [vmem:[%s1843 + $0x2f8] sm:$0xff]
    %v1940 = vld [vmem:[%s1843 + $0x300] sm:$0xff]
    %v1941 = vld [vmem:[%s1843 + $0x308] sm:$0xff]
    %v1942 = vld [vmem:[%s1843 + $0x310] sm:$0xff]
    %v1943 = vld [vmem:[%s1843 + $0x318] sm:$0xff]
    %v1944 = vld [vmem:[%s1843 + $0x320] sm:$0xff]
    %v1945 = vld [vmem:[%s1843 + $0x328] sm:$0xff]
    %v1946 = vld [vmem:[%s1843 + $0x330] sm:$0xff]
    %v1947 = vld [vmem:[%s1843 + $0x338] sm:$0xff]
    %v1948 = vld [vmem:[%s1843 + $0x340] sm:$0xff]
    %v1949 = vld [vmem:[%s1843 + $0x348] sm:$0xff]
    %v1950 = vld [vmem:[%s1843 + $0x350] sm:$0xff]
    %v1951 = vld [vmem:[%s1843 + $0x358] sm:$0xff]
    %v1952 = vld [vmem:[%s1843 + $0x360] sm:$0xff]
    %v1953 = vld [vmem:[%s1843 + $0x368] sm:$0xff]
    %v1954 = vld [vmem:[%s1843 + $0x370] sm:$0xff]
    %v1955 = vld [vmem:[%s1843 + $0x378] sm:$0xff]
    %v1956 = vld [vmem:[%s1843 + $0x380] sm:$0xff]
    %v1957 = vld [vmem:[%s1843 + $0x388] sm:$0xff]
    %v1958 = vld [vmem:[%s1843 + $0x390] sm:$0xff]
    %v1959 = vld [vmem:[%s1843 + $0x398] sm:$0xff]
    %v1960 = vld [vmem:[%s1843 + $0x3a0] sm:$0xff]
    %v1961 = vld [vmem:[%s1843 + $0x3a8] sm:$0xff]
    %v1962 = vld [vmem:[%s1843 + $0x3b0] sm:$0xff]
    %v1963 = vld [vmem:[%s1843 + $0x3b8] sm:$0xff]
    %v1964 = vld [vmem:[%s1843 + $0x3c0] sm:$0xff]
    %v1965 = vld [vmem:[%s1843 + $0x3c8] sm:$0xff]
    %v1966 = vld [vmem:[%s1843 + $0x3d0] sm:$0xff]
    %v1967 = vld [vmem:[%s1843 + $0x3d8] sm:$0xff]
    %v1968 = vld [vmem:[%s1843 + $0x3e0] sm:$0xff]
    %v1969 = vld [vmem:[%s1843 + $0x3e8] sm:$0xff]
    %v1970 = vld [vmem:[%s1843 + $0x3f0] sm:$0xff]
    %v1971 = vld [vmem:[%s1843 + $0x3f8] sm:$0xff]
    %s1972 = scalar_lea.vmem [#allocation7], 2
    %v1973 = vld [vmem:[%s1972] sm:$0x1]
    %v1975 = vlaneseq
    %v1976 = vshrl.u32 %v1975, 7
    %v1977 = vsub.s32 0, %v1976
    %v1978 = vrot.slane %v1973, %v1977
    %1980 = vmatprep.subr.mxu0 0.0
    %1981 = vmatpush1.msra.mxu0 %v1859
    %1982 = vmatprep.subr.mxu0 0.0
    %1983 = vmatpush1.msra.mxu0 %v1858
    %1984 = vmatprep.subr.mxu0 0.0
    %1985 = vmatpush1.msra.mxu0 %v1857
    %1986 = vmatprep.subr.mxu0 0.0
    %1987 = vmatpush1.msra.mxu0 %v1856
    %1988 = vmatprep.subr.mxu0 0.0
    %1989 = vmatpush1.msra.mxu0 %v1855
    %1990 = vmatprep.subr.mxu0 0.0
    %1991 = vmatpush1.msra.mxu0 %v1854
    %1992 = vmatprep.subr.mxu0 0.0
    %1993 = vmatpush1.msra.mxu0 %v1853
    %1994 = vmatprep.subr.mxu0 0.0
    %1995 = vmatpush1.msra.mxu0 %v1852
    %1996 = vmatprep.subr.mxu0 0.0
    %1997 = vmatpush1.msra.mxu0 %v1851
    %1998 = vmatprep.subr.mxu0 0.0
    %1999 = vmatpush1.msra.mxu0 %v1850
    %2000 = vmatprep.subr.mxu0 0.0
    %2001 = vmatpush1.msra.mxu0 %v1849
    %2002 = vmatprep.subr.mxu0 0.0
    %2003 = vmatpush1.msra.mxu0 %v1848
    %2004 = vmatprep.subr.mxu0 0.0
    %2005 = vmatpush1.msra.mxu0 %v1847
    %2006 = vmatprep.subr.mxu0 0.0
    %2007 = vmatpush1.msra.mxu0 %v1846
    %2008 = vmatprep.subr.mxu0 0.0
    %2009 = vmatpush1.msra.mxu0 %v1845
    %2010 = vmatprep.subr.mxu0 0.0
    %2011 = vmatpush1.msra.mxu0 %v1844
    %2012 = vmatprep.subr.mxu0 0.0
    %2013 = vmatpush2.msra.mxu0 %v1875
    %2014 = vmatprep.subr.mxu0 0.0
    %2015 = vmatpush2.msra.mxu0 %v1874
    %2016 = vmatprep.subr.mxu0 0.0
    %2017 = vmatpush2.msra.mxu0 %v1873
    %2018 = vmatprep.subr.mxu0 0.0
    %2019 = vmatpush2.msra.mxu0 %v1872
    %2020 = vmatprep.subr.mxu0 0.0
    %2021 = vmatpush2.msra.mxu0 %v1871
    %2022 = vmatprep.subr.mxu0 0.0
    %2023 = vmatpush2.msra.mxu0 %v1870
    %2024 = vmatprep.subr.mxu0 0.0
    %2025 = vmatpush2.msra.mxu0 %v1869
    %2026 = vmatprep.subr.mxu0 0.0
    %2027 = vmatpush2.msra.mxu0 %v1868
    %2028 = vmatprep.subr.mxu0 0.0
    %2029 = vmatpush2.msra.mxu0 %v1867
    %2030 = vmatprep.subr.mxu0 0.0
    %2031 = vmatpush2.msra.mxu0 %v1866
    %2032 = vmatprep.subr.mxu0 0.0
    %2033 = vmatpush2.msra.mxu0 %v1865
    %2034 = vmatprep.subr.mxu0 0.0
    %2035 = vmatpush2.msra.mxu0 %v1864
    %2036 = vmatprep.subr.mxu0 0.0
    %2037 = vmatpush2.msra.mxu0 %v1863
    %2038 = vmatprep.subr.mxu0 0.0
    %2039 = vmatpush2.msra.mxu0 %v1862
    %2040 = vmatprep.subr.mxu0 0.0
    %2041 = vmatpush2.msra.mxu0 %v1861
    %2042 = vmatprep.subr.mxu0 0.0
    %2043 = vmatpush2.msra.mxu0 %v1860
    %2044 = vmatprep.mubr.f32.mxu0 %v1836
    %2045 = vmatmul.mubr.f32.gmra.mxu0 %v1835
    %v2046 = vpop.f32.mrf.mxu0
    %v2047 = vadd.f32 %v1978, %v2046
    %v2048 = vpop.f32.mrf.mxu0
    %2049 = vdwg.mxu0
    %2050 = vmatprep.subr.mxu0 0.0
    %2051 = vmatpush1.msra.mxu0 %v1891
    %2052 = vmatprep.subr.mxu0 0.0
    %2053 = vmatpush1.msra.mxu0 %v1890
    %2054 = vmatprep.subr.mxu0 0.0
    %2055 = vmatpush1.msra.mxu0 %v1889
    %2056 = vmatprep.subr.mxu0 0.0
    %2057 = vmatpush1.msra.mxu0 %v1888
    %2058 = vmatprep.subr.mxu0 0.0
    %2059 = vmatpush1.msra.mxu0 %v1887
    %2060 = vmatprep.subr.mxu0 0.0
    %2061 = vmatpush1.msra.mxu0 %v1886
    %2062 = vmatprep.subr.mxu0 0.0
    %2063 = vmatpush1.msra.mxu0 %v1885
    %2064 = vmatprep.subr.mxu0 0.0
    %2065 = vmatpush1.msra.mxu0 %v1884
    %2066 = vmatprep.subr.mxu0 0.0
    %2067 = vmatpush1.msra.mxu0 %v1883
    %2068 = vmatprep.subr.mxu0 0.0
    %2069 = vmatpush1.msra.mxu0 %v1882
    %2070 = vmatprep.subr.mxu0 0.0
    %2071 = vmatpush1.msra.mxu0 %v1881
    %2072 = vmatprep.subr.mxu0 0.0
    %2073 = vmatpush1.msra.mxu0 %v1880
    %2074 = vmatprep.subr.mxu0 0.0
    %2075 = vmatpush1.msra.mxu0 %v1879
    %2076 = vmatprep.subr.mxu0 0.0
    %2077 = vmatpush1.msra.mxu0 %v1878
    %2078 = vmatprep.subr.mxu0 0.0
    %2079 = vmatpush1.msra.mxu0 %v1877
    %2080 = vmatprep.subr.mxu0 0.0
    %2081 = vmatpush1.msra.mxu0 %v1876
    %2082 = vmatprep.subr.mxu0 0.0
    %2083 = vmatpush2.msra.mxu0 %v1907
    %2084 = vmatprep.subr.mxu0 0.0
    %2085 = vmatpush2.msra.mxu0 %v1906
    %2086 = vmatprep.subr.mxu0 0.0
    %2087 = vmatpush2.msra.mxu0 %v1905
    %2088 = vmatprep.subr.mxu0 0.0
    %2089 = vmatpush2.msra.mxu0 %v1904
    %2090 = vmatprep.subr.mxu0 0.0
    %2091 = vmatpush2.msra.mxu0 %v1903
    %2092 = vmatprep.subr.mxu0 0.0
    %2093 = vmatpush2.msra.mxu0 %v1902
    %2094 = vmatprep.subr.mxu0 0.0
    %2095 = vmatpush2.msra.mxu0 %v1901
    %2096 = vmatprep.subr.mxu0 0.0
    %2097 = vmatpush2.msra.mxu0 %v1900
    %2098 = vmatprep.subr.mxu0 0.0
    %2099 = vmatpush2.msra.mxu0 %v1899
    %2100 = vmatprep.subr.mxu0 0.0
    %2101 = vmatpush2.msra.mxu0 %v1898
    %2102 = vmatprep.subr.mxu0 0.0
    %2103 = vmatpush2.msra.mxu0 %v1897
    %2104 = vmatprep.subr.mxu0 0.0
    %2105 = vmatpush2.msra.mxu0 %v1896
    %2106 = vmatprep.subr.mxu0 0.0
    %2107 = vmatpush2.msra.mxu0 %v1895
    %2108 = vmatprep.subr.mxu0 0.0
    %2109 = vmatpush2.msra.mxu0 %v1894
    %2110 = vmatprep.subr.mxu0 0.0
    %2111 = vmatpush2.msra.mxu0 %v1893
    %2112 = vmatprep.subr.mxu0 0.0
    %2113 = vmatpush2.msra.mxu0 %v1892
    %2114 = vmatprep.mubr.f32.mxu0 %v1838
    %2115 = vmatmul.mubr.f32.gmra.mxu0 %v1837
    %v2116 = vpop.f32.mrf.mxu0
    %v2117 = vadd.f32 %v2047, %v2116
    %v2118 = vpop.f32.mrf.mxu0
    %2119 = vdwg.mxu0
    %2120 = vmatprep.subr.mxu0 0.0
    %2121 = vmatpush1.msra.mxu0 %v1923
    %2122 = vmatprep.subr.mxu0 0.0
    %2123 = vmatpush1.msra.mxu0 %v1922
    %2124 = vmatprep.subr.mxu0 0.0
    %2125 = vmatpush1.msra.mxu0 %v1921
    %2126 = vmatprep.subr.mxu0 0.0
    %2127 = vmatpush1.msra.mxu0 %v1920
    %2128 = vmatprep.subr.mxu0 0.0
    %2129 = vmatpush1.msra.mxu0 %v1919
    %2130 = vmatprep.subr.mxu0 0.0
    %2131 = vmatpush1.msra.mxu0 %v1918
    %2132 = vmatprep.subr.mxu0 0.0
    %2133 = vmatpush1.msra.mxu0 %v1917
    %2134 = vmatprep.subr.mxu0 0.0
    %2135 = vmatpush1.msra.mxu0 %v1916
    %2136 = vmatprep.subr.mxu0 0.0
    %2137 = vmatpush1.msra.mxu0 %v1915
    %2138 = vmatprep.subr.mxu0 0.0
    %2139 = vmatpush1.msra.mxu0 %v1914
    %2140 = vmatprep.subr.mxu0 0.0
    %2141 = vmatpush1.msra.mxu0 %v1913
    %2142 = vmatprep.subr.mxu0 0.0
    %2143 = vmatpush1.msra.mxu0 %v1912
    %2144 = vmatprep.subr.mxu0 0.0
    %2145 = vmatpush1.msra.mxu0 %v1911
    %2146 = vmatprep.subr.mxu0 0.0
    %2147 = vmatpush1.msra.mxu0 %v1910
    %2148 = vmatprep.subr.mxu0 0.0
    %2149 = vmatpush1.msra.mxu0 %v1909
    %2150 = vmatprep.subr.mxu0 0.0
    %2151 = vmatpush1.msra.mxu0 %v1908
    %2152 = vmatprep.subr.mxu0 0.0
    %2153 = vmatpush2.msra.mxu0 %v1939
    %2154 = vmatprep.subr.mxu0 0.0
    %2155 = vmatpush2.msra.mxu0 %v1938
    %2156 = vmatprep.subr.mxu0 0.0
    %2157 = vmatpush2.msra.mxu0 %v1937
    %2158 = vmatprep.subr.mxu0 0.0
    %2159 = vmatpush2.msra.mxu0 %v1936
    %2160 = vmatprep.subr.mxu0 0.0
    %2161 = vmatpush2.msra.mxu0 %v1935
    %2162 = vmatprep.subr.mxu0 0.0
    %2163 = vmatpush2.msra.mxu0 %v1934
    %2164 = vmatprep.subr.mxu0 0.0
    %2165 = vmatpush2.msra.mxu0 %v1933
    %2166 = vmatprep.subr.mxu0 0.0
    %2167 = vmatpush2.msra.mxu0 %v1932
    %2168 = vmatprep.subr.mxu0 0.0
    %2169 = vmatpush2.msra.mxu0 %v1931
    %2170 = vmatprep.subr.mxu0 0.0
    %2171 = vmatpush2.msra.mxu0 %v1930
    %2172 = vmatprep.subr.mxu0 0.0
    %2173 = vmatpush2.msra.mxu0 %v1929
    %2174 = vmatprep.subr.mxu0 0.0
    %2175 = vmatpush2.msra.mxu0 %v1928
    %2176 = vmatprep.subr.mxu0 0.0
    %2177 = vmatpush2.msra.mxu0 %v1927
    %2178 = vmatprep.subr.mxu0 0.0
    %2179 = vmatpush2.msra.mxu0 %v1926
    %2180 = vmatprep.subr.mxu0 0.0
    %2181 = vmatpush2.msra.mxu0 %v1925
    %2182 = vmatprep.subr.mxu0 0.0
    %2183 = vmatpush2.msra.mxu0 %v1924
    %2184 = vmatprep.mubr.f32.mxu0 %v1840
    %2185 = vmatmul.mubr.f32.gmra.mxu0 %v1839
    %v2186 = vpop.f32.mrf.mxu0
    %v2187 = vadd.f32 %v2117, %v2186
    %v2188 = vpop.f32.mrf.mxu0
    %2189 = vdwg.mxu0
    %2190 = vmatprep.subr.mxu0 0.0
    %2191 = vmatpush1.msra.mxu0 %v1955
    %2192 = vmatprep.subr.mxu0 0.0
    %2193 = vmatpush1.msra.mxu0 %v1954
    %2194 = vmatprep.subr.mxu0 0.0
    %2195 = vmatpush1.msra.mxu0 %v1953
    %2196 = vmatprep.subr.mxu0 0.0
    %2197 = vmatpush1.msra.mxu0 %v1952
    %2198 = vmatprep.subr.mxu0 0.0
    %2199 = vmatpush1.msra.mxu0 %v1951
    %2200 = vmatprep.subr.mxu0 0.0
    %2201 = vmatpush1.msra.mxu0 %v1950
    %2202 = vmatprep.subr.mxu0 0.0
    %2203 = vmatpush1.msra.mxu0 %v1949
    %2204 = vmatprep.subr.mxu0 0.0
    %2205 = vmatpush1.msra.mxu0 %v1948
    %2206 = vmatprep.subr.mxu0 0.0
    %2207 = vmatpush1.msra.mxu0 %v1947
    %2208 = vmatprep.subr.mxu0 0.0
    %2209 = vmatpush1.msra.mxu0 %v1946
    %2210 = vmatprep.subr.mxu0 0.0
    %2211 = vmatpush1.msra.mxu0 %v1945
    %2212 = vmatprep.subr.mxu0 0.0
    %2213 = vmatpush1.msra.mxu0 %v1944
    %2214 = vmatprep.subr.mxu0 0.0
    %2215 = vmatpush1.msra.mxu0 %v1943
    %2216 = vmatprep.subr.mxu0 0.0
    %2217 = vmatpush1.msra.mxu0 %v1942
    %2218 = vmatprep.subr.mxu0 0.0
    %2219 = vmatpush1.msra.mxu0 %v1941
    %2220 = vmatprep.subr.mxu0 0.0
    %2221 = vmatpush1.msra.mxu0 %v1940
    %2222 = vmatprep.subr.mxu0 0.0
    %2223 = vmatpush2.msra.mxu0 %v1971
    %2224 = vmatprep.subr.mxu0 0.0
    %2225 = vmatpush2.msra.mxu0 %v1970
    %2226 = vmatprep.subr.mxu0 0.0
    %2227 = vmatpush2.msra.mxu0 %v1969
    %2228 = vmatprep.subr.mxu0 0.0
    %2229 = vmatpush2.msra.mxu0 %v1968
    %2230 = vmatprep.subr.mxu0 0.0
    %2231 = vmatpush2.msra.mxu0 %v1967
    %2232 = vmatprep.subr.mxu0 0.0
    %2233 = vmatpush2.msra.mxu0 %v1966
    %2234 = vmatprep.subr.mxu0 0.0
    %2235 = vmatpush2.msra.mxu0 %v1965
    %2236 = vmatprep.subr.mxu0 0.0
    %2237 = vmatpush2.msra.mxu0 %v1964
    %2238 = vmatprep.subr.mxu0 0.0
    %2239 = vmatpush2.msra.mxu0 %v1963
    %2240 = vmatprep.subr.mxu0 0.0
    %2241 = vmatpush2.msra.mxu0 %v1962
    %2242 = vmatprep.subr.mxu0 0.0
    %2243 = vmatpush2.msra.mxu0 %v1961
    %2244 = vmatprep.subr.mxu0 0.0
    %2245 = vmatpush2.msra.mxu0 %v1960
    %2246 = vmatprep.subr.mxu0 0.0
    %2247 = vmatpush2.msra.mxu0 %v1959
    %2248 = vmatprep.subr.mxu0 0.0
    %2249 = vmatpush2.msra.mxu0 %v1958
    %2250 = vmatprep.subr.mxu0 0.0
    %2251 = vmatpush2.msra.mxu0 %v1957
    %2252 = vmatprep.subr.mxu0 0.0
    %2253 = vmatpush2.msra.mxu0 %v1956
    %2254 = vmatprep.mubr.f32.mxu0 %v1842
    %2255 = vmatmul.mubr.f32.gmra.mxu0 %v1841
    %v2256 = vpop.f32.mrf.mxu0
    %v2257 = vadd.f32 %v2187, %v2256
    %v2258 = vpop.f32.mrf.mxu0
    %2259 = vdwg.mxu0
    %v2260 = vld [vmem:[%s0 + $0x30] sm:$0xff]
    %v2261 = vld [vmem:[%s0 + $0x38] sm:$0xff]
    %v2262 = vld [vmem:[%s0 + $0x70] sm:$0xff]
    %v2263 = vld [vmem:[%s0 + $0x78] sm:$0xff]
    %s2264 = scalar_lea.vmem [#allocation3], 384
    %v2265 = vld [vmem:[%s2264] sm:$0xff]
    %v2266 = vld [vmem:[%s2264 + $0x8] sm:$0xff]
    %v2267 = vld [vmem:[%s2264 + $0x10] sm:$0xff]
    %v2268 = vld [vmem:[%s2264 + $0x18] sm:$0xff]
    %v2269 = vld [vmem:[%s2264 + $0x20] sm:$0xff]
    %v2270 = vld [vmem:[%s2264 + $0x28] sm:$0xff]
    %v2271 = vld [vmem:[%s2264 + $0x30] sm:$0xff]
    %v2272 = vld [vmem:[%s2264 + $0x38] sm:$0xff]
    %v2273 = vld [vmem:[%s2264 + $0x40] sm:$0xff]
    %v2274 = vld [vmem:[%s2264 + $0x48] sm:$0xff]
    %v2275 = vld [vmem:[%s2264 + $0x50] sm:$0xff]
    %v2276 = vld [vmem:[%s2264 + $0x58] sm:$0xff]
    %v2277 = vld [vmem:[%s2264 + $0x60] sm:$0xff]
    %v2278 = vld [vmem:[%s2264 + $0x68] sm:$0xff]
    %v2279 = vld [vmem:[%s2264 + $0x70] sm:$0xff]
    %v2280 = vld [vmem:[%s2264 + $0x78] sm:$0xff]
    %2281 = vmatprep.subr.mxu0 0.0
    %2282 = vmatpush1.msra.mxu0 %v2280
    %2283 = vmatprep.subr.mxu0 0.0
    %2284 = vmatpush1.msra.mxu0 %v2279
    %2285 = vmatprep.subr.mxu0 0.0
    %2286 = vmatpush1.msra.mxu0 %v2278
    %2287 = vmatprep.subr.mxu0 0.0
    %2288 = vmatpush1.msra.mxu0 %v2277
    %2289 = vmatprep.subr.mxu0 0.0
    %2290 = vmatpush1.msra.mxu0 %v2276
    %2291 = vmatprep.subr.mxu0 0.0
    %2292 = vmatpush1.msra.mxu0 %v2275
    %2293 = vmatprep.subr.mxu0 0.0
    %2294 = vmatpush1.msra.mxu0 %v2274
    %2295 = vmatprep.subr.mxu0 0.0
    %2296 = vmatpush1.msra.mxu0 %v2273
    %2297 = vmatprep.subr.mxu0 0.0
    %2298 = vmatpush1.msra.mxu0 %v2272
    %2299 = vmatprep.subr.mxu0 0.0
    %2300 = vmatpush1.msra.mxu0 %v2271
    %2301 = vmatprep.subr.mxu0 0.0
    %2302 = vmatpush1.msra.mxu0 %v2270
    %2303 = vmatprep.subr.mxu0 0.0
    %2304 = vmatpush1.msra.mxu0 %v2269
    %2305 = vmatprep.subr.mxu0 0.0
    %2306 = vmatpush1.msra.mxu0 %v2268
    %2307 = vmatprep.subr.mxu0 0.0
    %2308 = vmatpush1.msra.mxu0 %v2267
    %2309 = vmatprep.subr.mxu0 0.0
    %2310 = vmatpush1.msra.mxu0 %v2266
    %2311 = vmatprep.subr.mxu0 0.0
    %2312 = vmatpush1.msra.mxu0 %v2265
    %2313 = vmatprep.subr.mxu0 0.0
    %2314 = vmatpush2.msra.mxu0 0.0
    %2315 = vmatprep.subr.mxu0 0.0
    %2316 = vmatpush2.msra.mxu0 0.0
    %2317 = vmatprep.subr.mxu0 0.0
    %2318 = vmatpush2.msra.mxu0 0.0
    %2319 = vmatprep.subr.mxu0 0.0
    %2320 = vmatpush2.msra.mxu0 0.0
    %2321 = vmatprep.subr.mxu0 0.0
    %2322 = vmatpush2.msra.mxu0 0.0
    %2323 = vmatprep.subr.mxu0 0.0
    %2324 = vmatpush2.msra.mxu0 0.0
    %2325 = vmatprep.subr.mxu0 0.0
    %2326 = vmatpush2.msra.mxu0 0.0
    %2327 = vmatprep.subr.mxu0 0.0
    %2328 = vmatpush2.msra.mxu0 0.0
    %2329 = vmatprep.subr.mxu0 0.0
    %2330 = vmatpush2.msra.mxu0 0.0
    %2331 = vmatprep.subr.mxu0 0.0
    %2332 = vmatpush2.msra.mxu0 0.0
    %2333 = vmatprep.subr.mxu0 0.0
    %2334 = vmatpush2.msra.mxu0 0.0
    %2335 = vmatprep.subr.mxu0 0.0
    %2336 = vmatpush2.msra.mxu0 0.0
    %2337 = vmatprep.subr.mxu0 0.0
    %2338 = vmatpush2.msra.mxu0 0.0
    %2339 = vmatprep.subr.mxu0 0.0
    %2340 = vmatpush2.msra.mxu0 0.0
    %2341 = vmatprep.subr.mxu0 0.0
    %2342 = vmatpush2.msra.mxu0 0.0
    %2343 = vmatprep.subr.mxu0 0.0
    %2344 = vmatpush2.msra.mxu0 0.0
    %2345 = vmatprep.mubr.f32.mxu0 0.0
    %2346 = vmatmul.mubr.f32.gmra.mxu0 %v2260
    %v2347 = vpop.f32.mrf.mxu0
    %v2348 = vadd.f32 0.0, %v2347
    %v2349 = vpop.f32.mrf.mxu0
    %2350 = vmatprep.mubr.f32.mxu0 0.0
    %2351 = vmatmul.mubr.f32.gmra.mxu0 %v2261
    %v2352 = vpop.f32.mrf.mxu0
    %v2353 = vadd.f32 0.0, %v2352
    %v2354 = vpop.f32.mrf.mxu0
    %2355 = vmatprep.mubr.f32.mxu0 0.0
    %2356 = vmatmul.mubr.f32.gmra.mxu0 %v2262
    %v2357 = vpop.f32.mrf.mxu0
    %v2358 = vadd.f32 0.0, %v2357
    %v2359 = vpop.f32.mrf.mxu0
    %2360 = vmatprep.mubr.f32.mxu0 0.0
    %2361 = vmatmul.mubr.f32.gmra.mxu0 %v2263
    %v2362 = vpop.f32.mrf.mxu0
    %v2363 = vadd.f32 0.0, %v2362
    %v2364 = vpop.f32.mrf.mxu0
    %2365 = vdwg.mxu0
    %2370 = vrot.lane.b32.xlu0 %v2348, 64
    %v2371 = vpop.permute.xlu0 %2370
    %2372 = vrot.lane.b32.xlu0 %v2353, 64
    %v2373 = vpop.permute.xlu0 %2372
    %2374 = vrot.lane.b32.xlu0 %v2358, 64
    %v2375 = vpop.permute.xlu0 %2374
    %2376 = vrot.lane.b32.xlu0 %v2363, 64
    %v2377 = vpop.permute.xlu0 %2376
    %v2382 = vmax.f32 %v2348, %v2371
    %v2383 = vmax.f32 %v2353, %v2373
    %v2384 = vmax.f32 %v2358, %v2375
    %v2385 = vmax.f32 %v2363, %v2377
    %v2386 = vcombine.high %v2382, 0.0
    %v2388 = vunpack.c.l.s4 1983009808
    %v2389 = vunpack.c.0.s8 %v2388
    %v2390 = vlaneseq
    %v2391 = vshrl.u32 %v2390, 7
    %v2392 = vsub.s32 %v2389, %v2391
    %v2393 = vrot.slane %v2382, %v2392
    %v2395 = vunpack.c.l.s4 1983009808
    %v2396 = vunpack.c.0.s8 %v2395
    %v2397 = vlaneseq
    %v2398 = vshrl.u32 %v2397, 7
    %v2399 = vsub.s32 %v2396, %v2398
    %v2400 = vrot.slane %v2386, %v2399
    %v2401 = vcombine.high %v2384, 0.0
    %v2403 = vunpack.c.l.s4 1983009808
    %v2404 = vunpack.c.0.s8 %v2403
    %v2405 = vlaneseq
    %v2406 = vshrl.u32 %v2405, 7
    %v2407 = vsub.s32 %v2404, %v2406
    %v2408 = vrot.slane %v2384, %v2407
    %v2410 = vunpack.c.l.s4 1983009808
    %v2411 = vunpack.c.0.s8 %v2410
    %v2412 = vlaneseq
    %v2413 = vshrl.u32 %v2412, 7
    %v2414 = vsub.s32 %v2411, %v2413
    %v2415 = vrot.slane %v2401, %v2414
    %v2416 = vcombine.low %v2393, %v2408
    %v2417 = vcombine.high %v2393, %v2408
    %v2419 = vunpack.c.l.s4 1934713408
    %v2420 = vunpack.c.0.s8 %v2419
    %v2421 = vlaneseq
    %v2422 = vshrl.u32 %v2421, 7
    %v2423 = vsub.s32 %v2420, %v2422
    %v2424 = vrot.slane %v2416, %v2423
    %v2426 = vunpack.c.l.s4 1934713408
    %v2427 = vunpack.c.0.s8 %v2426
    %v2428 = vlaneseq
    %v2429 = vshrl.u32 %v2428, 7
    %v2430 = vsub.s32 %v2427, %v2429
    %v2431 = vrot.slane %v2417, %v2430
    %v2432 = vcombine.low %v2400, %v2415
    %v2433 = vcombine.high %v2400, %v2415
    %v2435 = vunpack.c.l.s4 1934713408
    %v2436 = vunpack.c.0.s8 %v2435
    %v2437 = vlaneseq
    %v2438 = vshrl.u32 %v2437, 7
    %v2439 = vsub.s32 %v2436, %v2438
    %v2440 = vrot.slane %v2432, %v2439
    %v2442 = vunpack.c.l.s4 1934713408
    %v2443 = vunpack.c.0.s8 %v2442
    %v2444 = vlaneseq
    %v2445 = vshrl.u32 %v2444, 7
    %v2446 = vsub.s32 %v2443, %v2445
    %v2447 = vrot.slane %v2433, %v2446
    %v2448 = vcombine.high %v2424, 0.0
    %v2449 = vcombine.high %v2431, 0.0
    %v2450 = vcombine.high %v2440, 0.0
    %v2451 = vcombine.high %v2447, 0.0
    %v2452 = vcombine.high %v2383, 0.0
    %v2454 = vunpack.c.l.s4 1983009808
    %v2455 = vunpack.c.0.s8 %v2454
    %v2456 = vlaneseq
    %v2457 = vshrl.u32 %v2456, 7
    %v2458 = vsub.s32 %v2455, %v2457
    %v2459 = vrot.slane %v2383, %v2458
    %v2461 = vunpack.c.l.s4 1983009808
    %v2462 = vunpack.c.0.s8 %v2461
    %v2463 = vlaneseq
    %v2464 = vshrl.u32 %v2463, 7
    %v2465 = vsub.s32 %v2462, %v2464
    %v2466 = vrot.slane %v2452, %v2465
    %v2467 = vcombine.high %v2385, 0.0
    %v2469 = vunpack.c.l.s4 1983009808
    %v2470 = vunpack.c.0.s8 %v2469
    %v2471 = vlaneseq
    %v2472 = vshrl.u32 %v2471, 7
    %v2473 = vsub.s32 %v2470, %v2472
    %v2474 = vrot.slane %v2385, %v2473
    %v2476 = vunpack.c.l.s4 1983009808
    %v2477 = vunpack.c.0.s8 %v2476
    %v2478 = vlaneseq
    %v2479 = vshrl.u32 %v2478, 7
    %v2480 = vsub.s32 %v2477, %v2479
    %v2481 = vrot.slane %v2467, %v2480
    %v2482 = vcombine.low %v2459, %v2474
    %v2483 = vcombine.high %v2459, %v2474
    %v2485 = vunpack.c.l.s4 1934713408
    %v2486 = vunpack.c.0.s8 %v2485
    %v2487 = vlaneseq
    %v2488 = vshrl.u32 %v2487, 7
    %v2489 = vsub.s32 %v2486, %v2488
    %v2490 = vrot.slane %v2482, %v2489
    %v2492 = vunpack.c.l.s4 1934713408
    %v2493 = vunpack.c.0.s8 %v2492
    %v2494 = vlaneseq
    %v2495 = vshrl.u32 %v2494, 7
    %v2496 = vsub.s32 %v2493, %v2495
    %v2497 = vrot.slane %v2483, %v2496
    %v2498 = vcombine.low %v2466, %v2481
    %v2499 = vcombine.high %v2466, %v2481
    %v2501 = vunpack.c.l.s4 1934713408
    %v2502 = vunpack.c.0.s8 %v2501
    %v2503 = vlaneseq
    %v2504 = vshrl.u32 %v2503, 7
    %v2505 = vsub.s32 %v2502, %v2504
    %v2506 = vrot.slane %v2498, %v2505
    %v2508 = vunpack.c.l.s4 1934713408
    %v2509 = vunpack.c.0.s8 %v2508
    %v2510 = vlaneseq
    %v2511 = vshrl.u32 %v2510, 7
    %v2512 = vsub.s32 %v2509, %v2511
    %v2513 = vrot.slane %v2499, %v2512
    %v2514 = vcombine.high %v2490, 0.0
    %v2515 = vcombine.high %v2497, 0.0
    %v2516 = vcombine.high %v2506, 0.0
    %v2517 = vcombine.high %v2513, 0.0
    %2519 = vrot.lane.b32.xlu0 %v2448, 64
    %v2520 = vpop.permute.xlu0 %2519
    %2523 = vrot.lane.b32.xlu0 %v2449, 64
    %v2524 = vpop.permute.xlu0 %2523
    %2527 = vrot.lane.b32.xlu0 %v2450, 64
    %v2528 = vpop.permute.xlu0 %2527
    %2531 = vrot.lane.b32.xlu0 %v2451, 64
    %v2532 = vpop.permute.xlu0 %2531
    %2535 = vrot.lane.b32.xlu0 %v2514, 64
    %v2536 = vpop.permute.xlu0 %2535
    %2539 = vrot.lane.b32.xlu0 %v2515, 64
    %v2540 = vpop.permute.xlu0 %2539
    %2543 = vrot.lane.b32.xlu0 %v2516, 64
    %v2544 = vpop.permute.xlu0 %2543
    %2547 = vrot.lane.b32.xlu0 %v2517, 64
    %v2548 = vpop.permute.xlu0 %2547
    %v2550 = vsel %vm406, %v2424, %v2520
    %v2551 = vsel %vm406, %v2431, %v2524
    %v2552 = vsel %vm406, %v2440, %v2528
    %v2553 = vsel %vm406, %v2447, %v2532
    %v2554 = vsel %vm406, %v2490, %v2536
    %v2555 = vsel %vm406, %v2497, %v2540
    %v2556 = vsel %vm406, %v2506, %v2544
    %v2557 = vsel %vm406, %v2513, %v2548
    %s2558 = scalar_lea.vmem [#allocation5], 3072
    %v2559 = vld [vmem:[%s2558] sm:$0xff]
    %v2560 = vld [vmem:[%s2558 + $0x8] sm:$0xff]
    %v2561 = vld [vmem:[%s2558 + $0x10] sm:$0xff]
    %v2562 = vld [vmem:[%s2558 + $0x18] sm:$0xff]
    %v2563 = vld [vmem:[%s2558 + $0x20] sm:$0xff]
    %v2564 = vld [vmem:[%s2558 + $0x28] sm:$0xff]
    %v2565 = vld [vmem:[%s2558 + $0x30] sm:$0xff]
    %v2566 = vld [vmem:[%s2558 + $0x38] sm:$0xff]
    %v2567 = vld [vmem:[%s2558 + $0x40] sm:$0xff]
    %v2568 = vld [vmem:[%s2558 + $0x48] sm:$0xff]
    %v2569 = vld [vmem:[%s2558 + $0x50] sm:$0xff]
    %v2570 = vld [vmem:[%s2558 + $0x58] sm:$0xff]
    %v2571 = vld [vmem:[%s2558 + $0x60] sm:$0xff]
    %v2572 = vld [vmem:[%s2558 + $0x68] sm:$0xff]
    %v2573 = vld [vmem:[%s2558 + $0x70] sm:$0xff]
    %v2574 = vld [vmem:[%s2558 + $0x78] sm:$0xff]
    %v2575 = vld [vmem:[%s2558 + $0x80] sm:$0xff]
    %v2576 = vld [vmem:[%s2558 + $0x88] sm:$0xff]
    %v2577 = vld [vmem:[%s2558 + $0x90] sm:$0xff]
    %v2578 = vld [vmem:[%s2558 + $0x98] sm:$0xff]
    %v2579 = vld [vmem:[%s2558 + $0xa0] sm:$0xff]
    %v2580 = vld [vmem:[%s2558 + $0xa8] sm:$0xff]
    %v2581 = vld [vmem:[%s2558 + $0xb0] sm:$0xff]
    %v2582 = vld [vmem:[%s2558 + $0xb8] sm:$0xff]
    %v2583 = vld [vmem:[%s2558 + $0xc0] sm:$0xff]
    %v2584 = vld [vmem:[%s2558 + $0xc8] sm:$0xff]
    %v2585 = vld [vmem:[%s2558 + $0xd0] sm:$0xff]
    %v2586 = vld [vmem:[%s2558 + $0xd8] sm:$0xff]
    %v2587 = vld [vmem:[%s2558 + $0xe0] sm:$0xff]
    %v2588 = vld [vmem:[%s2558 + $0xe8] sm:$0xff]
    %v2589 = vld [vmem:[%s2558 + $0xf0] sm:$0xff]
    %v2590 = vld [vmem:[%s2558 + $0xf8] sm:$0xff]
    %v2591 = vld [vmem:[%s2558 + $0x100] sm:$0xff]
    %v2592 = vld [vmem:[%s2558 + $0x108] sm:$0xff]
    %v2593 = vld [vmem:[%s2558 + $0x110] sm:$0xff]
    %v2594 = vld [vmem:[%s2558 + $0x118] sm:$0xff]
    %v2595 = vld [vmem:[%s2558 + $0x120] sm:$0xff]
    %v2596 = vld [vmem:[%s2558 + $0x128] sm:$0xff]
    %v2597 = vld [vmem:[%s2558 + $0x130] sm:$0xff]
    %v2598 = vld [vmem:[%s2558 + $0x138] sm:$0xff]
    %v2599 = vld [vmem:[%s2558 + $0x140] sm:$0xff]
    %v2600 = vld [vmem:[%s2558 + $0x148] sm:$0xff]
    %v2601 = vld [vmem:[%s2558 + $0x150] sm:$0xff]
    %v2602 = vld [vmem:[%s2558 + $0x158] sm:$0xff]
    %v2603 = vld [vmem:[%s2558 + $0x160] sm:$0xff]
    %v2604 = vld [vmem:[%s2558 + $0x168] sm:$0xff]
    %v2605 = vld [vmem:[%s2558 + $0x170] sm:$0xff]
    %v2606 = vld [vmem:[%s2558 + $0x178] sm:$0xff]
    %v2607 = vld [vmem:[%s2558 + $0x180] sm:$0xff]
    %v2608 = vld [vmem:[%s2558 + $0x188] sm:$0xff]
    %v2609 = vld [vmem:[%s2558 + $0x190] sm:$0xff]
    %v2610 = vld [vmem:[%s2558 + $0x198] sm:$0xff]
    %v2611 = vld [vmem:[%s2558 + $0x1a0] sm:$0xff]
    %v2612 = vld [vmem:[%s2558 + $0x1a8] sm:$0xff]
    %v2613 = vld [vmem:[%s2558 + $0x1b0] sm:$0xff]
    %v2614 = vld [vmem:[%s2558 + $0x1b8] sm:$0xff]
    %v2615 = vld [vmem:[%s2558 + $0x1c0] sm:$0xff]
    %v2616 = vld [vmem:[%s2558 + $0x1c8] sm:$0xff]
    %v2617 = vld [vmem:[%s2558 + $0x1d0] sm:$0xff]
    %v2618 = vld [vmem:[%s2558 + $0x1d8] sm:$0xff]
    %v2619 = vld [vmem:[%s2558 + $0x1e0] sm:$0xff]
    %v2620 = vld [vmem:[%s2558 + $0x1e8] sm:$0xff]
    %v2621 = vld [vmem:[%s2558 + $0x1f0] sm:$0xff]
    %v2622 = vld [vmem:[%s2558 + $0x1f8] sm:$0xff]
    %v2623 = vld [vmem:[%s2558 + $0x200] sm:$0xff]
    %v2624 = vld [vmem:[%s2558 + $0x208] sm:$0xff]
    %v2625 = vld [vmem:[%s2558 + $0x210] sm:$0xff]
    %v2626 = vld [vmem:[%s2558 + $0x218] sm:$0xff]
    %v2627 = vld [vmem:[%s2558 + $0x220] sm:$0xff]
    %v2628 = vld [vmem:[%s2558 + $0x228] sm:$0xff]
    %v2629 = vld [vmem:[%s2558 + $0x230] sm:$0xff]
    %v2630 = vld [vmem:[%s2558 + $0x238] sm:$0xff]
    %v2631 = vld [vmem:[%s2558 + $0x240] sm:$0xff]
    %v2632 = vld [vmem:[%s2558 + $0x248] sm:$0xff]
    %v2633 = vld [vmem:[%s2558 + $0x250] sm:$0xff]
    %v2634 = vld [vmem:[%s2558 + $0x258] sm:$0xff]
    %v2635 = vld [vmem:[%s2558 + $0x260] sm:$0xff]
    %v2636 = vld [vmem:[%s2558 + $0x268] sm:$0xff]
    %v2637 = vld [vmem:[%s2558 + $0x270] sm:$0xff]
    %v2638 = vld [vmem:[%s2558 + $0x278] sm:$0xff]
    %v2639 = vld [vmem:[%s2558 + $0x280] sm:$0xff]
    %v2640 = vld [vmem:[%s2558 + $0x288] sm:$0xff]
    %v2641 = vld [vmem:[%s2558 + $0x290] sm:$0xff]
    %v2642 = vld [vmem:[%s2558 + $0x298] sm:$0xff]
    %v2643 = vld [vmem:[%s2558 + $0x2a0] sm:$0xff]
    %v2644 = vld [vmem:[%s2558 + $0x2a8] sm:$0xff]
    %v2645 = vld [vmem:[%s2558 + $0x2b0] sm:$0xff]
    %v2646 = vld [vmem:[%s2558 + $0x2b8] sm:$0xff]
    %v2647 = vld [vmem:[%s2558 + $0x2c0] sm:$0xff]
    %v2648 = vld [vmem:[%s2558 + $0x2c8] sm:$0xff]
    %v2649 = vld [vmem:[%s2558 + $0x2d0] sm:$0xff]
    %v2650 = vld [vmem:[%s2558 + $0x2d8] sm:$0xff]
    %v2651 = vld [vmem:[%s2558 + $0x2e0] sm:$0xff]
    %v2652 = vld [vmem:[%s2558 + $0x2e8] sm:$0xff]
    %v2653 = vld [vmem:[%s2558 + $0x2f0] sm:$0xff]
    %v2654 = vld [vmem:[%s2558 + $0x2f8] sm:$0xff]
    %v2655 = vld [vmem:[%s2558 + $0x300] sm:$0xff]
    %v2656 = vld [vmem:[%s2558 + $0x308] sm:$0xff]
    %v2657 = vld [vmem:[%s2558 + $0x310] sm:$0xff]
    %v2658 = vld [vmem:[%s2558 + $0x318] sm:$0xff]
    %v2659 = vld [vmem:[%s2558 + $0x320] sm:$0xff]
    %v2660 = vld [vmem:[%s2558 + $0x328] sm:$0xff]
    %v2661 = vld [vmem:[%s2558 + $0x330] sm:$0xff]
    %v2662 = vld [vmem:[%s2558 + $0x338] sm:$0xff]
    %v2663 = vld [vmem:[%s2558 + $0x340] sm:$0xff]
    %v2664 = vld [vmem:[%s2558 + $0x348] sm:$0xff]
    %v2665 = vld [vmem:[%s2558 + $0x350] sm:$0xff]
    %v2666 = vld [vmem:[%s2558 + $0x358] sm:$0xff]
    %v2667 = vld [vmem:[%s2558 + $0x360] sm:$0xff]
    %v2668 = vld [vmem:[%s2558 + $0x368] sm:$0xff]
    %v2669 = vld [vmem:[%s2558 + $0x370] sm:$0xff]
    %v2670 = vld [vmem:[%s2558 + $0x378] sm:$0xff]
    %v2671 = vld [vmem:[%s2558 + $0x380] sm:$0xff]
    %v2672 = vld [vmem:[%s2558 + $0x388] sm:$0xff]
    %v2673 = vld [vmem:[%s2558 + $0x390] sm:$0xff]
    %v2674 = vld [vmem:[%s2558 + $0x398] sm:$0xff]
    %v2675 = vld [vmem:[%s2558 + $0x3a0] sm:$0xff]
    %v2676 = vld [vmem:[%s2558 + $0x3a8] sm:$0xff]
    %v2677 = vld [vmem:[%s2558 + $0x3b0] sm:$0xff]
    %v2678 = vld [vmem:[%s2558 + $0x3b8] sm:$0xff]
    %v2679 = vld [vmem:[%s2558 + $0x3c0] sm:$0xff]
    %v2680 = vld [vmem:[%s2558 + $0x3c8] sm:$0xff]
    %v2681 = vld [vmem:[%s2558 + $0x3d0] sm:$0xff]
    %v2682 = vld [vmem:[%s2558 + $0x3d8] sm:$0xff]
    %v2683 = vld [vmem:[%s2558 + $0x3e0] sm:$0xff]
    %v2684 = vld [vmem:[%s2558 + $0x3e8] sm:$0xff]
    %v2685 = vld [vmem:[%s2558 + $0x3f0] sm:$0xff]
    %v2686 = vld [vmem:[%s2558 + $0x3f8] sm:$0xff]
    %s2687 = scalar_lea.vmem [#allocation7], 3
    %v2688 = vld [vmem:[%s2687] sm:$0x1]
    %v2690 = vlaneseq
    %v2691 = vshrl.u32 %v2690, 7
    %v2692 = vsub.s32 0, %v2691
    %v2693 = vrot.slane %v2688, %v2692
    %2695 = vmatprep.subr.mxu0 0.0
    %2696 = vmatpush1.msra.mxu0 %v2574
    %2697 = vmatprep.subr.mxu0 0.0
    %2698 = vmatpush1.msra.mxu0 %v2573
    %2699 = vmatprep.subr.mxu0 0.0
    %2700 = vmatpush1.msra.mxu0 %v2572
    %2701 = vmatprep.subr.mxu0 0.0
    %2702 = vmatpush1.msra.mxu0 %v2571
    %2703 = vmatprep.subr.mxu0 0.0
    %2704 = vmatpush1.msra.mxu0 %v2570
    %2705 = vmatprep.subr.mxu0 0.0
    %2706 = vmatpush1.msra.mxu0 %v2569
    %2707 = vmatprep.subr.mxu0 0.0
    %2708 = vmatpush1.msra.mxu0 %v2568
    %2709 = vmatprep.subr.mxu0 0.0
    %2710 = vmatpush1.msra.mxu0 %v2567
    %2711 = vmatprep.subr.mxu0 0.0
    %2712 = vmatpush1.msra.mxu0 %v2566
    %2713 = vmatprep.subr.mxu0 0.0
    %2714 = vmatpush1.msra.mxu0 %v2565
    %2715 = vmatprep.subr.mxu0 0.0
    %2716 = vmatpush1.msra.mxu0 %v2564
    %2717 = vmatprep.subr.mxu0 0.0
    %2718 = vmatpush1.msra.mxu0 %v2563
    %2719 = vmatprep.subr.mxu0 0.0
    %2720 = vmatpush1.msra.mxu0 %v2562
    %2721 = vmatprep.subr.mxu0 0.0
    %2722 = vmatpush1.msra.mxu0 %v2561
    %2723 = vmatprep.subr.mxu0 0.0
    %2724 = vmatpush1.msra.mxu0 %v2560
    %2725 = vmatprep.subr.mxu0 0.0
    %2726 = vmatpush1.msra.mxu0 %v2559
    %2727 = vmatprep.subr.mxu0 0.0
    %2728 = vmatpush2.msra.mxu0 %v2590
    %2729 = vmatprep.subr.mxu0 0.0
    %2730 = vmatpush2.msra.mxu0 %v2589
    %2731 = vmatprep.subr.mxu0 0.0
    %2732 = vmatpush2.msra.mxu0 %v2588
    %2733 = vmatprep.subr.mxu0 0.0
    %2734 = vmatpush2.msra.mxu0 %v2587
    %2735 = vmatprep.subr.mxu0 0.0
    %2736 = vmatpush2.msra.mxu0 %v2586
    %2737 = vmatprep.subr.mxu0 0.0
    %2738 = vmatpush2.msra.mxu0 %v2585
    %2739 = vmatprep.subr.mxu0 0.0
    %2740 = vmatpush2.msra.mxu0 %v2584
    %2741 = vmatprep.subr.mxu0 0.0
    %2742 = vmatpush2.msra.mxu0 %v2583
    %2743 = vmatprep.subr.mxu0 0.0
    %2744 = vmatpush2.msra.mxu0 %v2582
    %2745 = vmatprep.subr.mxu0 0.0
    %2746 = vmatpush2.msra.mxu0 %v2581
    %2747 = vmatprep.subr.mxu0 0.0
    %2748 = vmatpush2.msra.mxu0 %v2580
    %2749 = vmatprep.subr.mxu0 0.0
    %2750 = vmatpush2.msra.mxu0 %v2579
    %2751 = vmatprep.subr.mxu0 0.0
    %2752 = vmatpush2.msra.mxu0 %v2578
    %2753 = vmatprep.subr.mxu0 0.0
    %2754 = vmatpush2.msra.mxu0 %v2577
    %2755 = vmatprep.subr.mxu0 0.0
    %2756 = vmatpush2.msra.mxu0 %v2576
    %2757 = vmatprep.subr.mxu0 0.0
    %2758 = vmatpush2.msra.mxu0 %v2575
    %2759 = vmatprep.mubr.f32.mxu0 %v2551
    %2760 = vmatmul.mubr.f32.gmra.mxu0 %v2550
    %v2761 = vpop.f32.mrf.mxu0
    %v2762 = vadd.f32 %v2693, %v2761
    %v2763 = vpop.f32.mrf.mxu0
    %2764 = vdwg.mxu0
    %2765 = vmatprep.subr.mxu0 0.0
    %2766 = vmatpush1.msra.mxu0 %v2606
    %2767 = vmatprep.subr.mxu0 0.0
    %2768 = vmatpush1.msra.mxu0 %v2605
    %2769 = vmatprep.subr.mxu0 0.0
    %2770 = vmatpush1.msra.mxu0 %v2604
    %2771 = vmatprep.subr.mxu0 0.0
    %2772 = vmatpush1.msra.mxu0 %v2603
    %2773 = vmatprep.subr.mxu0 0.0
    %2774 = vmatpush1.msra.mxu0 %v2602
    %2775 = vmatprep.subr.mxu0 0.0
    %2776 = vmatpush1.msra.mxu0 %v2601
    %2777 = vmatprep.subr.mxu0 0.0
    %2778 = vmatpush1.msra.mxu0 %v2600
    %2779 = vmatprep.subr.mxu0 0.0
    %2780 = vmatpush1.msra.mxu0 %v2599
    %2781 = vmatprep.subr.mxu0 0.0
    %2782 = vmatpush1.msra.mxu0 %v2598
    %2783 = vmatprep.subr.mxu0 0.0
    %2784 = vmatpush1.msra.mxu0 %v2597
    %2785 = vmatprep.subr.mxu0 0.0
    %2786 = vmatpush1.msra.mxu0 %v2596
    %2787 = vmatprep.subr.mxu0 0.0
    %2788 = vmatpush1.msra.mxu0 %v2595
    %2789 = vmatprep.subr.mxu0 0.0
    %2790 = vmatpush1.msra.mxu0 %v2594
    %2791 = vmatprep.subr.mxu0 0.0
    %2792 = vmatpush1.msra.mxu0 %v2593
    %2793 = vmatprep.subr.mxu0 0.0
    %2794 = vmatpush1.msra.mxu0 %v2592
    %2795 = vmatprep.subr.mxu0 0.0
    %2796 = vmatpush1.msra.mxu0 %v2591
    %2797 = vmatprep.subr.mxu0 0.0
    %2798 = vmatpush2.msra.mxu0 %v2622
    %2799 = vmatprep.subr.mxu0 0.0
    %2800 = vmatpush2.msra.mxu0 %v2621
    %2801 = vmatprep.subr.mxu0 0.0
    %2802 = vmatpush2.msra.mxu0 %v2620
    %2803 = vmatprep.subr.mxu0 0.0
    %2804 = vmatpush2.msra.mxu0 %v2619
    %2805 = vmatprep.subr.mxu0 0.0
    %2806 = vmatpush2.msra.mxu0 %v2618
    %2807 = vmatprep.subr.mxu0 0.0
    %2808 = vmatpush2.msra.mxu0 %v2617
    %2809 = vmatprep.subr.mxu0 0.0
    %2810 = vmatpush2.msra.mxu0 %v2616
    %2811 = vmatprep.subr.mxu0 0.0
    %2812 = vmatpush2.msra.mxu0 %v2615
    %2813 = vmatprep.subr.mxu0 0.0
    %2814 = vmatpush2.msra.mxu0 %v2614
    %2815 = vmatprep.subr.mxu0 0.0
    %2816 = vmatpush2.msra.mxu0 %v2613
    %2817 = vmatprep.subr.mxu0 0.0
    %2818 = vmatpush2.msra.mxu0 %v2612
    %2819 = vmatprep.subr.mxu0 0.0
    %2820 = vmatpush2.msra.mxu0 %v2611
    %2821 = vmatprep.subr.mxu0 0.0
    %2822 = vmatpush2.msra.mxu0 %v2610
    %2823 = vmatprep.subr.mxu0 0.0
    %2824 = vmatpush2.msra.mxu0 %v2609
    %2825 = vmatprep.subr.mxu0 0.0
    %2826 = vmatpush2.msra.mxu0 %v2608
    %2827 = vmatprep.subr.mxu0 0.0
    %2828 = vmatpush2.msra.mxu0 %v2607
    %2829 = vmatprep.mubr.f32.mxu0 %v2553
    %2830 = vmatmul.mubr.f32.gmra.mxu0 %v2552
    %v2831 = vpop.f32.mrf.mxu0
    %v2832 = vadd.f32 %v2762, %v2831
    %v2833 = vpop.f32.mrf.mxu0
    %2834 = vdwg.mxu0
    %2835 = vmatprep.subr.mxu0 0.0
    %2836 = vmatpush1.msra.mxu0 %v2638
    %2837 = vmatprep.subr.mxu0 0.0
    %2838 = vmatpush1.msra.mxu0 %v2637
    %2839 = vmatprep.subr.mxu0 0.0
    %2840 = vmatpush1.msra.mxu0 %v2636
    %2841 = vmatprep.subr.mxu0 0.0
    %2842 = vmatpush1.msra.mxu0 %v2635
    %2843 = vmatprep.subr.mxu0 0.0
    %2844 = vmatpush1.msra.mxu0 %v2634
    %2845 = vmatprep.subr.mxu0 0.0
    %2846 = vmatpush1.msra.mxu0 %v2633
    %2847 = vmatprep.subr.mxu0 0.0
    %2848 = vmatpush1.msra.mxu0 %v2632
    %2849 = vmatprep.subr.mxu0 0.0
    %2850 = vmatpush1.msra.mxu0 %v2631
    %2851 = vmatprep.subr.mxu0 0.0
    %2852 = vmatpush1.msra.mxu0 %v2630
    %2853 = vmatprep.subr.mxu0 0.0
    %2854 = vmatpush1.msra.mxu0 %v2629
    %2855 = vmatprep.subr.mxu0 0.0
    %2856 = vmatpush1.msra.mxu0 %v2628
    %2857 = vmatprep.subr.mxu0 0.0
    %2858 = vmatpush1.msra.mxu0 %v2627
    %2859 = vmatprep.subr.mxu0 0.0
    %2860 = vmatpush1.msra.mxu0 %v2626
    %2861 = vmatprep.subr.mxu0 0.0
    %2862 = vmatpush1.msra.mxu0 %v2625
    %2863 = vmatprep.subr.mxu0 0.0
    %2864 = vmatpush1.msra.mxu0 %v2624
    %2865 = vmatprep.subr.mxu0 0.0
    %2866 = vmatpush1.msra.mxu0 %v2623
    %2867 = vmatprep.subr.mxu0 0.0
    %2868 = vmatpush2.msra.mxu0 %v2654
    %2869 = vmatprep.subr.mxu0 0.0
    %2870 = vmatpush2.msra.mxu0 %v2653
    %2871 = vmatprep.subr.mxu0 0.0
    %2872 = vmatpush2.msra.mxu0 %v2652
    %2873 = vmatprep.subr.mxu0 0.0
    %2874 = vmatpush2.msra.mxu0 %v2651
    %2875 = vmatprep.subr.mxu0 0.0
    %2876 = vmatpush2.msra.mxu0 %v2650
    %2877 = vmatprep.subr.mxu0 0.0
    %2878 = vmatpush2.msra.mxu0 %v2649
    %2879 = vmatprep.subr.mxu0 0.0
    %2880 = vmatpush2.msra.mxu0 %v2648
    %2881 = vmatprep.subr.mxu0 0.0
    %2882 = vmatpush2.msra.mxu0 %v2647
    %2883 = vmatprep.subr.mxu0 0.0
    %2884 = vmatpush2.msra.mxu0 %v2646
    %2885 = vmatprep.subr.mxu0 0.0
    %2886 = vmatpush2.msra.mxu0 %v2645
    %2887 = vmatprep.subr.mxu0 0.0
    %2888 = vmatpush2.msra.mxu0 %v2644
    %2889 = vmatprep.subr.mxu0 0.0
    %2890 = vmatpush2.msra.mxu0 %v2643
    %2891 = vmatprep.subr.mxu0 0.0
    %2892 = vmatpush2.msra.mxu0 %v2642
    %2893 = vmatprep.subr.mxu0 0.0
    %2894 = vmatpush2.msra.mxu0 %v2641
    %2895 = vmatprep.subr.mxu0 0.0
    %2896 = vmatpush2.msra.mxu0 %v2640
    %2897 = vmatprep.subr.mxu0 0.0
    %2898 = vmatpush2.msra.mxu0 %v2639
    %2899 = vmatprep.mubr.f32.mxu0 %v2555
    %2900 = vmatmul.mubr.f32.gmra.mxu0 %v2554
    %v2901 = vpop.f32.mrf.mxu0
    %v2902 = vadd.f32 %v2832, %v2901
    %v2903 = vpop.f32.mrf.mxu0
    %2904 = vdwg.mxu0
    %2905 = vmatprep.subr.mxu0 0.0
    %2906 = vmatpush1.msra.mxu0 %v2670
    %2907 = vmatprep.subr.mxu0 0.0
    %2908 = vmatpush1.msra.mxu0 %v2669
    %2909 = vmatprep.subr.mxu0 0.0
    %2910 = vmatpush1.msra.mxu0 %v2668
    %2911 = vmatprep.subr.mxu0 0.0
    %2912 = vmatpush1.msra.mxu0 %v2667
    %2913 = vmatprep.subr.mxu0 0.0
    %2914 = vmatpush1.msra.mxu0 %v2666
    %2915 = vmatprep.subr.mxu0 0.0
    %2916 = vmatpush1.msra.mxu0 %v2665
    %2917 = vmatprep.subr.mxu0 0.0
    %2918 = vmatpush1.msra.mxu0 %v2664
    %2919 = vmatprep.subr.mxu0 0.0
    %2920 = vmatpush1.msra.mxu0 %v2663
    %2921 = vmatprep.subr.mxu0 0.0
    %2922 = vmatpush1.msra.mxu0 %v2662
    %2923 = vmatprep.subr.mxu0 0.0
    %2924 = vmatpush1.msra.mxu0 %v2661
    %2925 = vmatprep.subr.mxu0 0.0
    %2926 = vmatpush1.msra.mxu0 %v2660
    %2927 = vmatprep.subr.mxu0 0.0
    %2928 = vmatpush1.msra.mxu0 %v2659
    %2929 = vmatprep.subr.mxu0 0.0
    %2930 = vmatpush1.msra.mxu0 %v2658
    %2931 = vmatprep.subr.mxu0 0.0
    %2932 = vmatpush1.msra.mxu0 %v2657
    %2933 = vmatprep.subr.mxu0 0.0
    %2934 = vmatpush1.msra.mxu0 %v2656
    %2935 = vmatprep.subr.mxu0 0.0
    %2936 = vmatpush1.msra.mxu0 %v2655
    %2937 = vmatprep.subr.mxu0 0.0
    %2938 = vmatpush2.msra.mxu0 %v2686
    %2939 = vmatprep.subr.mxu0 0.0
    %2940 = vmatpush2.msra.mxu0 %v2685
    %2941 = vmatprep.subr.mxu0 0.0
    %2942 = vmatpush2.msra.mxu0 %v2684
    %2943 = vmatprep.subr.mxu0 0.0
    %2944 = vmatpush2.msra.mxu0 %v2683
    %2945 = vmatprep.subr.mxu0 0.0
    %2946 = vmatpush2.msra.mxu0 %v2682
    %2947 = vmatprep.subr.mxu0 0.0
    %2948 = vmatpush2.msra.mxu0 %v2681
    %2949 = vmatprep.subr.mxu0 0.0
    %2950 = vmatpush2.msra.mxu0 %v2680
    %2951 = vmatprep.subr.mxu0 0.0
    %2952 = vmatpush2.msra.mxu0 %v2679
    %2953 = vmatprep.subr.mxu0 0.0
    %2954 = vmatpush2.msra.mxu0 %v2678
    %2955 = vmatprep.subr.mxu0 0.0
    %2956 = vmatpush2.msra.mxu0 %v2677
    %2957 = vmatprep.subr.mxu0 0.0
    %2958 = vmatpush2.msra.mxu0 %v2676
    %2959 = vmatprep.subr.mxu0 0.0
    %2960 = vmatpush2.msra.mxu0 %v2675
    %2961 = vmatprep.subr.mxu0 0.0
    %2962 = vmatpush2.msra.mxu0 %v2674
    %2963 = vmatprep.subr.mxu0 0.0
    %2964 = vmatpush2.msra.mxu0 %v2673
    %2965 = vmatprep.subr.mxu0 0.0
    %2966 = vmatpush2.msra.mxu0 %v2672
    %2967 = vmatprep.subr.mxu0 0.0
    %2968 = vmatpush2.msra.mxu0 %v2671
    %2969 = vmatprep.mubr.f32.mxu0 %v2557
    %2970 = vmatmul.mubr.f32.gmra.mxu0 %v2556
    %v2971 = vpop.f32.mrf.mxu0
    %v2972 = vadd.f32 %v2902, %v2971
    %v2973 = vpop.f32.mrf.mxu0
    %2974 = vdwg.mxu0
    %v2975 = vmax.f32 %v827, 0.0
    %v2976 = vmax.f32 %v1542, 0.0
    %v2977 = vmax.f32 %v2257, 0.0
    %v2978 = vmax.f32 %v2972, 0.0
    %v2979 = vld [vmem:[#allocation8] sm:$0xff]
    %v2980 = vld [vmem:[#allocation8 + $0x8] sm:$0xff]
    %v2981 = vld [vmem:[#allocation8 + $0x10] sm:$0xff]
    %v2982 = vld [vmem:[#allocation8 + $0x18] sm:$0xff]
    %v2983 = vld [vmem:[#allocation8 + $0x20] sm:$0xff]
    %v2984 = vld [vmem:[#allocation8 + $0x28] sm:$0xff]
    %v2985 = vld [vmem:[#allocation8 + $0x30] sm:$0xff]
    %v2986 = vld [vmem:[#allocation8 + $0x38] sm:$0xff]
    %v2987 = vld [vmem:[#allocation8 + $0x40] sm:$0xff]
    %v2988 = vld [vmem:[#allocation8 + $0x48] sm:$0xff]
    %v2989 = vld [vmem:[#allocation8 + $0x50] sm:$0xff]
    %v2990 = vld [vmem:[#allocation8 + $0x58] sm:$0xff]
    %v2991 = vld [vmem:[#allocation8 + $0x60] sm:$0xff]
    %v2992 = vld [vmem:[#allocation8 + $0x68] sm:$0xff]
    %v2993 = vld [vmem:[#allocation8 + $0x70] sm:$0xff]
    %v2994 = vld [vmem:[#allocation8 + $0x78] sm:$0xff]
    %v2995 = vld [vmem:[#allocation8 + $0x80] sm:$0xff]
    %v2996 = vld [vmem:[#allocation8 + $0x88] sm:$0xff]
    %v2997 = vld [vmem:[#allocation8 + $0x90] sm:$0xff]
    %v2998 = vld [vmem:[#allocation8 + $0x98] sm:$0xff]
    %v2999 = vld [vmem:[#allocation8 + $0xa0] sm:$0xff]
    %v3000 = vld [vmem:[#allocation8 + $0xa8] sm:$0xff]
    %v3001 = vld [vmem:[#allocation8 + $0xb0] sm:$0xff]
    %v3002 = vld [vmem:[#allocation8 + $0xb8] sm:$0xff]
    %v3003 = vld [vmem:[#allocation8 + $0xc0] sm:$0xff]
    %v3004 = vld [vmem:[#allocation8 + $0xc8] sm:$0xff]
    %v3005 = vld [vmem:[#allocation8 + $0xd0] sm:$0xff]
    %v3006 = vld [vmem:[#allocation8 + $0xd8] sm:$0xff]
    %v3007 = vld [vmem:[#allocation8 + $0xe0] sm:$0xff]
    %v3008 = vld [vmem:[#allocation8 + $0xe8] sm:$0xff]
    %v3009 = vld [vmem:[#allocation8 + $0xf0] sm:$0xff]
    %v3010 = vld [vmem:[#allocation8 + $0xf8] sm:$0xff]
    %v3011 = vld [vmem:[#allocation8 + $0x100] sm:$0xff]
    %v3012 = vld [vmem:[#allocation8 + $0x108] sm:$0xff]
    %v3013 = vld [vmem:[#allocation8 + $0x110] sm:$0xff]
    %v3014 = vld [vmem:[#allocation8 + $0x118] sm:$0xff]
    %v3015 = vld [vmem:[#allocation8 + $0x120] sm:$0xff]
    %v3016 = vld [vmem:[#allocation8 + $0x128] sm:$0xff]
    %v3017 = vld [vmem:[#allocation8 + $0x130] sm:$0xff]
    %v3018 = vld [vmem:[#allocation8 + $0x138] sm:$0xff]
    %v3019 = vld [vmem:[#allocation8 + $0x140] sm:$0xff]
    %v3020 = vld [vmem:[#allocation8 + $0x148] sm:$0xff]
    %v3021 = vld [vmem:[#allocation8 + $0x150] sm:$0xff]
    %v3022 = vld [vmem:[#allocation8 + $0x158] sm:$0xff]
    %v3023 = vld [vmem:[#allocation8 + $0x160] sm:$0xff]
    %v3024 = vld [vmem:[#allocation8 + $0x168] sm:$0xff]
    %v3025 = vld [vmem:[#allocation8 + $0x170] sm:$0xff]
    %v3026 = vld [vmem:[#allocation8 + $0x178] sm:$0xff]
    %v3027 = vld [vmem:[#allocation8 + $0x180] sm:$0xff]
    %v3028 = vld [vmem:[#allocation8 + $0x188] sm:$0xff]
    %v3029 = vld [vmem:[#allocation8 + $0x190] sm:$0xff]
    %v3030 = vld [vmem:[#allocation8 + $0x198] sm:$0xff]
    %v3031 = vld [vmem:[#allocation8 + $0x1a0] sm:$0xff]
    %v3032 = vld [vmem:[#allocation8 + $0x1a8] sm:$0xff]
    %v3033 = vld [vmem:[#allocation8 + $0x1b0] sm:$0xff]
    %v3034 = vld [vmem:[#allocation8 + $0x1b8] sm:$0xff]
    %v3035 = vld [vmem:[#allocation8 + $0x1c0] sm:$0xff]
    %v3036 = vld [vmem:[#allocation8 + $0x1c8] sm:$0xff]
    %v3037 = vld [vmem:[#allocation8 + $0x1d0] sm:$0xff]
    %v3038 = vld [vmem:[#allocation8 + $0x1d8] sm:$0xff]
    %v3039 = vld [vmem:[#allocation8 + $0x1e0] sm:$0xff]
    %v3040 = vld [vmem:[#allocation8 + $0x1e8] sm:$0xff]
    %v3041 = vld [vmem:[#allocation8 + $0x1f0] sm:$0xff]
    %v3042 = vld [vmem:[#allocation8 + $0x1f8] sm:$0xff]
    %v3043 = vld [vmem:[%s5] sm:$0x1]
    %v3045 = vlaneseq
    %v3046 = vshrl.u32 %v3045, 7
    %v3047 = vsub.s32 0, %v3046
    %v3048 = vrot.slane %v3043, %v3047
    %3050 = vmatprep.subr.mxu0 0.0
    %3051 = vmatpush1.msra.mxu0 %v2994
    %3052 = vmatprep.subr.mxu0 0.0
    %3053 = vmatpush1.msra.mxu0 %v2993
    %3054 = vmatprep.subr.mxu0 0.0
    %3055 = vmatpush1.msra.mxu0 %v2992
    %3056 = vmatprep.subr.mxu0 0.0
    %3057 = vmatpush1.msra.mxu0 %v2991
    %3058 = vmatprep.subr.mxu0 0.0
    %3059 = vmatpush1.msra.mxu0 %v2990
    %3060 = vmatprep.subr.mxu0 0.0
    %3061 = vmatpush1.msra.mxu0 %v2989
    %3062 = vmatprep.subr.mxu0 0.0
    %3063 = vmatpush1.msra.mxu0 %v2988
    %3064 = vmatprep.subr.mxu0 0.0
    %3065 = vmatpush1.msra.mxu0 %v2987
    %3066 = vmatprep.subr.mxu0 0.0
    %3067 = vmatpush1.msra.mxu0 %v2986
    %3068 = vmatprep.subr.mxu0 0.0
    %3069 = vmatpush1.msra.mxu0 %v2985
    %3070 = vmatprep.subr.mxu0 0.0
    %3071 = vmatpush1.msra.mxu0 %v2984
    %3072 = vmatprep.subr.mxu0 0.0
    %3073 = vmatpush1.msra.mxu0 %v2983
    %3074 = vmatprep.subr.mxu0 0.0
    %3075 = vmatpush1.msra.mxu0 %v2982
    %3076 = vmatprep.subr.mxu0 0.0
    %3077 = vmatpush1.msra.mxu0 %v2981
    %3078 = vmatprep.subr.mxu0 0.0
    %3079 = vmatpush1.msra.mxu0 %v2980
    %3080 = vmatprep.subr.mxu0 0.0
    %3081 = vmatpush1.msra.mxu0 %v2979
    %3082 = vmatprep.subr.mxu0 0.0
    %3083 = vmatpush2.msra.mxu0 %v3010
    %3084 = vmatprep.subr.mxu0 0.0
    %3085 = vmatpush2.msra.mxu0 %v3009
    %3086 = vmatprep.subr.mxu0 0.0
    %3087 = vmatpush2.msra.mxu0 %v3008
    %3088 = vmatprep.subr.mxu0 0.0
    %3089 = vmatpush2.msra.mxu0 %v3007
    %3090 = vmatprep.subr.mxu0 0.0
    %3091 = vmatpush2.msra.mxu0 %v3006
    %3092 = vmatprep.subr.mxu0 0.0
    %3093 = vmatpush2.msra.mxu0 %v3005
    %3094 = vmatprep.subr.mxu0 0.0
    %3095 = vmatpush2.msra.mxu0 %v3004
    %3096 = vmatprep.subr.mxu0 0.0
    %3097 = vmatpush2.msra.mxu0 %v3003
    %3098 = vmatprep.subr.mxu0 0.0
    %3099 = vmatpush2.msra.mxu0 %v3002
    %3100 = vmatprep.subr.mxu0 0.0
    %3101 = vmatpush2.msra.mxu0 %v3001
    %3102 = vmatprep.subr.mxu0 0.0
    %3103 = vmatpush2.msra.mxu0 %v3000
    %3104 = vmatprep.subr.mxu0 0.0
    %3105 = vmatpush2.msra.mxu0 %v2999
    %3106 = vmatprep.subr.mxu0 0.0
    %3107 = vmatpush2.msra.mxu0 %v2998
    %3108 = vmatprep.subr.mxu0 0.0
    %3109 = vmatpush2.msra.mxu0 %v2997
    %3110 = vmatprep.subr.mxu0 0.0
    %3111 = vmatpush2.msra.mxu0 %v2996
    %3112 = vmatprep.subr.mxu0 0.0
    %3113 = vmatpush2.msra.mxu0 %v2995
    %3114 = vmatprep.mubr.f32.mxu0 %v2976
    %3115 = vmatmul.mubr.f32.gmra.mxu0 %v2975
    %v3116 = vpop.f32.mrf.mxu0
    %v3117 = vadd.f32 %v3048, %v3116
    %v3118 = vpop.f32.mrf.mxu0
    %3119 = vdwg.mxu0
    %3120 = vmatprep.subr.mxu0 0.0
    %3121 = vmatpush1.msra.mxu0 %v3026
    %3122 = vmatprep.subr.mxu0 0.0
    %3123 = vmatpush1.msra.mxu0 %v3025
    %3124 = vmatprep.subr.mxu0 0.0
    %3125 = vmatpush1.msra.mxu0 %v3024
    %3126 = vmatprep.subr.mxu0 0.0
    %3127 = vmatpush1.msra.mxu0 %v3023
    %3128 = vmatprep.subr.mxu0 0.0
    %3129 = vmatpush1.msra.mxu0 %v3022
    %3130 = vmatprep.subr.mxu0 0.0
    %3131 = vmatpush1.msra.mxu0 %v3021
    %3132 = vmatprep.subr.mxu0 0.0
    %3133 = vmatpush1.msra.mxu0 %v3020
    %3134 = vmatprep.subr.mxu0 0.0
    %3135 = vmatpush1.msra.mxu0 %v3019
    %3136 = vmatprep.subr.mxu0 0.0
    %3137 = vmatpush1.msra.mxu0 %v3018
    %3138 = vmatprep.subr.mxu0 0.0
    %3139 = vmatpush1.msra.mxu0 %v3017
    %3140 = vmatprep.subr.mxu0 0.0
    %3141 = vmatpush1.msra.mxu0 %v3016
    %3142 = vmatprep.subr.mxu0 0.0
    %3143 = vmatpush1.msra.mxu0 %v3015
    %3144 = vmatprep.subr.mxu0 0.0
    %3145 = vmatpush1.msra.mxu0 %v3014
    %3146 = vmatprep.subr.mxu0 0.0
    %3147 = vmatpush1.msra.mxu0 %v3013
    %3148 = vmatprep.subr.mxu0 0.0
    %3149 = vmatpush1.msra.mxu0 %v3012
    %3150 = vmatprep.subr.mxu0 0.0
    %3151 = vmatpush1.msra.mxu0 %v3011
    %3152 = vmatprep.subr.mxu0 0.0
    %3153 = vmatpush2.msra.mxu0 %v3042
    %3154 = vmatprep.subr.mxu0 0.0
    %3155 = vmatpush2.msra.mxu0 %v3041
    %3156 = vmatprep.subr.mxu0 0.0
    %3157 = vmatpush2.msra.mxu0 %v3040
    %3158 = vmatprep.subr.mxu0 0.0
    %3159 = vmatpush2.msra.mxu0 %v3039
    %3160 = vmatprep.subr.mxu0 0.0
    %3161 = vmatpush2.msra.mxu0 %v3038
    %3162 = vmatprep.subr.mxu0 0.0
    %3163 = vmatpush2.msra.mxu0 %v3037
    %3164 = vmatprep.subr.mxu0 0.0
    %3165 = vmatpush2.msra.mxu0 %v3036
    %3166 = vmatprep.subr.mxu0 0.0
    %3167 = vmatpush2.msra.mxu0 %v3035
    %3168 = vmatprep.subr.mxu0 0.0
    %3169 = vmatpush2.msra.mxu0 %v3034
    %3170 = vmatprep.subr.mxu0 0.0
    %3171 = vmatpush2.msra.mxu0 %v3033
    %3172 = vmatprep.subr.mxu0 0.0
    %3173 = vmatpush2.msra.mxu0 %v3032
    %3174 = vmatprep.subr.mxu0 0.0
    %3175 = vmatpush2.msra.mxu0 %v3031
    %3176 = vmatprep.subr.mxu0 0.0
    %3177 = vmatpush2.msra.mxu0 %v3030
    %3178 = vmatprep.subr.mxu0 0.0
    %3179 = vmatpush2.msra.mxu0 %v3029
    %3180 = vmatprep.subr.mxu0 0.0
    %3181 = vmatpush2.msra.mxu0 %v3028
    %3182 = vmatprep.subr.mxu0 0.0
    %3183 = vmatpush2.msra.mxu0 %v3027
    %3184 = vmatprep.mubr.f32.mxu0 %v2978
    %3185 = vmatmul.mubr.f32.gmra.mxu0 %v2977
    %v3186 = vpop.f32.mrf.mxu0
    %v3187 = vadd.f32 %v3117, %v3186
    %v3188 = vpop.f32.mrf.mxu0
    %3189 = vdwg.mxu0
    %v3190 = vmax.f32 %v3187, 0.0
    %v3191 = vld [vmem:[#allocation10] sm:$0xff]
    %v3192 = vld [vmem:[#allocation10 + $0x8] sm:$0xff]
    %v3193 = vld [vmem:[#allocation10 + $0x10] sm:$0xff]
    %v3194 = vld [vmem:[#allocation10 + $0x18] sm:$0xff]
    %v3195 = vld [vmem:[#allocation10 + $0x20] sm:$0xff]
    %v3196 = vld [vmem:[#allocation10 + $0x28] sm:$0xff]
    %v3197 = vld [vmem:[#allocation10 + $0x30] sm:$0xff]
    %v3198 = vld [vmem:[#allocation10 + $0x38] sm:$0xff]
    %v3199 = vld [vmem:[#allocation10 + $0x40] sm:$0xff]
    %v3200 = vld [vmem:[#allocation10 + $0x48] sm:$0xff]
    %v3201 = vld [vmem:[#allocation10 + $0x50] sm:$0xff]
    %v3202 = vld [vmem:[#allocation10 + $0x58] sm:$0xff]
    %v3203 = vld [vmem:[#allocation10 + $0x60] sm:$0xff]
    %v3204 = vld [vmem:[#allocation10 + $0x68] sm:$0xff]
    %v3205 = vld [vmem:[#allocation10 + $0x70] sm:$0xff]
    %v3206 = vld [vmem:[#allocation10 + $0x78] sm:$0xff]
    %v3207 = vld [vmem:[%s7] sm:$0x1]
    %v3209 = vlaneseq
    %v3210 = vshrl.u32 %v3209, 7
    %v3211 = vsub.s32 0, %v3210
    %v3212 = vrot.slane %v3207, %v3211
    %3214 = vmatprep.subr.mxu0 0.0
    %3215 = vmatpush1.msra.mxu0 %v3206
    %3216 = vmatprep.subr.mxu0 0.0
    %3217 = vmatpush1.msra.mxu0 %v3205
    %3218 = vmatprep.subr.mxu0 0.0
    %3219 = vmatpush1.msra.mxu0 %v3204
    %3220 = vmatprep.subr.mxu0 0.0
    %3221 = vmatpush1.msra.mxu0 %v3203
    %3222 = vmatprep.subr.mxu0 0.0
    %3223 = vmatpush1.msra.mxu0 %v3202
    %3224 = vmatprep.subr.mxu0 0.0
    %3225 = vmatpush1.msra.mxu0 %v3201
    %3226 = vmatprep.subr.mxu0 0.0
    %3227 = vmatpush1.msra.mxu0 %v3200
    %3228 = vmatprep.subr.mxu0 0.0
    %3229 = vmatpush1.msra.mxu0 %v3199
    %3230 = vmatprep.subr.mxu0 0.0
    %3231 = vmatpush1.msra.mxu0 %v3198
    %3232 = vmatprep.subr.mxu0 0.0
    %3233 = vmatpush1.msra.mxu0 %v3197
    %3234 = vmatprep.subr.mxu0 0.0
    %3235 = vmatpush1.msra.mxu0 %v3196
    %3236 = vmatprep.subr.mxu0 0.0
    %3237 = vmatpush1.msra.mxu0 %v3195
    %3238 = vmatprep.subr.mxu0 0.0
    %3239 = vmatpush1.msra.mxu0 %v3194
    %3240 = vmatprep.subr.mxu0 0.0
    %3241 = vmatpush1.msra.mxu0 %v3193
    %3242 = vmatprep.subr.mxu0 0.0
    %3243 = vmatpush1.msra.mxu0 %v3192
    %3244 = vmatprep.subr.mxu0 0.0
    %3245 = vmatpush1.msra.mxu0 %v3191
    %3246 = vmatprep.subr.mxu0 0.0
    %3247 = vmatpush2.msra.mxu0 0.0
    %3248 = vmatprep.subr.mxu0 0.0
    %3249 = vmatpush2.msra.mxu0 0.0
    %3250 = vmatprep.subr.mxu0 0.0
    %3251 = vmatpush2.msra.mxu0 0.0
    %3252 = vmatprep.subr.mxu0 0.0
    %3253 = vmatpush2.msra.mxu0 0.0
    %3254 = vmatprep.subr.mxu0 0.0
    %3255 = vmatpush2.msra.mxu0 0.0
    %3256 = vmatprep.subr.mxu0 0.0
    %3257 = vmatpush2.msra.mxu0 0.0
    %3258 = vmatprep.subr.mxu0 0.0
    %3259 = vmatpush2.msra.mxu0 0.0
    %3260 = vmatprep.subr.mxu0 0.0
    %3261 = vmatpush2.msra.mxu0 0.0
    %3262 = vmatprep.subr.mxu0 0.0
    %3263 = vmatpush2.msra.mxu0 0.0
    %3264 = vmatprep.subr.mxu0 0.0
    %3265 = vmatpush2.msra.mxu0 0.0
    %3266 = vmatprep.subr.mxu0 0.0
    %3267 = vmatpush2.msra.mxu0 0.0
    %3268 = vmatprep.subr.mxu0 0.0
    %3269 = vmatpush2.msra.mxu0 0.0
    %3270 = vmatprep.subr.mxu0 0.0
    %3271 = vmatpush2.msra.mxu0 0.0
    %3272 = vmatprep.subr.mxu0 0.0
    %3273 = vmatpush2.msra.mxu0 0.0
    %3274 = vmatprep.subr.mxu0 0.0
    %3275 = vmatpush2.msra.mxu0 0.0
    %3276 = vmatprep.subr.mxu0 0.0
    %3277 = vmatpush2.msra.mxu0 0.0
    %3278 = vmatprep.mubr.f32.mxu0 0.0
    %3279 = vmatmul.mubr.f32.gmra.mxu0 %v3190
    %v3280 = vpop.f32.mrf.mxu0
    %v3281 = vadd.f32 %v3212, %v3280
    %v3282 = vpop.f32.mrf.mxu0
    %3283 = vdwg.mxu0
    %v3284 = vmax.f32 %v3281, 0.0
    %v3285 = vld [vmem:[#allocation11] sm:$0xff]
    %v3286 = vld [vmem:[#allocation2] sm:$0x1]
    %v3288 = vlaneseq
    %v3289 = vshrl.u32 %v3288, 7
    %v3290 = vsub.s32 0, %v3289
    %v3291 = vrot.slane %v3286, %v3290
    %3292 = vset.pattern.permute.xlu0 0
    %3293 = vperm.xlu0 %3292, %v3291
    %v3294 = vpop.permute.xlu0 %3293
    %v3297 = vsel %vm406, %v3285, 0
    %v3300 = vsel %vm406, %v3284, 0
    %3302 = vmatprep.subr.mxu0 0.0
    %3303 = vmatpush1.xpose.msra.mxu0 0.0
    %3304 = vmatprep.subr.mxu0 0.0
    %3305 = vmatpush1.xpose.msra.mxu0 0.0
    %3306 = vmatprep.subr.mxu0 0.0
    %3307 = vmatpush1.xpose.msra.mxu0 0.0
    %3308 = vmatprep.subr.mxu0 0.0
    %3309 = vmatpush1.xpose.msra.mxu0 0.0
    %3310 = vmatprep.subr.mxu0 0.0
    %3311 = vmatpush1.xpose.msra.mxu0 0.0
    %3312 = vmatprep.subr.mxu0 0.0
    %3313 = vmatpush1.xpose.msra.mxu0 0.0
    %3314 = vmatprep.subr.mxu0 0.0
    %3315 = vmatpush1.xpose.msra.mxu0 0.0
    %3316 = vmatprep.subr.mxu0 0.0
    %3317 = vmatpush1.xpose.msra.mxu0 0.0
    %3318 = vmatprep.subr.mxu0 0.0
    %3319 = vmatpush1.xpose.msra.mxu0 0.0
    %3320 = vmatprep.subr.mxu0 0.0
    %3321 = vmatpush1.xpose.msra.mxu0 0.0
    %3322 = vmatprep.subr.mxu0 0.0
    %3323 = vmatpush1.xpose.msra.mxu0 0.0
    %3324 = vmatprep.subr.mxu0 0.0
    %3325 = vmatpush1.xpose.msra.mxu0 0.0
    %3326 = vmatprep.subr.mxu0 0.0
    %3327 = vmatpush1.xpose.msra.mxu0 0.0
    %3328 = vmatprep.subr.mxu0 0.0
    %3329 = vmatpush1.xpose.msra.mxu0 0.0
    %3330 = vmatprep.subr.mxu0 0.0
    %3331 = vmatpush1.xpose.msra.mxu0 0.0
    %3332 = vmatprep.subr.mxu0 0.0
    %3333 = vmatpush1.xpose.msra.mxu0 %v3300
    %3334 = vmatprep.subr.mxu0 0.0
    %3335 = vmatpush2.xpose.msra.mxu0 0.0
    %3336 = vmatprep.subr.mxu0 0.0
    %3337 = vmatpush2.xpose.msra.mxu0 0.0
    %3338 = vmatprep.subr.mxu0 0.0
    %3339 = vmatpush2.xpose.msra.mxu0 0.0
    %3340 = vmatprep.subr.mxu0 0.0
    %3341 = vmatpush2.xpose.msra.mxu0 0.0
    %3342 = vmatprep.subr.mxu0 0.0
    %3343 = vmatpush2.xpose.msra.mxu0 0.0
    %3344 = vmatprep.subr.mxu0 0.0
    %3345 = vmatpush2.xpose.msra.mxu0 0.0
    %3346 = vmatprep.subr.mxu0 0.0
    %3347 = vmatpush2.xpose.msra.mxu0 0.0
    %3348 = vmatprep.subr.mxu0 0.0
    %3349 = vmatpush2.xpose.msra.mxu0 0.0
    %3350 = vmatprep.subr.mxu0 0.0
    %3351 = vmatpush2.xpose.msra.mxu0 0.0
    %3352 = vmatprep.subr.mxu0 0.0
    %3353 = vmatpush2.xpose.msra.mxu0 0.0
    %3354 = vmatprep.subr.mxu0 0.0
    %3355 = vmatpush2.xpose.msra.mxu0 0.0
    %3356 = vmatprep.subr.mxu0 0.0
    %3357 = vmatpush2.xpose.msra.mxu0 0.0
    %3358 = vmatprep.subr.mxu0 0.0
    %3359 = vmatpush2.xpose.msra.mxu0 0.0
    %3360 = vmatprep.subr.mxu0 0.0
    %3361 = vmatpush2.xpose.msra.mxu0 0.0
    %3362 = vmatprep.subr.mxu0 0.0
    %3363 = vmatpush2.xpose.msra.mxu0 0.0
    %3364 = vmatprep.subr.mxu0 0.0
    %3365 = vmatpush2.xpose.msra.mxu0 0.0
    %3366 = vmatprep.mubr.f32.mxu0 0.0
    %3367 = vmatmul.mubr.f32.gmra.mxu0 %v3297
    %v3368 = vpop.f32.mrf.mxu0
    %v3369 = vadd.f32 %v3294, %v3368
    %v3370 = vpop.f32.mrf.mxu0
    %3371 = vdwg.mxu0
    %v3372 = vxor.u32 %v3369, 2147483648
    %v3373 = vmul.f32 %v3372, 1.442695
    %v3374 = vpow.pop %v3373
    %v3375 = vadd.f32 %v3374, 1.0
    %v3376 = vrcp.pop %v3375
    %v3377 = vmul.f32 1.0, %v3376
    %vm3378 = vcmask 15360
    %3379 = vst.msk [vmem:[%s10] sm:$0xff] %vm3378, %v3377
    // Predicated region
    $region66: #{_lambda_.1} parent=1 // pred_check
      _
    $region67: #{_lambda_.1} parent=1 // pred_check_branch
      %3381 = sbr.rel (0) target = $region69
    $region68: #{_lambda_.1} parent=1 // pred_region
      _
    $region69: #{_lambda_.1} parent=1 // pred_fallthru
      _
    // Predicated region
    $region70: #{_lambda_.1} parent=1 // pred_check
      _
    $region71: #{_lambda_.1} parent=1 // pred_check_branch
      %3383 = sbr.rel (0) target = $region73
    $region72: #{_lambda_.1} parent=1 // pred_region
      _
    $region73: #{_lambda_.1} parent=1 // pred_fallthru
      _
    %3384 = vsyncpa [#allocation4], 1
    %3385 = vsyncpa [#allocation6], 1
    %3386 = vsyncpa [#allocation9], 1
    %3387 = vsyncpa [#allocation12], 1

</llo_original>
